<compile_context>
chip_gen: v7x
topology: tpu7x:2x2x1
jax: 0.10.0
libtpu: 0.0.40
codegen_flags: <defaults>
</compile_context>

<pallas_src>
import math
from functools import partial

import jax
import jax.numpy as jnp
from jax.experimental import pallas as pl
from jax.experimental.pallas import tpu as pltpu


# ---------------------------------------------------------------------------
# Fused Pallas kernel: the whole TransformerEncoder stack
#   grid = (batch_blocks, num_layers); activation lives in VMEM scratch.
# ---------------------------------------------------------------------------
def _make_fused_encoder_kernel(nhead: int):
    def kernel(x_ref, mask_ref,
               in_wt_ref, in_b_ref, out_wt_ref, out_b_ref,
               ln1_w_ref, ln1_b_ref,
               lin1_wt_ref, lin1_b_ref, lin2_wt_ref, lin2_b_ref,
               ln2_w_ref, ln2_b_ref,
               o_ref, act_ref):
        l = pl.program_id(1)
        n_layers = pl.num_programs(1)

        Bb, S, E = x_ref.shape
        dh = E // nhead
        BH = Bb * nhead
        mm_dtype = in_wt_ref.dtype          # bf16 matmul inputs, f32 accumulation

        # Load the input activation for this batch block once (layer 0 only);
        # afterwards the activation stays resident in VMEM across layers.
        @pl.when(l == 0)
        def _():
            act_ref[...] = x_ref[...].reshape(Bb * S, E)

        x = act_ref[...]                                               # [Bb*S, E] f32
        x_bf = x.astype(mm_dtype)                                      # cast once

        # ---- self-attention: fused QKV projection (B folded into M, N = 3E) ----
        qkv = jnp.dot(x_bf, in_wt_ref[0],
                      preferred_element_type=jnp.float32) + in_b_ref[0, 0]  # [Bb*S, 3E]

        # Split Q/K/V (1/sqrt(dh) already folded into the Q weights) and batch
        # the heads:  [Bb*S, E] -> [Bb, S, nhead, dh] -> [Bb*nhead, S, dh].
        def heads(t):
            return jnp.swapaxes(t.reshape(Bb, S, nhead, dh), 1, 2) \
                      .reshape(BH, S, dh).astype(mm_dtype)

        q = heads(qkv[:, :E])
        k = heads(qkv[:, E:2 * E])
        v = heads(qkv[:, 2 * E:])

        # one batched logits einsum over all (batch, head) pairs
        s = jnp.einsum('bqd,bkd->bqk', q, k,
                       preferred_element_type=jnp.float32)             # [BH, S, S]
        # additive mask (src_mask + key padding), precomputed in the wrapper,
        # broadcast over the head axis.  Fully-masked rows stay finite because
        # the mask uses -1e30 (not -inf): they degrade to uniform attention.
        s = s.reshape(Bb, nhead, S, S) + mask_ref[...][:, None, :, :]
        m = jnp.max(s, axis=-1, keepdims=True)
        p = jnp.exp(s - m)
        p = p * pl.reciprocal(jnp.sum(p, axis=-1, keepdims=True), approx=True)
        p = p.reshape(BH, S, S).astype(mm_dtype)
        o = jnp.einsum('bqk,bkd->bqd', p, v,
                       preferred_element_type=jnp.float32)             # [BH, S, dh]

        # head merge fused into the out-projection (full-E contraction, no concat)
        attn = jnp.swapaxes(o.reshape(Bb, nhead, S, dh), 1, 2).reshape(Bb * S, E)
        attn = jnp.dot(attn.astype(mm_dtype), out_wt_ref[0],
                       preferred_element_type=jnp.float32) + out_b_ref[0, 0]

        # ---- residual + LayerNorm 1 (post-norm, eps=1e-5) ----
        y = x + attn
        mu = jnp.mean(y, axis=-1, keepdims=True)
        var = jnp.mean(jnp.square(y - mu), axis=-1, keepdims=True)
        y = (y - mu) * jax.lax.rsqrt(var + 1e-5) * ln1_w_ref[0, 0] + ln1_b_ref[0, 0]
        y_bf = y.astype(mm_dtype)                                      # cast once

        # ---- feed-forward: linear -> ReLU -> linear ----
        hdn = jnp.dot(y_bf, lin1_wt_ref[0],
                      preferred_element_type=jnp.float32) + lin1_b_ref[0, 0]   # [Bb*S, FF]
        hdn = jnp.maximum(hdn, 0.0)
        f = jnp.dot(hdn.astype(mm_dtype), lin2_wt_ref[0],
                    preferred_element_type=jnp.float32) + lin2_b_ref[0, 0]     # [Bb*S, E]

        # ---- residual + LayerNorm 2 ----
        z = y + f
        mu2 = jnp.mean(z, axis=-1, keepdims=True)
        var2 = jnp.mean(jnp.square(z - mu2), axis=-1, keepdims=True)
        z = (z - mu2) * jax.lax.rsqrt(var2 + 1e-5) * ln2_w_ref[0, 0] + ln2_b_ref[0, 0]

        # carry activation to the next layer; write HBM output only once
        act_ref[...] = z

        @pl.when(l == n_layers - 1)
        def _():
            o_ref[...] = z.reshape(Bb, S, E).astype(o_ref.dtype)

    return kernel


def _vmem_bytes_estimate(Bb, S, E, FF, nhead):
    """Rough per-block VMEM footprint (double-buffered I/O + weights + scratch)."""
    f32, bf16 = 4, 2
    act_scratch = Bb * S * E * f32
    io_blocks = 4 * Bb * S * E * f32                      # x + out, double-buffered
    mask_block = 2 * Bb * S * S * f32
    weight_blocks = 2 * (E * 3 * E + E * E + E * FF + FF * E) * bf16 \
        + 2 * (3 * E + 6 * E + FF) * f32                  # biases + LN params
    intermediates = Bb * S * (6 * E + FF) * f32 + 2 * Bb * nhead * S * S * f32
    return act_scratch + io_blocks + mask_block + weight_blocks + intermediates


def transformer_layers_apply(x, mask_add, stacked, nhead, batch_block=None):
    """Full encoder stack in a single pallas_call.

    x: [B, S, E] f32; mask_add: combined additive mask [B, S, S] f32.
    batch_block=None -> nb=1: each layer's weights are DMA'd exactly once per
    forward (best on single-TC v5e/v6e).  On v7x prefer batch_block=B//2 so
    the "parallel" batch axis shards across both TensorCores.
    """
    B, S, E = x.shape
    L = stacked["in_wt"].shape[0]
    FF = stacked["lin1_wt"].shape[2]
    Bb = B if batch_block is None else batch_block
    assert B % Bb == 0, "batch_block must divide B"
    nb = B // Bb

    # per-layer stacked weight: block (1, *shape) selected by the layer axis
    def wspec(shape):
        nd = len(shape)
        return pl.BlockSpec((1,) + shape, lambda b, l, _nd=nd: (l,) + (0,) * _nd)

    est = _vmem_bytes_estimate(Bb, S, E, FF, nhead)
    vmem_limit = min(max(int(est * 1.5), 32 * 1024 * 1024), 48 * 1024 * 1024)

    kernel = _make_fused_encoder_kernel(nhead)
    # NOTE: weight BlockSpec buffer depth (pl.Buffered) is left at the default;
    # sweep pipeline_mode depth when tuning a production config.
    return pl.pallas_call(
        kernel,
        out_shape=jax.ShapeDtypeStruct((B, S, E), jnp.float32),
        grid=(nb, L),                                     # layer (resident-act) axis last
        in_specs=[
            pl.BlockSpec((Bb, S, E), lambda b, l: (b, 0, 0)),   # x (read at l==0 only)
            pl.BlockSpec((Bb, S, S), lambda b, l: (b, 0, 0)),   # combined additive mask
            wspec((E, 3 * E)), wspec((1, 3 * E)),               # in_proj (pre-T), bias
            wspec((E, E)), wspec((1, E)),                       # out_proj (pre-T), bias
            wspec((1, E)), wspec((1, E)),                       # ln1 weight, bias
            wspec((E, FF)), wspec((1, FF)),                     # linear1 (pre-T), bias
            wspec((FF, E)), wspec((1, E)),                      # linear2 (pre-T), bias
            wspec((1, E)), wspec((1, E)),                       # ln2 weight, bias
        ],
        out_specs=pl.BlockSpec((Bb, S, E), lambda b, l: (b, 0, 0)),
        scratch_shapes=[pltpu.VMEM((Bb * S, E), jnp.float32)],  # resident activation
        compiler_params=pltpu.CompilerParams(
            dimension_semantics=("parallel", "arbitrary"),
            vmem_limit_bytes=vmem_limit),
    )(
        x, mask_add,
        stacked["in_wt"], stacked["in_b"],
        stacked["out_wt"], stacked["out_b"],
        stacked["ln1_w"], stacked["ln1_b"],
        stacked["lin1_wt"], stacked["lin1_b"],
        stacked["lin2_wt"], stacked["lin2_b"],
        stacked["ln2_w"], stacked["ln2_b"],
    )


# ---------------------------------------------------------------------------
# Module-level glue (embedding, positional encoding, mask conversion)
# ---------------------------------------------------------------------------
def make_positional_encoding(d_model, max_len=5000):
    position = jnp.arange(max_len, dtype=jnp.float32)[:, None]
    div_term = jnp.exp(jnp.arange(0, d_model, 2, dtype=jnp.float32)
                       * (-math.log(10000.0) / d_model))
    pe = jnp.zeros((max_len, 1, d_model), jnp.float32)
    pe = pe.at[:, 0, 0::2].set(jnp.sin(position * div_term))
    pe = pe.at[:, 0, 1::2].set(jnp.cos(position * div_term))
    return pe


def init_params(key, num_layers, emb_size, nhead, vocab_size, dim_feedforward,
                matmul_dtype=jnp.bfloat16):
    """Random-but-deterministic parameters, stacked over layers.

    Matmul weights are stored pre-transposed ([in, out]) in `matmul_dtype`
    (bf16) for MXU throughput; biases/LayerNorm stay f32.  The attention
    1/sqrt(dh) scale is folded into the Q columns of in_proj weight/bias.
    """
    L, E, FF = num_layers, emb_size, dim_feedforward
    dh = E // nhead
    scale = 1.0 / math.sqrt(dh)
    keys = jax.random.split(key, 7)
    # TokenEmbedding init_weights(): uniform(-0.1, 0.1)
    emb = jax.random.uniform(keys[0], (vocab_size, E), jnp.float32, -0.1, 0.1)

    def u(k, shape, s=0.1):
        return jax.random.uniform(k, shape, jnp.float32, -s, s)

    in_wt = u(keys[1], (L, E, 3 * E))                  # MHA in_proj, pre-T
    in_b = jnp.zeros((L, 1, 3 * E), jnp.float32)
    in_wt = in_wt.at[:, :, :E].multiply(scale)         # fold 1/sqrt(dh) into Q
    in_b = in_b.at[:, :, :E].multiply(scale)

    stacked = dict(
        in_wt=in_wt.astype(matmul_dtype),
        in_b=in_b,
        out_wt=u(keys[2], (L, E, E)).astype(matmul_dtype),      # out_proj, pre-T
        out_b=jnp.zeros((L, 1, E), jnp.float32),
        ln1_w=jnp.ones((L, 1, E), jnp.float32),
        ln1_b=jnp.zeros((L, 1, E), jnp.float32),
        lin1_wt=u(keys[3], (L, E, FF)).astype(matmul_dtype),    # linear1, pre-T
        lin1_b=u(keys[4], (L, 1, FF), 0.05),
        lin2_wt=u(keys[5], (L, FF, E)).astype(matmul_dtype),    # linear2, pre-T
        lin2_b=u(keys[6], (L, 1, E), 0.05),
        ln2_w=jnp.ones((L, 1, E), jnp.float32),
        ln2_b=jnp.zeros((L, 1, E), jnp.float32),
    )
    return dict(emb=emb, pe=make_positional_encoding(E), stacked=stacked)


@partial(jax.jit, static_argnames=("nhead", "batch_block"))
def transformer_enc_forward(src, src_mask, src_padding_mask, params, nhead,
                            batch_block=None):
    """src: [S, B] int32 tokens; src_mask: [S, S] additive float;
    src_padding_mask: [B, S] bool (True = padded).  Returns [S, B, E]."""
    S, B = src.shape
    E = params["emb"].shape[1]

    # TokenEmbedding: lookup * sqrt(emb_size)
    x = jnp.take(params["emb"], src, axis=0) * math.sqrt(E)        # [S, B, E]
    # PositionalEncoding: x + pe[:S]  (dropout = identity, eval)
    x = x + params["pe"][:S]                                       # [S, B, E]

    # kernel layout: [B, S, E]
    x = jnp.transpose(x, (1, 0, 2)).astype(jnp.float32)            # [B, S, E]

    # combined additive mask built ONCE: src_mask + key-padding -> [B, S, S]
    kpm_add = jnp.where(src_padding_mask, -1e30, 0.0).astype(jnp.float32)   # [B, S]
    mask_add = src_mask.astype(jnp.float32)[None, :, :] + kpm_add[:, None, :]

    x = transformer_layers_apply(x, mask_add, params["stacked"], nhead, batch_block)

    return jnp.transpose(x, (1, 0, 2))                             # [S, B, E]


# ---------------------------------------------------------------------------
if __name__ == "__main__":
    # small, module-consistent shapes
    S, B = 8, 2
    num_encoder_layers, emb_size, nhead = 2, 32, 4
    src_vocab_size, dim_feedforward = 50, 64
    assert emb_size % nhead == 0

    key = jax.random.PRNGKey(0)
    k_params, k_tok = jax.random.split(key)
    params = init_params(k_params, num_encoder_layers, emb_size, nhead,
                         src_vocab_size, dim_feedforward)

    src = jax.random.randint(k_tok, (S, B), 0, src_vocab_size, jnp.int32)   # [S, B]
    src_mask = jnp.zeros((S, S), jnp.float32)                               # additive mask
    src_padding_mask = jnp.zeros((B, S), jnp.bool_).at[1, 6:].set(True)     # pad last 2 of b=1

    out = transformer_enc_forward(src, src_mask, src_padding_mask, params, nhead)
    jax.block_until_ready(out)
    assert out.shape == (S, B, emb_size) and jnp.all(jnp.isfinite(out))
    print("KERNEL_OK")
</pallas_src>

<mosaic_0001>
module attributes {stable_mosaic.version = 11 : i64} {
  func.func @kernel(%arg0: i32, %arg1: i32, %arg2: memref<2x8x32xf32, #tpu.memory_space<vmem>>, %arg3: memref<2x8x8xf32, #tpu.memory_space<vmem>>, %arg4: memref<1x32x96xbf16, #tpu.memory_space<vmem>>, %arg5: memref<1x1x96xf32, #tpu.memory_space<vmem>>, %arg6: memref<1x32x32xbf16, #tpu.memory_space<vmem>>, %arg7: memref<1x1x32xf32, #tpu.memory_space<vmem>>, %arg8: memref<1x1x32xf32, #tpu.memory_space<vmem>>, %arg9: memref<1x1x32xf32, #tpu.memory_space<vmem>>, %arg10: memref<1x32x64xbf16, #tpu.memory_space<vmem>>, %arg11: memref<1x1x64xf32, #tpu.memory_space<vmem>>, %arg12: memref<1x64x32xbf16, #tpu.memory_space<vmem>>, %arg13: memref<1x1x32xf32, #tpu.memory_space<vmem>>, %arg14: memref<1x1x32xf32, #tpu.memory_space<vmem>>, %arg15: memref<1x1x32xf32, #tpu.memory_space<vmem>>, %arg16: memref<2x8x32xf32, #tpu.memory_space<vmem>>, %arg17: memref<16x32xf32, #tpu.memory_space<vmem>>) attributes {dimension_semantics = [#tpu.dimension_semantics<parallel>, #tpu.dimension_semantics<arbitrary>], iteration_bounds = array<i64: 1, 2>, scalar_prefetch = 0 : i64, scratch_operands = 1 : i64, tpu.core_type = #tpu.core_type<tc>, window_params = [{transform_indices = @transform_0, window_bounds = array<i64: 2, 8, 32>}, {transform_indices = @transform_1, window_bounds = array<i64: 2, 8, 8>}, {transform_indices = @transform_2, window_bounds = array<i64: 1, 32, 96>}, {transform_indices = @transform_3, window_bounds = array<i64: 1, 1, 96>}, {transform_indices = @transform_4, window_bounds = array<i64: 1, 32, 32>}, {transform_indices = @transform_5, window_bounds = array<i64: 1, 1, 32>}, {transform_indices = @transform_6, window_bounds = array<i64: 1, 1, 32>}, {transform_indices = @transform_7, window_bounds = array<i64: 1, 1, 32>}, {transform_indices = @transform_8, window_bounds = array<i64: 1, 32, 64>}, {transform_indices = @transform_9, window_bounds = array<i64: 1, 1, 64>}, {transform_indices = @transform_10, window_bounds = array<i64: 1, 64, 32>}, {transform_indices = @transform_11, window_bounds = array<i64: 1, 1, 32>}, {transform_indices = @transform_12, window_bounds = array<i64: 1, 1, 32>}, {transform_indices = @transform_13, window_bounds = array<i64: 1, 1, 32>}, {transform_indices = @transform_14, window_bounds = array<i64: 2, 8, 32>}]} {
    %c0_i32 = arith.constant 0 : i32
    %0 = arith.cmpi eq, %arg1, %c0_i32 : i32
    %1 = arith.extui %0 : i1 to i32
    %c0_i32_0 = arith.constant 0 : i32
    %2 = arith.cmpi ne, %1, %c0_i32_0 : i32
    scf.if %2 {
      %c0_62 = arith.constant 0 : index
      %c0_63 = arith.constant 0 : index
      %c0_64 = arith.constant 0 : index
      %141 = vector.load %arg2[%c0_62, %c0_63, %c0_64] : memref<2x8x32xf32, #tpu.memory_space<vmem>>, vector<2x8x32xf32>
      %142 = vector.shape_cast %141 : vector<2x8x32xf32> to vector<16x32xf32>
      %c0_65 = arith.constant 0 : index
      %c0_66 = arith.constant 0 : index
      %143 = vector.load %arg17[%c0_65, %c0_66] : memref<16x32xf32, #tpu.memory_space<vmem>>, vector<16x32xf32>
      tpu.vector_store %arg17[%c0_65, %c0_66], %142 {strides = array<i32>} : memref<16x32xf32, #tpu.memory_space<vmem>>, vector<16x32xf32>,
    } else {
    }
    %c0 = arith.constant 0 : index
    %c0_1 = arith.constant 0 : index
    %3 = vector.load %arg17[%c0, %c0_1] : memref<16x32xf32, #tpu.memory_space<vmem>>, vector<16x32xf32>
    %4 = arith.truncf %3 : vector<16x32xf32> to vector<16x32xbf16>
    %c0_2 = arith.constant 0 : index
    %c0_3 = arith.constant 0 : index
    %c0_4 = arith.constant 0 : index
    %5 = vector.load %arg4[%c0_2, %c0_3, %c0_4] : memref<1x32x96xbf16, #tpu.memory_space<vmem>>, vector<1x32x96xbf16>
    %6 = vector.shape_cast %5 : vector<1x32x96xbf16> to vector<32x96xbf16>
    %cst = arith.constant dense<0.000000e+00> : vector<16x96xf32>
    %7 = tpu.matmul %4, %6, %cst {dimension_numbers = #tpu.dot_dimension_numbers<[1], [0], [0], [1], [0, 0, 1, 1], [], []>} : vector<16x32xbf16>, vector<32x96xbf16>, vector<16x96xf32> -> vector<16x96xf32>
    %c0_5 = arith.constant 0 : index
    %c0_6 = arith.constant 0 : index
    %c0_7 = arith.constant 0 : index
    %8 = vector.load %arg5[%c0_5, %c0_6, %c0_7] : memref<1x1x96xf32, #tpu.memory_space<vmem>>, vector<1x1x96xf32>
    %9 = vector.shape_cast %8 : vector<1x1x96xf32> to vector<96xf32>
    %10 = vector.shape_cast %9 : vector<96xf32> to vector<1x96xf32>
    %11 = vector.broadcast %10 : vector<1x96xf32> to vector<16x96xf32>
    %12 = arith.addf %7, %11 : vector<16x96xf32>
    %13 = vector.extract_strided_slice %12 {offsets = [0, 0], sizes = [16, 32], strides = [1, 1]} : vector<16x96xf32> to vector<16x32xf32>
    %14 = vector.shape_cast %13 : vector<16x32xf32> to vector<2x8x4x8xf32>
    %15 = tpu.transpose %14, [0, 2, 1, 3] : vector<2x8x4x8xf32> -> vector<2x4x8x8xf32>
    %16 = vector.shape_cast %15 : vector<2x4x8x8xf32> to vector<8x8x8xf32>
    %17 = arith.truncf %16 : vector<8x8x8xf32> to vector<8x8x8xbf16>
    %18 = vector.extract_strided_slice %12 {offsets = [0, 32], sizes = [16, 32], strides = [1, 1]} : vector<16x96xf32> to vector<16x32xf32>
    %19 = vector.shape_cast %18 : vector<16x32xf32> to vector<2x8x4x8xf32>
    %20 = tpu.transpose %19, [0, 2, 1, 3] : vector<2x8x4x8xf32> -> vector<2x4x8x8xf32>
    %21 = vector.shape_cast %20 : vector<2x4x8x8xf32> to vector<8x8x8xf32>
    %22 = arith.truncf %21 : vector<8x8x8xf32> to vector<8x8x8xbf16>
    %23 = vector.extract_strided_slice %12 {offsets = [0, 64], sizes = [16, 32], strides = [1, 1]} : vector<16x96xf32> to vector<16x32xf32>
    %24 = vector.shape_cast %23 : vector<16x32xf32> to vector<2x8x4x8xf32>
    %25 = tpu.transpose %24, [0, 2, 1, 3] : vector<2x8x4x8xf32> -> vector<2x4x8x8xf32>
    %26 = vector.shape_cast %25 : vector<2x4x8x8xf32> to vector<8x8x8xf32>
    %27 = arith.truncf %26 : vector<8x8x8xf32> to vector<8x8x8xbf16>
    "tpu.trace_start"() <{level = 10 : i32, message = "bqd,bkd->bqk"}> : () -> ()
    %cst_8 = arith.constant dense<0.000000e+00> : vector<8x8x8xf32>
    %28 = tpu.matmul %17, %22, %cst_8 {dimension_numbers = #tpu.dot_dimension_numbers<[2], [2], [1], [1], [0, 0, 0, 1, 1, 1], [0], [0]>} : vector<8x8x8xbf16>, vector<8x8x8xbf16>, vector<8x8x8xf32> -> vector<8x8x8xf32>
    "tpu.trace_stop"() : () -> ()
    %29 = vector.shape_cast %28 : vector<8x8x8xf32> to vector<2x4x8x8xf32>
    %c0_9 = arith.constant 0 : index
    %c0_10 = arith.constant 0 : index
    %c0_11 = arith.constant 0 : index
    %30 = vector.load %arg3[%c0_9, %c0_10, %c0_11] : memref<2x8x8xf32, #tpu.memory_space<vmem>>, vector<2x8x8xf32>
    %31 = vector.shape_cast %30 : vector<2x8x8xf32> to vector<2x1x8x8xf32>
    %32 = vector.broadcast %31 : vector<2x1x8x8xf32> to vector<2x4x8x8xf32>
    %33 = arith.addf %29, %32 : vector<2x4x8x8xf32>
    %cst_12 = arith.constant dense<0xFF800000> : vector<2x4x8xf32>
    %34 = vector.multi_reduction <maximumf>, %33, %cst_12 [3] : vector<2x4x8x8xf32> to vector<2x4x8xf32>
    %35 = vector.shape_cast %34 : vector<2x4x8xf32> to vector<2x4x8x1xf32>
    %36 = vector.broadcast %35 : vector<2x4x8x1xf32> to vector<2x4x8x8xf32>
    %37 = arith.subf %33, %36 : vector<2x4x8x8xf32>
    %38 = math.exp %37 : vector<2x4x8x8xf32>
    %cst_13 = arith.constant dense<0.000000e+00> : vector<2x4x8xf32>
    %39 = vector.multi_reduction <add>, %38, %cst_13 [3] : vector<2x4x8x8xf32> to vector<2x4x8xf32>
    %40 = vector.shape_cast %39 : vector<2x4x8xf32> to vector<2x4x8x1xf32>
    %41 = tpu.reciprocal %40 {approx = true} : vector<2x4x8x1xf32> -> vector<2x4x8x1xf32>
    %42 = vector.broadcast %41 : vector<2x4x8x1xf32> to vector<2x4x8x8xf32>
    %43 = arith.mulf %38, %42 : vector<2x4x8x8xf32>
    %44 = vector.shape_cast %43 : vector<2x4x8x8xf32> to vector<8x8x8xf32>
    %45 = arith.truncf %44 : vector<8x8x8xf32> to vector<8x8x8xbf16>
    "tpu.trace_start"() <{level = 10 : i32, message = "bqk,bkd->bqd"}> : () -> ()
    %cst_14 = arith.constant dense<0.000000e+00> : vector<8x8x8xf32>
    %46 = tpu.matmul %45, %27, %cst_14 {dimension_numbers = #tpu.dot_dimension_numbers<[2], [1], [1], [2], [0, 0, 0, 1, 1, 2], [0], [0]>} : vector<8x8x8xbf16>, vector<8x8x8xbf16>, vector<8x8x8xf32> -> vector<8x8x8xf32>
    "tpu.trace_stop"() : () -> ()
    %47 = vector.shape_cast %46 : vector<8x8x8xf32> to vector<2x4x8x8xf32>
    %48 = tpu.transpose %47, [0, 2, 1, 3] : vector<2x4x8x8xf32> -> vector<2x8x4x8xf32>
    %49 = vector.shape_cast %48 : vector<2x8x4x8xf32> to vector<16x32xf32>
    %50 = arith.truncf %49 : vector<16x32xf32> to vector<16x32xbf16>
    %c0_15 = arith.constant 0 : index
    %c0_16 = arith.constant 0 : index
    %c0_17 = arith.constant 0 : index
    %51 = vector.load %arg6[%c0_15, %c0_16, %c0_17] : memref<1x32x32xbf16, #tpu.memory_space<vmem>>, vector<1x32x32xbf16>
    %52 = vector.shape_cast %51 : vector<1x32x32xbf16> to vector<32x32xbf16>
    %cst_18 = arith.constant dense<0.000000e+00> : vector<16x32xf32>
    %53 = tpu.matmul %50, %52, %cst_18 {dimension_numbers = #tpu.dot_dimension_numbers<[1], [0], [0], [1], [0, 0, 1, 1], [], []>} : vector<16x32xbf16>, vector<32x32xbf16>, vector<16x32xf32> -> vector<16x32xf32>
    %c0_19 = arith.constant 0 : index
    %c0_20 = arith.constant 0 : index
    %c0_21 = arith.constant 0 : index
    %54 = vector.load %arg7[%c0_19, %c0_20, %c0_21] : memref<1x1x32xf32, #tpu.memory_space<vmem>>, vector<1x1x32xf32>
    %55 = vector.shape_cast %54 : vector<1x1x32xf32> to vector<32xf32>
    %56 = vector.shape_cast %55 : vector<32xf32> to vector<1x32xf32>
    %57 = vector.broadcast %56 : vector<1x32xf32> to vector<16x32xf32>
    %58 = arith.addf %53, %57 : vector<16x32xf32>
    %59 = arith.addf %3, %58 : vector<16x32xf32>
    %cst_22 = arith.constant dense<0.000000e+00> : vector<16xf32>
    %60 = vector.multi_reduction <add>, %59, %cst_22 [1] : vector<16x32xf32> to vector<16xf32>
    %61 = vector.shape_cast %60 : vector<16xf32> to vector<16x1xf32>
    %cst_23 = arith.constant 3.200000e+01 : f32
    %62 = vector.broadcast %cst_23 : f32 to vector<16x1xf32>
    %63 = arith.divf %61, %62 : vector<16x1xf32>
    %64 = vector.broadcast %63 : vector<16x1xf32> to vector<16x32xf32>
    %65 = arith.subf %59, %64 : vector<16x32xf32>
    %66 = arith.mulf %65, %65 : vector<16x32xf32>
    %cst_24 = arith.constant dense<0.000000e+00> : vector<16xf32>
    %67 = vector.multi_reduction <add>, %66, %cst_24 [1] : vector<16x32xf32> to vector<16xf32>
    %68 = vector.shape_cast %67 : vector<16xf32> to vector<16x1xf32>
    %cst_25 = arith.constant 3.200000e+01 : f32
    %69 = vector.broadcast %cst_25 : f32 to vector<16x1xf32>
    %70 = arith.divf %68, %69 : vector<16x1xf32>
    %71 = vector.broadcast %63 : vector<16x1xf32> to vector<16x32xf32>
    %72 = arith.subf %59, %71 : vector<16x32xf32>
    %cst_26 = arith.constant 9.99999974E-6 : f32
    %73 = vector.broadcast %cst_26 : f32 to vector<16x1xf32>
    %74 = arith.addf %70, %73 : vector<16x1xf32>
    %75 = math.rsqrt %74 : vector<16x1xf32>
    %76 = vector.broadcast %75 : vector<16x1xf32> to vector<16x32xf32>
    %77 = arith.mulf %72, %76 : vector<16x32xf32>
    %c0_27 = arith.constant 0 : index
    %c0_28 = arith.constant 0 : index
    %c0_29 = arith.constant 0 : index
    %78 = vector.load %arg8[%c0_27, %c0_28, %c0_29] : memref<1x1x32xf32, #tpu.memory_space<vmem>>, vector<1x1x32xf32>
    %79 = vector.shape_cast %78 : vector<1x1x32xf32> to vector<32xf32>
    %80 = vector.shape_cast %79 : vector<32xf32> to vector<1x32xf32>
    %81 = vector.broadcast %80 : vector<1x32xf32> to vector<16x32xf32>
    %82 = arith.mulf %77, %81 : vector<16x32xf32>
    %c0_30 = arith.constant 0 : index
    %c0_31 = arith.constant 0 : index
    %c0_32 = arith.constant 0 : index
    %83 = vector.load %arg9[%c0_30, %c0_31, %c0_32] : memref<1x1x32xf32, #tpu.memory_space<vmem>>, vector<1x1x32xf32>
    %84 = vector.shape_cast %83 : vector<1x1x32xf32> to vector<32xf32>
    %85 = vector.shape_cast %84 : vector<32xf32> to vector<1x32xf32>
    %86 = vector.broadcast %85 : vector<1x32xf32> to vector<16x32xf32>
    %87 = arith.addf %82, %86 : vector<16x32xf32>
    %88 = arith.truncf %87 : vector<16x32xf32> to vector<16x32xbf16>
    %c0_33 = arith.constant 0 : index
    %c0_34 = arith.constant 0 : index
    %c0_35 = arith.constant 0 : index
    %89 = vector.load %arg10[%c0_33, %c0_34, %c0_35] : memref<1x32x64xbf16, #tpu.memory_space<vmem>>, vector<1x32x64xbf16>
    %90 = vector.shape_cast %89 : vector<1x32x64xbf16> to vector<32x64xbf16>
    %cst_36 = arith.constant dense<0.000000e+00> : vector<16x64xf32>
    %91 = tpu.matmul %88, %90, %cst_36 {dimension_numbers = #tpu.dot_dimension_numbers<[1], [0], [0], [1], [0, 0, 1, 1], [], []>} : vector<16x32xbf16>, vector<32x64xbf16>, vector<16x64xf32> -> vector<16x64xf32>
    %c0_37 = arith.constant 0 : index
    %c0_38 = arith.constant 0 : index
    %c0_39 = arith.constant 0 : index
    %92 = vector.load %arg11[%c0_37, %c0_38, %c0_39] : memref<1x1x64xf32, #tpu.memory_space<vmem>>, vector<1x1x64xf32>
    %93 = vector.shape_cast %92 : vector<1x1x64xf32> to vector<64xf32>
    %94 = vector.shape_cast %93 : vector<64xf32> to vector<1x64xf32>
    %95 = vector.broadcast %94 : vector<1x64xf32> to vector<16x64xf32>
    %96 = arith.addf %91, %95 : vector<16x64xf32>
    %cst_40 = arith.constant 0.000000e+00 : f32
    %97 = vector.broadcast %cst_40 : f32 to vector<16x64xf32>
    %98 = arith.maximumf %96, %97 : vector<16x64xf32>
    %99 = arith.truncf %98 : vector<16x64xf32> to vector<16x64xbf16>
    %c0_41 = arith.constant 0 : index
    %c0_42 = arith.constant 0 : index
    %c0_43 = arith.constant 0 : index
    %100 = vector.load %arg12[%c0_41, %c0_42, %c0_43] : memref<1x64x32xbf16, #tpu.memory_space<vmem>>, vector<1x64x32xbf16>
    %101 = vector.shape_cast %100 : vector<1x64x32xbf16> to vector<64x32xbf16>
    %cst_44 = arith.constant dense<0.000000e+00> : vector<16x32xf32>
    %102 = tpu.matmul %99, %101, %cst_44 {dimension_numbers = #tpu.dot_dimension_numbers<[1], [0], [0], [1], [0, 0, 1, 1], [], []>} : vector<16x64xbf16>, vector<64x32xbf16>, vector<16x32xf32> -> vector<16x32xf32>
    %c0_45 = arith.constant 0 : index
    %c0_46 = arith.constant 0 : index
    %c0_47 = arith.constant 0 : index
    %103 = vector.load %arg13[%c0_45, %c0_46, %c0_47] : memref<1x1x32xf32, #tpu.memory_space<vmem>>, vector<1x1x32xf32>
    %104 = vector.shape_cast %103 : vector<1x1x32xf32> to vector<32xf32>
    %105 = vector.shape_cast %104 : vector<32xf32> to vector<1x32xf32>
    %106 = vector.broadcast %105 : vector<1x32xf32> to vector<16x32xf32>
    %107 = arith.addf %102, %106 : vector<16x32xf32>
    %108 = arith.addf %87, %107 : vector<16x32xf32>
    %cst_48 = arith.constant dense<0.000000e+00> : vector<16xf32>
    %109 = vector.multi_reduction <add>, %108, %cst_48 [1] : vector<16x32xf32> to vector<16xf32>
    %110 = vector.shape_cast %109 : vector<16xf32> to vector<16x1xf32>
    %cst_49 = arith.constant 3.200000e+01 : f32
    %111 = vector.broadcast %cst_49 : f32 to vector<16x1xf32>
    %112 = arith.divf %110, %111 : vector<16x1xf32>
    %113 = vector.broadcast %112 : vector<16x1xf32> to vector<16x32xf32>
    %114 = arith.subf %108, %113 : vector<16x32xf32>
    %115 = arith.mulf %114, %114 : vector<16x32xf32>
    %cst_50 = arith.constant dense<0.000000e+00> : vector<16xf32>
    %116 = vector.multi_reduction <add>, %115, %cst_50 [1] : vector<16x32xf32> to vector<16xf32>
    %117 = vector.shape_cast %116 : vector<16xf32> to vector<16x1xf32>
    %cst_51 = arith.constant 3.200000e+01 : f32
    %118 = vector.broadcast %cst_51 : f32 to vector<16x1xf32>
    %119 = arith.divf %117, %118 : vector<16x1xf32>
    %120 = vector.broadcast %112 : vector<16x1xf32> to vector<16x32xf32>
    %121 = arith.subf %108, %120 : vector<16x32xf32>
    %cst_52 = arith.constant 9.99999974E-6 : f32
    %122 = vector.broadcast %cst_52 : f32 to vector<16x1xf32>
    %123 = arith.addf %119, %122 : vector<16x1xf32>
    %124 = math.rsqrt %123 : vector<16x1xf32>
    %125 = vector.broadcast %124 : vector<16x1xf32> to vector<16x32xf32>
    %126 = arith.mulf %121, %125 : vector<16x32xf32>
    %c0_53 = arith.constant 0 : index
    %c0_54 = arith.constant 0 : index
    %c0_55 = arith.constant 0 : index
    %127 = vector.load %arg14[%c0_53, %c0_54, %c0_55] : memref<1x1x32xf32, #tpu.memory_space<vmem>>, vector<1x1x32xf32>
    %128 = vector.shape_cast %127 : vector<1x1x32xf32> to vector<32xf32>
    %129 = vector.shape_cast %128 : vector<32xf32> to vector<1x32xf32>
    %130 = vector.broadcast %129 : vector<1x32xf32> to vector<16x32xf32>
    %131 = arith.mulf %126, %130 : vector<16x32xf32>
    %c0_56 = arith.constant 0 : index
    %c0_57 = arith.constant 0 : index
    %c0_58 = arith.constant 0 : index
    %132 = vector.load %arg15[%c0_56, %c0_57, %c0_58] : memref<1x1x32xf32, #tpu.memory_space<vmem>>, vector<1x1x32xf32>
    %133 = vector.shape_cast %132 : vector<1x1x32xf32> to vector<32xf32>
    %134 = vector.shape_cast %133 : vector<32xf32> to vector<1x32xf32>
    %135 = vector.broadcast %134 : vector<1x32xf32> to vector<16x32xf32>
    %136 = arith.addf %131, %135 : vector<16x32xf32>
    %c0_59 = arith.constant 0 : index
    %c0_60 = arith.constant 0 : index
    %137 = vector.load %arg17[%c0_59, %c0_60] : memref<16x32xf32, #tpu.memory_space<vmem>>, vector<16x32xf32>
    tpu.vector_store %arg17[%c0_59, %c0_60], %136 {strides = array<i32>} : memref<16x32xf32, #tpu.memory_space<vmem>>, vector<16x32xf32>,
    %c1_i32 = arith.constant 1 : i32
    %138 = arith.cmpi eq, %arg1, %c1_i32 : i32
    %139 = arith.extui %138 : i1 to i32
    %c0_i32_61 = arith.constant 0 : i32
    %140 = arith.cmpi ne, %139, %c0_i32_61 : i32
    scf.if %140 {
      %141 = vector.shape_cast %136 : vector<16x32xf32> to vector<2x8x32xf32>
      %c0_62 = arith.constant 0 : index
      %c0_63 = arith.constant 0 : index
      %c0_64 = arith.constant 0 : index
      %142 = vector.load %arg16[%c0_62, %c0_63, %c0_64] : memref<2x8x32xf32, #tpu.memory_space<vmem>>, vector<2x8x32xf32>
      tpu.vector_store %arg16[%c0_62, %c0_63, %c0_64], %141 {strides = array<i32>} : memref<2x8x32xf32, #tpu.memory_space<vmem>>, vector<2x8x32xf32>,
    } else {
    }
    return
  }
  func.func @transform_0(%arg0: i32, %arg1: i32) -> (i32, i32, i32) {
    %c0_i32 = arith.constant 0 : i32
    %c0_i32_0 = arith.constant 0 : i32
    %c0_i32_1 = arith.constant 0 : i32
    return %arg0, %c0_i32, %c0_i32_0 : i32, i32, i32
  }
  func.func @transform_1(%arg0: i32, %arg1: i32) -> (i32, i32, i32) {
    %c0_i32 = arith.constant 0 : i32
    %c0_i32_0 = arith.constant 0 : i32
    %c0_i32_1 = arith.constant 0 : i32
    return %arg0, %c0_i32, %c0_i32_0 : i32, i32, i32
  }
  func.func @transform_2(%arg0: i32, %arg1: i32) -> (i32, i32, i32) {
    %c0_i32 = arith.constant 0 : i32
    %c0_i32_0 = arith.constant 0 : i32
    %c0_i32_1 = arith.constant 0 : i32
    return %arg1, %c0_i32, %c0_i32_0 : i32, i32, i32
  }
  func.func @transform_3(%arg0: i32, %arg1: i32) -> (i32, i32, i32) {
    %c0_i32 = arith.constant 0 : i32
    %c0_i32_0 = arith.constant 0 : i32
    %c0_i32_1 = arith.constant 0 : i32
    return %arg1, %c0_i32, %c0_i32_0 : i32, i32, i32
  }
  func.func @transform_4(%arg0: i32, %arg1: i32) -> (i32, i32, i32) {
    %c0_i32 = arith.constant 0 : i32
    %c0_i32_0 = arith.constant 0 : i32
    %c0_i32_1 = arith.constant 0 : i32
    return %arg1, %c0_i32, %c0_i32_0 : i32, i32, i32
  }
  func.func @transform_5(%arg0: i32, %arg1: i32) -> (i32, i32, i32) {
    %c0_i32 = arith.constant 0 : i32
    %c0_i32_0 = arith.constant 0 : i32
    %c0_i32_1 = arith.constant 0 : i32
    return %arg1, %c0_i32, %c0_i32_0 : i32, i32, i32
  }
  func.func @transform_6(%arg0: i32, %arg1: i32) -> (i32, i32, i32) {
    %c0_i32 = arith.constant 0 : i32
    %c0_i32_0 = arith.constant 0 : i32
    %c0_i32_1 = arith.constant 0 : i32
    return %arg1, %c0_i32, %c0_i32_0 : i32, i32, i32
  }
  func.func @transform_7(%arg0: i32, %arg1: i32) -> (i32, i32, i32) {
    %c0_i32 = arith.constant 0 : i32
    %c0_i32_0 = arith.constant 0 : i32
    %c0_i32_1 = arith.constant 0 : i32
    return %arg1, %c0_i32, %c0_i32_0 : i32, i32, i32
  }
  func.func @transform_8(%arg0: i32, %arg1: i32) -> (i32, i32, i32) {
    %c0_i32 = arith.constant 0 : i32
    %c0_i32_0 = arith.constant 0 : i32
    %c0_i32_1 = arith.constant 0 : i32
    return %arg1, %c0_i32, %c0_i32_0 : i32, i32, i32
  }
  func.func @transform_9(%arg0: i32, %arg1: i32) -> (i32, i32, i32) {
    %c0_i32 = arith.constant 0 : i32
    %c0_i32_0 = arith.constant 0 : i32
    %c0_i32_1 = arith.constant 0 : i32
    return %arg1, %c0_i32, %c0_i32_0 : i32, i32, i32
  }
  func.func @transform_10(%arg0: i32, %arg1: i32) -> (i32, i32, i32) {
    %c0_i32 = arith.constant 0 : i32
    %c0_i32_0 = arith.constant 0 : i32
    %c0_i32_1 = arith.constant 0 : i32
    return %arg1, %c0_i32, %c0_i32_0 : i32, i32, i32
  }
  func.func @transform_11(%arg0: i32, %arg1: i32) -> (i32, i32, i32) {
    %c0_i32 = arith.constant 0 : i32
    %c0_i32_0 = arith.constant 0 : i32
    %c0_i32_1 = arith.constant 0 : i32
    return %arg1, %c0_i32, %c0_i32_0 : i32, i32, i32
  }
  func.func @transform_12(%arg0: i32, %arg1: i32) -> (i32, i32, i32) {
    %c0_i32 = arith.constant 0 : i32
    %c0_i32_0 = arith.constant 0 : i32
    %c0_i32_1 = arith.constant 0 : i32
    return %arg1, %c0_i32, %c0_i32_0 : i32, i32, i32
  }
  func.func @transform_13(%arg0: i32, %arg1: i32) -> (i32, i32, i32) {
    %c0_i32 = arith.constant 0 : i32
    %c0_i32_0 = arith.constant 0 : i32
    %c0_i32_1 = arith.constant 0 : i32
    return %arg1, %c0_i32, %c0_i32_0 : i32, i32, i32
  }
  func.func @transform_14(%arg0: i32, %arg1: i32) -> (i32, i32, i32) {
    %c0_i32 = arith.constant 0 : i32
    %c0_i32_0 = arith.constant 0 : i32
    %c0_i32_1 = arith.constant 0 : i32
    return %arg0, %c0_i32, %c0_i32_0 : i32, i32, i32
  }
}

</mosaic_0001>

<llo_original>
// kernel: transformer_enc_forward.1
$region0: #{transformer_enc_forward.1}
  #allocation0 [shape = 'u32[]', space=smem, size = 0x4, offset = 0x4, fixed_abs, tag = 'smem constant byte address 0x4 - core index']
  #allocation1 [shape = 'u32[144,128]{1,0:T(1,128)}', space=vmem, size = 0x12000, scoped, tag = 'internal scratch']
  #allocation2 [shape = 'f32[16,32]{1,0:T(8,128)}', space=vmem, size = 0x2000, scoped, tag = 'scratch operand']
  %s0 = inlined_call_operand.vmem [shape: f32[2,8,32], index: 0, kind: input, shape index: {}]
  %s1 = inlined_call_operand.vmem [shape: f32[2,8,8], index: 1, kind: input, shape index: {}]
  %s2 = inlined_call_operand.vmem [shape: bf16[2,32,96], index: 2, kind: input, shape index: {}]
  %s3 = inlined_call_operand.vmem [shape: f32[2,1,96], index: 3, kind: input, shape index: {}]
  %s4 = inlined_call_operand.vmem [shape: bf16[2,32,32], index: 4, kind: input, shape index: {}]
  %s5 = inlined_call_operand.vmem [shape: f32[2,1,32], index: 5, kind: input, shape index: {}]
  %s6 = inlined_call_operand.vmem [shape: f32[2,1,32], index: 6, kind: input, shape index: {}]
  %s7 = inlined_call_operand.vmem [shape: f32[2,1,32], index: 7, kind: input, shape index: {}]
  %s8 = inlined_call_operand.vmem [shape: bf16[2,32,64], index: 8, kind: input, shape index: {}]
  %s9 = inlined_call_operand.vmem [shape: f32[2,1,64], index: 9, kind: input, shape index: {}]
  %s10 = inlined_call_operand.vmem [shape: bf16[2,64,32], index: 10, kind: input, shape index: {}]
  %s11 = inlined_call_operand.vmem [shape: f32[2,1,32], index: 11, kind: input, shape index: {}]
  %s12 = inlined_call_operand.vmem [shape: f32[2,1,32], index: 12, kind: input, shape index: {}]
  %s13 = inlined_call_operand.vmem [shape: f32[2,1,32], index: 13, kind: input, shape index: {}]
  %s14 = inlined_call_operand.vmem [shape: f32[2,8,32], index: 14, kind: output, shape index: {}]
  %s15 = sld [smem:[#allocation0]]
  $region97: #{transformer_enc_forward.1} parent=0
    _
  %s17 = ssub.s32 1, %s15
  %s18 = scalar_select 0, %s17, %s15
  loop: start=0, step=1, limit=4
  $region2: #{transformer_enc_forward.1} parent=0 // loop_pre_header
    _
  $region3: #{transformer_enc_forward.1} parent=0 // loop_header
    %s20 = sphi 0, %s24
    %p21 = scmp.ge.s32.totalorder %s20, 4
    %s27 = sphi 0, %s39
    %s28 = sphi 0, %s35
    %s29 = sphi 0, %s27
    %s30 = sphi 0, %s28
    %s31 = sphi 0, %s29
    %s32 = sphi 0, %s30
    %s42 = sphi 0, %s44
    %s45 = sphi 0, %s42
    %s46 = sphi 0, %s45
    %s62 = sphi 0, %s46
    %s68 = sphi 0, %s70
    %s71 = sphi 0, %s68
    %s72 = sphi 0, %s71
    %s88 = sphi 0, %s72
    %s94 = sphi 0, %s96
    %s97 = sphi 0, %s94
    %s98 = sphi 0, %s97
    %s114 = sphi 0, %s98
    %s120 = sphi 0, %s122
    %s123 = sphi 0, %s120
    %s124 = sphi 0, %s123
    %s140 = sphi 0, %s124
    %s146 = sphi 0, %s148
    %s149 = sphi 0, %s146
    %s150 = sphi 0, %s149
    %s166 = sphi 0, %s150
    %s172 = sphi 0, %s174
    %s175 = sphi 0, %s172
    %s176 = sphi 0, %s175
    %s192 = sphi 0, %s176
    %s198 = sphi 0, %s200
    %s201 = sphi 0, %s198
    %s202 = sphi 0, %s201
    %s218 = sphi 0, %s202
    %s224 = sphi 0, %s226
    %s227 = sphi 0, %s224
    %s228 = sphi 0, %s227
    %s244 = sphi 0, %s228
    %s250 = sphi 0, %s252
    %s253 = sphi 0, %s250
    %s254 = sphi 0, %s253
    %s270 = sphi 0, %s254
    %s276 = sphi 0, %s278
    %s279 = sphi 0, %s276
    %s280 = sphi 0, %s279
    %s296 = sphi 0, %s280
    %s302 = sphi 0, %s304
    %s305 = sphi 0, %s302
    %s306 = sphi 0, %s305
    %s322 = sphi 0, %s306
    %s328 = sphi 0, %s330
    %s331 = sphi 0, %s328
    %s332 = sphi 0, %s331
    %s348 = sphi 0, %s332
    %s354 = sphi 0, %s356
    %s357 = sphi 0, %s354
    %s358 = sphi 0, %s357
    %s374 = sphi 0, %s358
    %s380 = sphi 0, %s382
    %s383 = sphi 0, %s380
    %s384 = sphi 0, %s383
    %s400 = sphi 0, %s384
    %s406 = sphi 0, %s408
    %s409 = sphi 0, %s406
    %s410 = sphi 0, %s409
    %s426 = sphi 0, %s410
  $region4: #{transformer_enc_forward.1} parent=0 // loop_header_branch
    %23 = sbr.rel (%p21) target = $region8
  $region5: #{transformer_enc_forward.1} parent=0 // loop_body
    %s25 = ssub.s32 %s20, 1
    %s26 = ssub.s32 %s20, 2
    %s33 = sadd.s32 1, %s28
    %p34 = scmp.ge.s32.totalorder %s33, 2
    %s35 = scalar_select %p34, 0, %s33
    %s36 = sadd.s32 1, %s27
    %s37 = scalar_select %p34, %s36, %s27
    %p38 = scmp.ge.s32.totalorder %s37, 1
    %s39 = scalar_select %p38, 0, %s37
    %s40 = ssub.s32 %s27, %s39
    %p41 = scmp.eq.s32.totalorder %s40, 0
    %s43 = sadd.s32 %s42, 1
    %s44 = scalar_select %p41, %s42, %s43
    %p47 = pneg %p41
    %p48 = scmp.eq.s32.totalorder %s20, 1
    %p49 = por %p47, %p48
    %p50 = scmp.ne.s32.totalorder %s42, %s45
    %p51 = scmp.eq.s32.totalorder %s20, 0
    %p52 = por %p50, %p51
    %p53 = scmp.ne.s32.totalorder %s42, %s45
    %p54 = scmp.eq.s32.totalorder %s25, 1
    %p55 = por %p53, %p54
    %p56 = scmp.ne.s32.totalorder %s45, %s46
    %p57 = scmp.eq.s32.totalorder %s25, 0
    %p58 = por %p56, %p57
    %p59 = scmp.ne.s32.totalorder %s45, %s46
    %p60 = scmp.eq.s32.totalorder %s26, 1
    %p61 = por %p59, %p60
    %p63 = scmp.ne.s32.totalorder %s46, %s62
    %p64 = scmp.eq.s32.totalorder %s26, 0
    %p65 = por %p63, %p64
    %s66 = ssub.s32 %s27, %s39
    %p67 = scmp.eq.s32.totalorder %s66, 0
    %s69 = sadd.s32 %s68, 1
    %s70 = scalar_select %p67, %s68, %s69
    %p73 = pneg %p67
    %p74 = scmp.eq.s32.totalorder %s20, 1
    %p75 = por %p73, %p74
    %p76 = scmp.ne.s32.totalorder %s68, %s71
    %p77 = scmp.eq.s32.totalorder %s20, 0
    %p78 = por %p76, %p77
    %p79 = scmp.ne.s32.totalorder %s68, %s71
    %p80 = scmp.eq.s32.totalorder %s25, 1
    %p81 = por %p79, %p80
    %p82 = scmp.ne.s32.totalorder %s71, %s72
    %p83 = scmp.eq.s32.totalorder %s25, 0
    %p84 = por %p82, %p83
    %p85 = scmp.ne.s32.totalorder %s71, %s72
    %p86 = scmp.eq.s32.totalorder %s26, 1
    %p87 = por %p85, %p86
    %p89 = scmp.ne.s32.totalorder %s72, %s88
    %p90 = scmp.eq.s32.totalorder %s26, 0
    %p91 = por %p89, %p90
    %s92 = ssub.s32 %s28, %s35
    %p93 = scmp.eq.s32.totalorder %s92, 0
    %s95 = sadd.s32 %s94, 1
    %s96 = scalar_select %p93, %s94, %s95
    %p99 = pneg %p93
    %p100 = scmp.eq.s32.totalorder %s20, 1
    %p101 = por %p99, %p100
    %p102 = scmp.ne.s32.totalorder %s94, %s97
    %p103 = scmp.eq.s32.totalorder %s20, 0
    %p104 = por %p102, %p103
    %p105 = scmp.ne.s32.totalorder %s94, %s97
    %p106 = scmp.eq.s32.totalorder %s25, 1
    %p107 = por %p105, %p106
    %p108 = scmp.ne.s32.totalorder %s97, %s98
    %p109 = scmp.eq.s32.totalorder %s25, 0
    %p110 = por %p108, %p109
    %p111 = scmp.ne.s32.totalorder %s97, %s98
    %p112 = scmp.eq.s32.totalorder %s26, 1
    %p113 = por %p111, %p112
    %p115 = scmp.ne.s32.totalorder %s98, %s114
    %p116 = scmp.eq.s32.totalorder %s26, 0
    %p117 = por %p115, %p116
    %s118 = ssub.s32 %s28, %s35
    %p119 = scmp.eq.s32.totalorder %s118, 0
    %s121 = sadd.s32 %s120, 1
    %s122 = scalar_select %p119, %s120, %s121
    %p125 = pneg %p119
    %p126 = scmp.eq.s32.totalorder %s20, 1
    %p127 = por %p125, %p126
    %p128 = scmp.ne.s32.totalorder %s120, %s123
    %p129 = scmp.eq.s32.totalorder %s20, 0
    %p130 = por %p128, %p129
    %p131 = scmp.ne.s32.totalorder %s120, %s123
    %p132 = scmp.eq.s32.totalorder %s25, 1
    %p133 = por %p131, %p132
    %p134 = scmp.ne.s32.totalorder %s123, %s124
    %p135 = scmp.eq.s32.totalorder %s25, 0
    %p136 = por %p134, %p135
    %p137 = scmp.ne.s32.totalorder %s123, %s124
    %p138 = scmp.eq.s32.totalorder %s26, 1
    %p139 = por %p137, %p138
    %p141 = scmp.ne.s32.totalorder %s124, %s140
    %p142 = scmp.eq.s32.totalorder %s26, 0
    %p143 = por %p141, %p142
    %s144 = ssub.s32 %s28, %s35
    %p145 = scmp.eq.s32.totalorder %s144, 0
    %s147 = sadd.s32 %s146, 1
    %s148 = scalar_select %p145, %s146, %s147
    %p151 = pneg %p145
    %p152 = scmp.eq.s32.totalorder %s20, 1
    %p153 = por %p151, %p152
    %p154 = scmp.ne.s32.totalorder %s146, %s149
    %p155 = scmp.eq.s32.totalorder %s20, 0
    %p156 = por %p154, %p155
    %p157 = scmp.ne.s32.totalorder %s146, %s149
    %p158 = scmp.eq.s32.totalorder %s25, 1
    %p159 = por %p157, %p158
    %p160 = scmp.ne.s32.totalorder %s149, %s150
    %p161 = scmp.eq.s32.totalorder %s25, 0
    %p162 = por %p160, %p161
    %p163 = scmp.ne.s32.totalorder %s149, %s150
    %p164 = scmp.eq.s32.totalorder %s26, 1
    %p165 = por %p163, %p164
    %p167 = scmp.ne.s32.totalorder %s150, %s166
    %p168 = scmp.eq.s32.totalorder %s26, 0
    %p169 = por %p167, %p168
    %s170 = ssub.s32 %s28, %s35
    %p171 = scmp.eq.s32.totalorder %s170, 0
    %s173 = sadd.s32 %s172, 1
    %s174 = scalar_select %p171, %s172, %s173
    %p177 = pneg %p171
    %p178 = scmp.eq.s32.totalorder %s20, 1
    %p179 = por %p177, %p178
    %p180 = scmp.ne.s32.totalorder %s172, %s175
    %p181 = scmp.eq.s32.totalorder %s20, 0
    %p182 = por %p180, %p181
    %p183 = scmp.ne.s32.totalorder %s172, %s175
    %p184 = scmp.eq.s32.totalorder %s25, 1
    %p185 = por %p183, %p184
    %p186 = scmp.ne.s32.totalorder %s175, %s176
    %p187 = scmp.eq.s32.totalorder %s25, 0
    %p188 = por %p186, %p187
    %p189 = scmp.ne.s32.totalorder %s175, %s176
    %p190 = scmp.eq.s32.totalorder %s26, 1
    %p191 = por %p189, %p190
    %p193 = scmp.ne.s32.totalorder %s176, %s192
    %p194 = scmp.eq.s32.totalorder %s26, 0
    %p195 = por %p193, %p194
    %s196 = ssub.s32 %s28, %s35
    %p197 = scmp.eq.s32.totalorder %s196, 0
    %s199 = sadd.s32 %s198, 1
    %s200 = scalar_select %p197, %s198, %s199
    %p203 = pneg %p197
    %p204 = scmp.eq.s32.totalorder %s20, 1
    %p205 = por %p203, %p204
    %p206 = scmp.ne.s32.totalorder %s198, %s201
    %p207 = scmp.eq.s32.totalorder %s20, 0
    %p208 = por %p206, %p207
    %p209 = scmp.ne.s32.totalorder %s198, %s201
    %p210 = scmp.eq.s32.totalorder %s25, 1
    %p211 = por %p209, %p210
    %p212 = scmp.ne.s32.totalorder %s201, %s202
    %p213 = scmp.eq.s32.totalorder %s25, 0
    %p214 = por %p212, %p213
    %p215 = scmp.ne.s32.totalorder %s201, %s202
    %p216 = scmp.eq.s32.totalorder %s26, 1
    %p217 = por %p215, %p216
    %p219 = scmp.ne.s32.totalorder %s202, %s218
    %p220 = scmp.eq.s32.totalorder %s26, 0
    %p221 = por %p219, %p220
    %s222 = ssub.s32 %s28, %s35
    %p223 = scmp.eq.s32.totalorder %s222, 0
    %s225 = sadd.s32 %s224, 1
    %s226 = scalar_select %p223, %s224, %s225
    %p229 = pneg %p223
    %p230 = scmp.eq.s32.totalorder %s20, 1
    %p231 = por %p229, %p230
    %p232 = scmp.ne.s32.totalorder %s224, %s227
    %p233 = scmp.eq.s32.totalorder %s20, 0
    %p234 = por %p232, %p233
    %p235 = scmp.ne.s32.totalorder %s224, %s227
    %p236 = scmp.eq.s32.totalorder %s25, 1
    %p237 = por %p235, %p236
    %p238 = scmp.ne.s32.totalorder %s227, %s228
    %p239 = scmp.eq.s32.totalorder %s25, 0
    %p240 = por %p238, %p239
    %p241 = scmp.ne.s32.totalorder %s227, %s228
    %p242 = scmp.eq.s32.totalorder %s26, 1
    %p243 = por %p241, %p242
    %p245 = scmp.ne.s32.totalorder %s228, %s244
    %p246 = scmp.eq.s32.totalorder %s26, 0
    %p247 = por %p245, %p246
    %s248 = ssub.s32 %s28, %s35
    %p249 = scmp.eq.s32.totalorder %s248, 0
    %s251 = sadd.s32 %s250, 1
    %s252 = scalar_select %p249, %s250, %s251
    %p255 = pneg %p249
    %p256 = scmp.eq.s32.totalorder %s20, 1
    %p257 = por %p255, %p256
    %p258 = scmp.ne.s32.totalorder %s250, %s253
    %p259 = scmp.eq.s32.totalorder %s20, 0
    %p260 = por %p258, %p259
    %p261 = scmp.ne.s32.totalorder %s250, %s253
    %p262 = scmp.eq.s32.totalorder %s25, 1
    %p263 = por %p261, %p262
    %p264 = scmp.ne.s32.totalorder %s253, %s254
    %p265 = scmp.eq.s32.totalorder %s25, 0
    %p266 = por %p264, %p265
    %p267 = scmp.ne.s32.totalorder %s253, %s254
    %p268 = scmp.eq.s32.totalorder %s26, 1
    %p269 = por %p267, %p268
    %p271 = scmp.ne.s32.totalorder %s254, %s270
    %p272 = scmp.eq.s32.totalorder %s26, 0
    %p273 = por %p271, %p272
    %s274 = ssub.s32 %s28, %s35
    %p275 = scmp.eq.s32.totalorder %s274, 0
    %s277 = sadd.s32 %s276, 1
    %s278 = scalar_select %p275, %s276, %s277
    %p281 = pneg %p275
    %p282 = scmp.eq.s32.totalorder %s20, 1
    %p283 = por %p281, %p282
    %p284 = scmp.ne.s32.totalorder %s276, %s279
    %p285 = scmp.eq.s32.totalorder %s20, 0
    %p286 = por %p284, %p285
    %p287 = scmp.ne.s32.totalorder %s276, %s279
    %p288 = scmp.eq.s32.totalorder %s25, 1
    %p289 = por %p287, %p288
    %p290 = scmp.ne.s32.totalorder %s279, %s280
    %p291 = scmp.eq.s32.totalorder %s25, 0
    %p292 = por %p290, %p291
    %p293 = scmp.ne.s32.totalorder %s279, %s280
    %p294 = scmp.eq.s32.totalorder %s26, 1
    %p295 = por %p293, %p294
    %p297 = scmp.ne.s32.totalorder %s280, %s296
    %p298 = scmp.eq.s32.totalorder %s26, 0
    %p299 = por %p297, %p298
    %s300 = ssub.s32 %s28, %s35
    %p301 = scmp.eq.s32.totalorder %s300, 0
    %s303 = sadd.s32 %s302, 1
    %s304 = scalar_select %p301, %s302, %s303
    %p307 = pneg %p301
    %p308 = scmp.eq.s32.totalorder %s20, 1
    %p309 = por %p307, %p308
    %p310 = scmp.ne.s32.totalorder %s302, %s305
    %p311 = scmp.eq.s32.totalorder %s20, 0
    %p312 = por %p310, %p311
    %p313 = scmp.ne.s32.totalorder %s302, %s305
    %p314 = scmp.eq.s32.totalorder %s25, 1
    %p315 = por %p313, %p314
    %p316 = scmp.ne.s32.totalorder %s305, %s306
    %p317 = scmp.eq.s32.totalorder %s25, 0
    %p318 = por %p316, %p317
    %p319 = scmp.ne.s32.totalorder %s305, %s306
    %p320 = scmp.eq.s32.totalorder %s26, 1
    %p321 = por %p319, %p320
    %p323 = scmp.ne.s32.totalorder %s306, %s322
    %p324 = scmp.eq.s32.totalorder %s26, 0
    %p325 = por %p323, %p324
    %s326 = ssub.s32 %s28, %s35
    %p327 = scmp.eq.s32.totalorder %s326, 0
    %s329 = sadd.s32 %s328, 1
    %s330 = scalar_select %p327, %s328, %s329
    %p333 = pneg %p327
    %p334 = scmp.eq.s32.totalorder %s20, 1
    %p335 = por %p333, %p334
    %p336 = scmp.ne.s32.totalorder %s328, %s331
    %p337 = scmp.eq.s32.totalorder %s20, 0
    %p338 = por %p336, %p337
    %p339 = scmp.ne.s32.totalorder %s328, %s331
    %p340 = scmp.eq.s32.totalorder %s25, 1
    %p341 = por %p339, %p340
    %p342 = scmp.ne.s32.totalorder %s331, %s332
    %p343 = scmp.eq.s32.totalorder %s25, 0
    %p344 = por %p342, %p343
    %p345 = scmp.ne.s32.totalorder %s331, %s332
    %p346 = scmp.eq.s32.totalorder %s26, 1
    %p347 = por %p345, %p346
    %p349 = scmp.ne.s32.totalorder %s332, %s348
    %p350 = scmp.eq.s32.totalorder %s26, 0
    %p351 = por %p349, %p350
    %s352 = ssub.s32 %s28, %s35
    %p353 = scmp.eq.s32.totalorder %s352, 0
    %s355 = sadd.s32 %s354, 1
    %s356 = scalar_select %p353, %s354, %s355
    %p359 = pneg %p353
    %p360 = scmp.eq.s32.totalorder %s20, 1
    %p361 = por %p359, %p360
    %p362 = scmp.ne.s32.totalorder %s354, %s357
    %p363 = scmp.eq.s32.totalorder %s20, 0
    %p364 = por %p362, %p363
    %p365 = scmp.ne.s32.totalorder %s354, %s357
    %p366 = scmp.eq.s32.totalorder %s25, 1
    %p367 = por %p365, %p366
    %p368 = scmp.ne.s32.totalorder %s357, %s358
    %p369 = scmp.eq.s32.totalorder %s25, 0
    %p370 = por %p368, %p369
    %p371 = scmp.ne.s32.totalorder %s357, %s358
    %p372 = scmp.eq.s32.totalorder %s26, 1
    %p373 = por %p371, %p372
    %p375 = scmp.ne.s32.totalorder %s358, %s374
    %p376 = scmp.eq.s32.totalorder %s26, 0
    %p377 = por %p375, %p376
    %s378 = ssub.s32 %s28, %s35
    %p379 = scmp.eq.s32.totalorder %s378, 0
    %s381 = sadd.s32 %s380, 1
    %s382 = scalar_select %p379, %s380, %s381
    %p385 = pneg %p379
    %p386 = scmp.eq.s32.totalorder %s20, 1
    %p387 = por %p385, %p386
    %p388 = scmp.ne.s32.totalorder %s380, %s383
    %p389 = scmp.eq.s32.totalorder %s20, 0
    %p390 = por %p388, %p389
    %p391 = scmp.ne.s32.totalorder %s380, %s383
    %p392 = scmp.eq.s32.totalorder %s25, 1
    %p393 = por %p391, %p392
    %p394 = scmp.ne.s32.totalorder %s383, %s384
    %p395 = scmp.eq.s32.totalorder %s25, 0
    %p396 = por %p394, %p395
    %p397 = scmp.ne.s32.totalorder %s383, %s384
    %p398 = scmp.eq.s32.totalorder %s26, 1
    %p399 = por %p397, %p398
    %p401 = scmp.ne.s32.totalorder %s384, %s400
    %p402 = scmp.eq.s32.totalorder %s26, 0
    %p403 = por %p401, %p402
    %s404 = ssub.s32 %s27, %s39
    %p405 = scmp.eq.s32.totalorder %s404, 0
    %s407 = sadd.s32 %s406, 1
    %s408 = scalar_select %p405, %s406, %s407
    %p411 = pneg %p405
    %p412 = scmp.eq.s32.totalorder %s20, 1
    %p413 = por %p411, %p412
    %p414 = scmp.ne.s32.totalorder %s406, %s409
    %p415 = scmp.eq.s32.totalorder %s20, 0
    %p416 = por %p414, %p415
    %p417 = scmp.ne.s32.totalorder %s406, %s409
    %p418 = scmp.eq.s32.totalorder %s25, 1
    %p419 = por %p417, %p418
    %p420 = scmp.ne.s32.totalorder %s409, %s410
    %p421 = scmp.eq.s32.totalorder %s25, 0
    %p422 = por %p420, %p421
    %p423 = scmp.ne.s32.totalorder %s409, %s410
    %p424 = scmp.eq.s32.totalorder %s26, 1
    %p425 = por %p423, %p424
    %p427 = scmp.ne.s32.totalorder %s410, %s426
    %p428 = scmp.eq.s32.totalorder %s26, 0
    %p429 = por %p427, %p428
    %p430 = scmp.le.s32.totalorder 1, %s20
    %p431 = scmp.lt.s32.totalorder %s20, 3
    %p432 = pnand %p430, %p431
    %p433 = pneg %p432
    // Predicated region
    $region9: #{transformer_enc_forward.1} parent=5 // pred_check
      _
    $region10: #{transformer_enc_forward.1} parent=5 // pred_check_branch
      %435 = sbr.rel (%p432) target = $region12
    $region11: #{transformer_enc_forward.1} parent=5 // pred_region
      %s436 = ssub.s32 %s20, 1
      // Predicated region
      $region13: #{transformer_enc_forward.1} parent=11 // pred_check
        %p437 = pneg %p58
      $region14: #{transformer_enc_forward.1} parent=11 // pred_check_branch
        %439 = sbr.rel (%p437) target = $region16
      $region15: #{transformer_enc_forward.1} parent=11 // pred_region
        %s440 = smul.u32 2, %s29
        %p441 = scmp.lt.s32.totalorder %s440, 1
        %s442 = scalar_select %p441, %s440, 1
        %s443 = smul.addr %s442, 8
        %s444 = scalar_lea.vmem %s0, %s443
        %s445 = smul.u32 2, %s29
      $region16: #{transformer_enc_forward.1} parent=11 // pred_fallthru
        _
      // Predicated region
      $region17: #{transformer_enc_forward.1} parent=11 // pred_check
        %p446 = pneg %p84
      $region18: #{transformer_enc_forward.1} parent=11 // pred_check_branch
        %448 = sbr.rel (%p446) target = $region20
      $region19: #{transformer_enc_forward.1} parent=11 // pred_region
        %s449 = smul.u32 2, %s29
        %p450 = scmp.lt.s32.totalorder %s449, 1
        %s451 = scalar_select %p450, %s449, 1
        %s452 = smul.addr %s451, 8
        %s453 = scalar_lea.vmem %s1, %s452
        %s454 = smul.u32 2, %s29
      $region20: #{transformer_enc_forward.1} parent=11 // pred_fallthru
        _
    $region12: #{transformer_enc_forward.1} parent=5 // pred_fallthru
      _
    %p455 = scmp.lt.s32.totalorder %s20, 2
    // Predicated region
    $region21: #{transformer_enc_forward.1} parent=5 // pred_check
      %p456 = pneg %p455
    $region22: #{transformer_enc_forward.1} parent=5 // pred_check_branch
      %458 = sbr.rel (%p456) target = $region24
    $region23: #{transformer_enc_forward.1} parent=5 // pred_region
      // Predicated region
      $region25: #{transformer_enc_forward.1} parent=23 // pred_check
        %p459 = pneg %p104
      $region26: #{transformer_enc_forward.1} parent=23 // pred_check_branch
        %461 = sbr.rel (%p459) target = $region28
      $region27: #{transformer_enc_forward.1} parent=23 // pred_region
        %p462 = scmp.lt.s32.totalorder %s28, 1
        %s463 = scalar_select %p462, %s28, 1
        %s464 = smul.addr %s463, 4
        %s465 = smul.addr %s464, 4
        %s466 = scalar_lea.vmem %s2, %s465
      $region28: #{transformer_enc_forward.1} parent=23 // pred_fallthru
        _
      // Predicated region
      $region29: #{transformer_enc_forward.1} parent=23 // pred_check
        %p467 = pneg %p130
      $region30: #{transformer_enc_forward.1} parent=23 // pred_check_branch
        %469 = sbr.rel (%p467) target = $region32
      $region31: #{transformer_enc_forward.1} parent=23 // pred_region
        %p470 = scmp.lt.s32.totalorder %s28, 1
        %s471 = scalar_select %p470, %s28, 1
        %s472 = scalar_lea.vmem %s3, %s471
      $region32: #{transformer_enc_forward.1} parent=23 // pred_fallthru
        _
      // Predicated region
      $region33: #{transformer_enc_forward.1} parent=23 // pred_check
        %p473 = pneg %p156
      $region34: #{transformer_enc_forward.1} parent=23 // pred_check_branch
        %475 = sbr.rel (%p473) target = $region36
      $region35: #{transformer_enc_forward.1} parent=23 // pred_region
        %p476 = scmp.lt.s32.totalorder %s28, 1
        %s477 = scalar_select %p476, %s28, 1
        %s478 = smul.addr %s477, 4
        %s479 = smul.addr %s478, 4
        %s480 = scalar_lea.vmem %s4, %s479
      $region36: #{transformer_enc_forward.1} parent=23 // pred_fallthru
        _
      // Predicated region
      $region37: #{transformer_enc_forward.1} parent=23 // pred_check
        %p481 = pneg %p182
      $region38: #{transformer_enc_forward.1} parent=23 // pred_check_branch
        %483 = sbr.rel (%p481) target = $region40
      $region39: #{transformer_enc_forward.1} parent=23 // pred_region
        %p484 = scmp.lt.s32.totalorder %s28, 1
        %s485 = scalar_select %p484, %s28, 1
        %s486 = scalar_lea.vmem %s5, %s485
      $region40: #{transformer_enc_forward.1} parent=23 // pred_fallthru
        _
      // Predicated region
      $region41: #{transformer_enc_forward.1} parent=23 // pred_check
        %p487 = pneg %p208
      $region42: #{transformer_enc_forward.1} parent=23 // pred_check_branch
        %489 = sbr.rel (%p487) target = $region44
      $region43: #{transformer_enc_forward.1} parent=23 // pred_region
        %p490 = scmp.lt.s32.totalorder %s28, 1
        %s491 = scalar_select %p490, %s28, 1
        %s492 = scalar_lea.vmem %s6, %s491
      $region44: #{transformer_enc_forward.1} parent=23 // pred_fallthru
        _
      // Predicated region
      $region45: #{transformer_enc_forward.1} parent=23 // pred_check
        %p493 = pneg %p234
      $region46: #{transformer_enc_forward.1} parent=23 // pred_check_branch
        %495 = sbr.rel (%p493) target = $region48
      $region47: #{transformer_enc_forward.1} parent=23 // pred_region
        %p496 = scmp.lt.s32.totalorder %s28, 1
        %s497 = scalar_select %p496, %s28, 1
        %s498 = scalar_lea.vmem %s7, %s497
      $region48: #{transformer_enc_forward.1} parent=23 // pred_fallthru
        _
      // Predicated region
      $region49: #{transformer_enc_forward.1} parent=23 // pred_check
        %p499 = pneg %p260
      $region50: #{transformer_enc_forward.1} parent=23 // pred_check_branch
        %501 = sbr.rel (%p499) target = $region52
      $region51: #{transformer_enc_forward.1} parent=23 // pred_region
        %p502 = scmp.lt.s32.totalorder %s28, 1
        %s503 = scalar_select %p502, %s28, 1
        %s504 = smul.addr %s503, 4
        %s505 = smul.addr %s504, 4
        %s506 = scalar_lea.vmem %s8, %s505
      $region52: #{transformer_enc_forward.1} parent=23 // pred_fallthru
        _
      // Predicated region
      $region53: #{transformer_enc_forward.1} parent=23 // pred_check
        %p507 = pneg %p286
      $region54: #{transformer_enc_forward.1} parent=23 // pred_check_branch
        %509 = sbr.rel (%p507) target = $region56
      $region55: #{transformer_enc_forward.1} parent=23 // pred_region
        %p510 = scmp.lt.s32.totalorder %s28, 1
        %s511 = scalar_select %p510, %s28, 1
        %s512 = scalar_lea.vmem %s9, %s511
      $region56: #{transformer_enc_forward.1} parent=23 // pred_fallthru
        _
      // Predicated region
      $region57: #{transformer_enc_forward.1} parent=23 // pred_check
        %p513 = pneg %p312
      $region58: #{transformer_enc_forward.1} parent=23 // pred_check_branch
        %515 = sbr.rel (%p513) target = $region60
      $region59: #{transformer_enc_forward.1} parent=23 // pred_region
        %p516 = scmp.lt.s32.totalorder %s28, 1
        %s517 = scalar_select %p516, %s28, 1
        %s518 = smul.addr %s517, 8
        %s519 = smul.addr %s518, 4
        %s520 = scalar_lea.vmem %s10, %s519
      $region60: #{transformer_enc_forward.1} parent=23 // pred_fallthru
        _
      // Predicated region
      $region61: #{transformer_enc_forward.1} parent=23 // pred_check
        %p521 = pneg %p338
      $region62: #{transformer_enc_forward.1} parent=23 // pred_check_branch
        %523 = sbr.rel (%p521) target = $region64
      $region63: #{transformer_enc_forward.1} parent=23 // pred_region
        %p524 = scmp.lt.s32.totalorder %s28, 1
        %s525 = scalar_select %p524, %s28, 1
        %s526 = scalar_lea.vmem %s11, %s525
      $region64: #{transformer_enc_forward.1} parent=23 // pred_fallthru
        _
      // Predicated region
      $region65: #{transformer_enc_forward.1} parent=23 // pred_check
        %p527 = pneg %p364
      $region66: #{transformer_enc_forward.1} parent=23 // pred_check_branch
        %529 = sbr.rel (%p527) target = $region68
      $region67: #{transformer_enc_forward.1} parent=23 // pred_region
        %p530 = scmp.lt.s32.totalorder %s28, 1
        %s531 = scalar_select %p530, %s28, 1
        %s532 = scalar_lea.vmem %s12, %s531
      $region68: #{transformer_enc_forward.1} parent=23 // pred_fallthru
        _
      // Predicated region
      $region69: #{transformer_enc_forward.1} parent=23 // pred_check
        %p533 = pneg %p390
      $region70: #{transformer_enc_forward.1} parent=23 // pred_check_branch
        %535 = sbr.rel (%p533) target = $region72
      $region71: #{transformer_enc_forward.1} parent=23 // pred_region
        %p536 = scmp.lt.s32.totalorder %s28, 1
        %s537 = scalar_select %p536, %s28, 1
        %s538 = scalar_lea.vmem %s13, %s537
      $region72: #{transformer_enc_forward.1} parent=23 // pred_fallthru
        _
    $region24: #{transformer_enc_forward.1} parent=5 // pred_fallthru
      _
    %p539 = scmp.le.s32.totalorder 1, %s20
    %p540 = scmp.lt.s32.totalorder %s20, 3
    %p541 = pnand %p539, %p540
    %p542 = pneg %p541
    // Predicated region
    $region73: #{transformer_enc_forward.1} parent=5 // pred_check
      _
    $region74: #{transformer_enc_forward.1} parent=5 // pred_check_branch
      %544 = sbr.rel (%p541) target = $region76
    $region75: #{transformer_enc_forward.1} parent=5 // pred_region
      %s545 = ssub.s32 %s20, 1
      %s546 = smul.u32 2, %s29
      %p547 = scmp.lt.s32.totalorder %s546, 1
      %s548 = scalar_select %p547, %s546, 1
      %s549 = smul.addr %s548, 8
      %s550 = scalar_lea.vmem %s0, %s549
      %p551 = pneg %p58
      %p552 = pneg %p55
      %s553 = smul.u32 2, %s29
      %p554 = scmp.lt.s32.totalorder %s553, 1
      %s555 = scalar_select %p554, %s553, 1
      %s556 = smul.addr %s555, 8
      %s557 = scalar_lea.vmem %s1, %s556
      %p558 = pneg %p84
      %p559 = pneg %p81
      %p560 = scmp.lt.s32.totalorder %s30, 1
      %s561 = scalar_select %p560, %s30, 1
      %s562 = smul.addr %s561, 4
      %s563 = smul.addr %s562, 4
      %s564 = scalar_lea.vmem %s2, %s563
      %p565 = pneg %p110
      %p566 = pneg %p107
      %p567 = scmp.lt.s32.totalorder %s30, 1
      %s568 = scalar_select %p567, %s30, 1
      %s569 = scalar_lea.vmem %s3, %s568
      %p570 = pneg %p136
      %p571 = pneg %p133
      %p572 = scmp.lt.s32.totalorder %s30, 1
      %s573 = scalar_select %p572, %s30, 1
      %s574 = smul.addr %s573, 4
      %s575 = smul.addr %s574, 4
      %s576 = scalar_lea.vmem %s4, %s575
      %p577 = pneg %p162
      %p578 = pneg %p159
      %p579 = scmp.lt.s32.totalorder %s30, 1
      %s580 = scalar_select %p579, %s30, 1
      %s581 = scalar_lea.vmem %s5, %s580
      %p582 = pneg %p188
      %p583 = pneg %p185
      %p584 = scmp.lt.s32.totalorder %s30, 1
      %s585 = scalar_select %p584, %s30, 1
      %s586 = scalar_lea.vmem %s6, %s585
      %p587 = pneg %p214
      %p588 = pneg %p211
      %p589 = scmp.lt.s32.totalorder %s30, 1
      %s590 = scalar_select %p589, %s30, 1
      %s591 = scalar_lea.vmem %s7, %s590
      %p592 = pneg %p240
      %p593 = pneg %p237
      %p594 = scmp.lt.s32.totalorder %s30, 1
      %s595 = scalar_select %p594, %s30, 1
      %s596 = smul.addr %s595, 4
      %s597 = smul.addr %s596, 4
      %s598 = scalar_lea.vmem %s8, %s597
      %p599 = pneg %p266
      %p600 = pneg %p263
      %p601 = scmp.lt.s32.totalorder %s30, 1
      %s602 = scalar_select %p601, %s30, 1
      %s603 = scalar_lea.vmem %s9, %s602
      %p604 = pneg %p292
      %p605 = pneg %p289
      %p606 = scmp.lt.s32.totalorder %s30, 1
      %s607 = scalar_select %p606, %s30, 1
      %s608 = smul.addr %s607, 8
      %s609 = smul.addr %s608, 4
      %s610 = scalar_lea.vmem %s10, %s609
      %p611 = pneg %p318
      %p612 = pneg %p315
      %p613 = scmp.lt.s32.totalorder %s30, 1
      %s614 = scalar_select %p613, %s30, 1
      %s615 = scalar_lea.vmem %s11, %s614
      %p616 = pneg %p344
      %p617 = pneg %p341
      %p618 = scmp.lt.s32.totalorder %s30, 1
      %s619 = scalar_select %p618, %s30, 1
      %s620 = scalar_lea.vmem %s12, %s619
      %p621 = pneg %p370
      %p622 = pneg %p367
      %p623 = scmp.lt.s32.totalorder %s30, 1
      %s624 = scalar_select %p623, %s30, 1
      %s625 = scalar_lea.vmem %s13, %s624
      %p626 = pneg %p396
      %p627 = pneg %p393
      %p628 = pneg %p422
      %p629 = pneg %p419
      %s630 = smul.u32 2, %s29
      %p631 = scmp.lt.s32.totalorder %s630, 1
      %s632 = scalar_select %p631, %s630, 1
      %s633 = smul.addr %s632, 8
      %s634 = scalar_lea.vmem %s14, %s633
      %s635 = smul.u32 2, %s29
      %p636 = scmp.lt.s32.totalorder %s635, 1
      %s637 = scalar_select %p636, %s635, 1
      %s638 = smul.addr %s637, 8
      %s639 = scalar_lea.vmem %s0, %s638
      %s640 = smul.u32 2, %s29
      %s641 = smul.u32 2, %s29
      %p642 = scmp.lt.s32.totalorder %s641, 1
      %s643 = scalar_select %p642, %s641, 1
      %s644 = smul.addr %s643, 8
      %s645 = scalar_lea.vmem %s1, %s644
      %s646 = smul.u32 2, %s29
      %p647 = scmp.lt.s32.totalorder %s30, 1
      %s648 = scalar_select %p647, %s30, 1
      %s649 = smul.addr %s648, 4
      %s650 = smul.addr %s649, 4
      %s651 = scalar_lea.vmem %s2, %s650
      %p652 = scmp.lt.s32.totalorder %s30, 1
      %s653 = scalar_select %p652, %s30, 1
      %s654 = scalar_lea.vmem %s3, %s653
      %p655 = scmp.lt.s32.totalorder %s30, 1
      %s656 = scalar_select %p655, %s30, 1
      %s657 = smul.addr %s656, 4
      %s658 = smul.addr %s657, 4
      %s659 = scalar_lea.vmem %s4, %s658
      %p660 = scmp.lt.s32.totalorder %s30, 1
      %s661 = scalar_select %p660, %s30, 1
      %s662 = scalar_lea.vmem %s5, %s661
      %p663 = scmp.lt.s32.totalorder %s30, 1
      %s664 = scalar_select %p663, %s30, 1
      %s665 = scalar_lea.vmem %s6, %s664
      %p666 = scmp.lt.s32.totalorder %s30, 1
      %s667 = scalar_select %p666, %s30, 1
      %s668 = scalar_lea.vmem %s7, %s667
      %p669 = scmp.lt.s32.totalorder %s30, 1
      %s670 = scalar_select %p669, %s30, 1
      %s671 = smul.addr %s670, 4
      %s672 = smul.addr %s671, 4
      %s673 = scalar_lea.vmem %s8, %s672
      %p674 = scmp.lt.s32.totalorder %s30, 1
      %s675 = scalar_select %p674, %s30, 1
      %s676 = scalar_lea.vmem %s9, %s675
      %p677 = scmp.lt.s32.totalorder %s30, 1
      %s678 = scalar_select %p677, %s30, 1
      %s679 = smul.addr %s678, 8
      %s680 = smul.addr %s679, 4
      %s681 = scalar_lea.vmem %s10, %s680
      %p682 = scmp.lt.s32.totalorder %s30, 1
      %s683 = scalar_select %p682, %s30, 1
      %s684 = scalar_lea.vmem %s11, %s683
      %p685 = scmp.lt.s32.totalorder %s30, 1
      %s686 = scalar_select %p685, %s30, 1
      %s687 = scalar_lea.vmem %s12, %s686
      %p688 = scmp.lt.s32.totalorder %s30, 1
      %s689 = scalar_select %p688, %s30, 1
      %s690 = scalar_lea.vmem %s13, %s689
      %s691 = smul.u32 2, %s29
      %p692 = scmp.lt.s32.totalorder %s691, 1
      %s693 = scalar_select %p692, %s691, 1
      %s694 = smul.addr %s693, 8
      %s695 = scalar_lea.vmem %s14, %s694
      %s696 = smul.u32 2, %s29
      %p698 = scmp.eq.s32.totalorder %s30, 0
      // Predicated region
      $region77: #{transformer_enc_forward.1} parent=75 // pred_check
        %p699 = pneg %p698
      $region78: #{transformer_enc_forward.1} parent=75 // pred_check_branch
        %701 = sbr.rel (%p699) target = $region80
      $region79: #{transformer_enc_forward.1} parent=75 // pred_region
        %v702 = vld [vmem:[%s639] sm:$0xff]
        %v703 = vld [vmem:[%s639 + $0x8] sm:$0xff]
        %vm704 = vcmask 261120
        %705 = vst.msk [vmem:[#allocation2] sm:$0xff] %vm704, %v702
        %706 = vst.msk [vmem:[#allocation2 + $0x8] sm:$0xff] %vm704, %v703
      $region80: #{transformer_enc_forward.1} parent=75 // pred_fallthru
        _
      %v707 = vld [vmem:[#allocation2] sm:$0xff]
      %v708 = vld [vmem:[#allocation2 + $0x8] sm:$0xff]
      %v709 = vpack.c.bf16 %v708, %v707
      %v710 = vld [vmem:[%s651] sm:$0xf]
      %v711 = vld [vmem:[%s651 + $0x4] sm:$0xf]
      %v712 = vld [vmem:[%s651 + $0x8] sm:$0xf]
      %v713 = vld [vmem:[%s651 + $0xc] sm:$0xf]
      %v714 = vld [vmem:[%s654] sm:$0x1]
      %v716 = vlaneseq
      %v717 = vshrl.u32 %v716, 7
      %v718 = vsub.s32 0, %v717
      %v719 = vrot.slane %v714, %v718
      %v725 = vunpack.c.l.b16 %v710
      %v726 = vunpack.c.l.b16 %v711
      %v727 = vunpack.c.l.b16 %v712
      %v728 = vunpack.c.l.b16 %v713
      %v729 = vpack.c.b16 %v726, %v725
      %v730 = vpack.c.b16 %v728, %v727
      %vm733 = vcmask 261120
      %v735 = vsel %vm733, %v709, 0
      %737 = vmatprep.subr.bf16.mxu0 0
      %738 = vmatpush1.bf16.msra.mxu0 %v729
      %739 = vmatprep.subr.bf16.mxu0 0
      %740 = vmatpush1.bf16.msra.mxu0 %v730
      %741 = vmatprep.subr.bf16.mxu0 0
      %742 = vmatpush1.bf16.msra.mxu0 0
      %743 = vmatprep.subr.bf16.mxu0 0
      %744 = vmatpush1.bf16.msra.mxu0 0
      %745 = vmatprep.subr.bf16.mxu0 0
      %746 = vmatpush1.bf16.msra.mxu0 0
      %747 = vmatprep.subr.bf16.mxu0 0
      %748 = vmatpush1.bf16.msra.mxu0 0
      %749 = vmatprep.subr.bf16.mxu0 0
      %750 = vmatpush1.bf16.msra.mxu0 0
      %751 = vmatprep.subr.bf16.mxu0 0
      %752 = vmatpush1.bf16.msra.mxu0 0
      %753 = vmatprep.subr.bf16.mxu0 0
      %754 = vmatpush1.bf16.msra.mxu0 0
      %755 = vmatprep.subr.bf16.mxu0 0
      %756 = vmatpush1.bf16.msra.mxu0 0
      %757 = vmatprep.subr.bf16.mxu0 0
      %758 = vmatpush1.bf16.msra.mxu0 0
      %759 = vmatprep.subr.bf16.mxu0 0
      %760 = vmatpush1.bf16.msra.mxu0 0
      %761 = vmatprep.subr.bf16.mxu0 0
      %762 = vmatpush1.bf16.msra.mxu0 0
      %763 = vmatprep.subr.bf16.mxu0 0
      %764 = vmatpush1.bf16.msra.mxu0 0
      %765 = vmatprep.subr.bf16.mxu0 0
      %766 = vmatpush1.bf16.msra.mxu0 0
      %767 = vmatprep.subr.bf16.mxu0 0
      %768 = vmatpush1.bf16.msra.mxu0 0
      %769 = vmatprep.mubr.bf16.mxu0 0
      %770 = vmatmul.mubr.bf16.gmra.mrb[0].mxu0 %v735
      %v771 = vpop.f32.mrb[0].mxu0
      %v772 = vadd.f32 %v719, %v771
      %v773 = vpop.f32.mrb[0].mxu0
      %v774 = vpop.f32.mrb[0].mxu0
      %v775 = vadd.f32 %v719, %v774
      %v776 = vpop.f32.mrb[0].mxu0
      %777 = vdwg.mxu0
      %780 = vrot.lane.b32.xlu0 %v772, 120
      %v781 = vpop.permute.xlu0 %780
      %782 = vrot.lane.b32.xlu0 %v775, 120
      %v783 = vpop.permute.xlu0 %782
      %786 = vrot.lane.b32.xlu0 %v772, 112
      %v787 = vpop.permute.xlu0 %786
      %788 = vrot.lane.b32.xlu0 %v775, 112
      %v789 = vpop.permute.xlu0 %788
      %792 = vrot.lane.b32.xlu0 %v772, 104
      %v793 = vpop.permute.xlu0 %792
      %794 = vrot.lane.b32.xlu0 %v775, 104
      %v795 = vpop.permute.xlu0 %794
      %v798 = vcombine.low %v772, %v787
      %v799 = vcombine.high %v772, %v787
      %v801 = vunpack.c.l.s4 1983009808
      %v802 = vunpack.c.0.s8 %v801
      %v803 = vlaneseq
      %v804 = vshrl.u32 %v803, 7
      %v805 = vsub.s32 %v802, %v804
      %v806 = vrot.slane %v798, %v805
      %v808 = vunpack.c.l.s4 1983009808
      %v809 = vunpack.c.0.s8 %v808
      %v810 = vlaneseq
      %v811 = vshrl.u32 %v810, 7
      %v812 = vsub.s32 %v809, %v811
      %v813 = vrot.slane %v799, %v812
      %v814 = vcombine.low %v781, %v793
      %v815 = vcombine.high %v781, %v793
      %v817 = vunpack.c.l.s4 1983009808
      %v818 = vunpack.c.0.s8 %v817
      %v819 = vlaneseq
      %v820 = vshrl.u32 %v819, 7
      %v821 = vsub.s32 %v818, %v820
      %v822 = vrot.slane %v814, %v821
      %v824 = vunpack.c.l.s4 1983009808
      %v825 = vunpack.c.0.s8 %v824
      %v826 = vlaneseq
      %v827 = vshrl.u32 %v826, 7
      %v828 = vsub.s32 %v825, %v827
      %v829 = vrot.slane %v815, %v828
      %v830 = vcombine.low %v806, %v822
      %v831 = vcombine.high %v806, %v822
      %v833 = vunpack.c.l.s4 1934713408
      %v834 = vunpack.c.0.s8 %v833
      %v835 = vlaneseq
      %v836 = vshrl.u32 %v835, 7
      %v837 = vsub.s32 %v834, %v836
      %v838 = vrot.slane %v830, %v837
      %v840 = vunpack.c.l.s4 1934713408
      %v841 = vunpack.c.0.s8 %v840
      %v842 = vlaneseq
      %v843 = vshrl.u32 %v842, 7
      %v844 = vsub.s32 %v841, %v843
      %v845 = vrot.slane %v831, %v844
      %v846 = vcombine.low %v813, %v829
      %v847 = vcombine.high %v813, %v829
      %v849 = vunpack.c.l.s4 1934713408
      %v850 = vunpack.c.0.s8 %v849
      %v851 = vlaneseq
      %v852 = vshrl.u32 %v851, 7
      %v853 = vsub.s32 %v850, %v852
      %v854 = vrot.slane %v846, %v853
      %v856 = vunpack.c.l.s4 1934713408
      %v857 = vunpack.c.0.s8 %v856
      %v858 = vlaneseq
      %v859 = vshrl.u32 %v858, 7
      %v860 = vsub.s32 %v857, %v859
      %v861 = vrot.slane %v847, %v860
      %v862 = vcombine.high %v838, 0.0
      %v863 = vcombine.high %v845, 0.0
      %v864 = vcombine.high %v854, 0.0
      %v865 = vcombine.high %v861, 0.0
      %v866 = vcombine.low %v775, %v789
      %v867 = vcombine.high %v775, %v789
      %v869 = vunpack.c.l.s4 1983009808
      %v870 = vunpack.c.0.s8 %v869
      %v871 = vlaneseq
      %v872 = vshrl.u32 %v871, 7
      %v873 = vsub.s32 %v870, %v872
      %v874 = vrot.slane %v866, %v873
      %v876 = vunpack.c.l.s4 1983009808
      %v877 = vunpack.c.0.s8 %v876
      %v878 = vlaneseq
      %v879 = vshrl.u32 %v878, 7
      %v880 = vsub.s32 %v877, %v879
      %v881 = vrot.slane %v867, %v880
      %v882 = vcombine.low %v783, %v795
      %v883 = vcombine.high %v783, %v795
      %v885 = vunpack.c.l.s4 1983009808
      %v886 = vunpack.c.0.s8 %v885
      %v887 = vlaneseq
      %v888 = vshrl.u32 %v887, 7
      %v889 = vsub.s32 %v886, %v888
      %v890 = vrot.slane %v882, %v889
      %v892 = vunpack.c.l.s4 1983009808
      %v893 = vunpack.c.0.s8 %v892
      %v894 = vlaneseq
      %v895 = vshrl.u32 %v894, 7
      %v896 = vsub.s32 %v893, %v895
      %v897 = vrot.slane %v883, %v896
      %v898 = vcombine.low %v874, %v890
      %v899 = vcombine.high %v874, %v890
      %v901 = vunpack.c.l.s4 1934713408
      %v902 = vunpack.c.0.s8 %v901
      %v903 = vlaneseq
      %v904 = vshrl.u32 %v903, 7
      %v905 = vsub.s32 %v902, %v904
      %v906 = vrot.slane %v898, %v905
      %v908 = vunpack.c.l.s4 1934713408
      %v909 = vunpack.c.0.s8 %v908
      %v910 = vlaneseq
      %v911 = vshrl.u32 %v910, 7
      %v912 = vsub.s32 %v909, %v911
      %v913 = vrot.slane %v899, %v912
      %v914 = vcombine.low %v881, %v897
      %v915 = vcombine.high %v881, %v897
      %v917 = vunpack.c.l.s4 1934713408
      %v918 = vunpack.c.0.s8 %v917
      %v919 = vlaneseq
      %v920 = vshrl.u32 %v919, 7
      %v921 = vsub.s32 %v918, %v920
      %v922 = vrot.slane %v914, %v921
      %v924 = vunpack.c.l.s4 1934713408
      %v925 = vunpack.c.0.s8 %v924
      %v926 = vlaneseq
      %v927 = vshrl.u32 %v926, 7
      %v928 = vsub.s32 %v925, %v927
      %v929 = vrot.slane %v915, %v928
      %v930 = vcombine.high %v906, 0.0
      %v931 = vcombine.high %v913, 0.0
      %v932 = vcombine.high %v922, 0.0
      %v933 = vcombine.high %v929, 0.0
      %v934 = vcombine.low %v838, %v845
      %v936 = vunpack.c.l.s4 1983009808
      %v937 = vunpack.c.0.s8 %v936
      %v938 = vlaneseq
      %v939 = vshrl.u32 %v938, 7
      %v940 = vsub.s32 %v937, %v939
      %v941 = vrot.slane %v934, %v940
      %v942 = vcombine.low %v862, %v863
      %v944 = vunpack.c.l.s4 1983009808
      %v945 = vunpack.c.0.s8 %v944
      %v946 = vlaneseq
      %v947 = vshrl.u32 %v946, 7
      %v948 = vsub.s32 %v945, %v947
      %v949 = vrot.slane %v942, %v948
      %v950 = vcombine.low %v854, %v861
      %v952 = vunpack.c.l.s4 1983009808
      %v953 = vunpack.c.0.s8 %v952
      %v954 = vlaneseq
      %v955 = vshrl.u32 %v954, 7
      %v956 = vsub.s32 %v953, %v955
      %v957 = vrot.slane %v950, %v956
      %v958 = vcombine.low %v864, %v865
      %v960 = vunpack.c.l.s4 1983009808
      %v961 = vunpack.c.0.s8 %v960
      %v962 = vlaneseq
      %v963 = vshrl.u32 %v962, 7
      %v964 = vsub.s32 %v961, %v963
      %v965 = vrot.slane %v958, %v964
      %v966 = vcombine.low %v941, %v949
      %v967 = vcombine.high %v941, %v949
      %v969 = vunpack.c.l.s4 1934713408
      %v970 = vunpack.c.0.s8 %v969
      %v971 = vlaneseq
      %v972 = vshrl.u32 %v971, 7
      %v973 = vsub.s32 %v970, %v972
      %v974 = vrot.slane %v966, %v973
      %v976 = vunpack.c.l.s4 1934713408
      %v977 = vunpack.c.0.s8 %v976
      %v978 = vlaneseq
      %v979 = vshrl.u32 %v978, 7
      %v980 = vsub.s32 %v977, %v979
      %v981 = vrot.slane %v967, %v980
      %v982 = vcombine.low %v957, %v965
      %v983 = vcombine.high %v957, %v965
      %v985 = vunpack.c.l.s4 1934713408
      %v986 = vunpack.c.0.s8 %v985
      %v987 = vlaneseq
      %v988 = vshrl.u32 %v987, 7
      %v989 = vsub.s32 %v986, %v988
      %v990 = vrot.slane %v982, %v989
      %v992 = vunpack.c.l.s4 1934713408
      %v993 = vunpack.c.0.s8 %v992
      %v994 = vlaneseq
      %v995 = vshrl.u32 %v994, 7
      %v996 = vsub.s32 %v993, %v995
      %v997 = vrot.slane %v983, %v996
      %v998 = vcombine.low %v974, %v990
      %v999 = vcombine.high %v974, %v990
      %v1000 = vcombine.low %v981, %v997
      %v1001 = vcombine.high %v981, %v997
      %v1002 = vcombine.low %v906, %v913
      %v1004 = vunpack.c.l.s4 1983009808
      %v1005 = vunpack.c.0.s8 %v1004
      %v1006 = vlaneseq
      %v1007 = vshrl.u32 %v1006, 7
      %v1008 = vsub.s32 %v1005, %v1007
      %v1009 = vrot.slane %v1002, %v1008
      %v1010 = vcombine.low %v930, %v931
      %v1012 = vunpack.c.l.s4 1983009808
      %v1013 = vunpack.c.0.s8 %v1012
      %v1014 = vlaneseq
      %v1015 = vshrl.u32 %v1014, 7
      %v1016 = vsub.s32 %v1013, %v1015
      %v1017 = vrot.slane %v1010, %v1016
      %v1018 = vcombine.low %v922, %v929
      %v1020 = vunpack.c.l.s4 1983009808
      %v1021 = vunpack.c.0.s8 %v1020
      %v1022 = vlaneseq
      %v1023 = vshrl.u32 %v1022, 7
      %v1024 = vsub.s32 %v1021, %v1023
      %v1025 = vrot.slane %v1018, %v1024
      %v1026 = vcombine.low %v932, %v933
      %v1028 = vunpack.c.l.s4 1983009808
      %v1029 = vunpack.c.0.s8 %v1028
      %v1030 = vlaneseq
      %v1031 = vshrl.u32 %v1030, 7
      %v1032 = vsub.s32 %v1029, %v1031
      %v1033 = vrot.slane %v1026, %v1032
      %v1034 = vcombine.low %v1009, %v1017
      %v1035 = vcombine.high %v1009, %v1017
      %v1037 = vunpack.c.l.s4 1934713408
      %v1038 = vunpack.c.0.s8 %v1037
      %v1039 = vlaneseq
      %v1040 = vshrl.u32 %v1039, 7
      %v1041 = vsub.s32 %v1038, %v1040
      %v1042 = vrot.slane %v1034, %v1041
      %v1044 = vunpack.c.l.s4 1934713408
      %v1045 = vunpack.c.0.s8 %v1044
      %v1046 = vlaneseq
      %v1047 = vshrl.u32 %v1046, 7
      %v1048 = vsub.s32 %v1045, %v1047
      %v1049 = vrot.slane %v1035, %v1048
      %v1050 = vcombine.low %v1025, %v1033
      %v1051 = vcombine.high %v1025, %v1033
      %v1053 = vunpack.c.l.s4 1934713408
      %v1054 = vunpack.c.0.s8 %v1053
      %v1055 = vlaneseq
      %v1056 = vshrl.u32 %v1055, 7
      %v1057 = vsub.s32 %v1054, %v1056
      %v1058 = vrot.slane %v1050, %v1057
      %v1060 = vunpack.c.l.s4 1934713408
      %v1061 = vunpack.c.0.s8 %v1060
      %v1062 = vlaneseq
      %v1063 = vshrl.u32 %v1062, 7
      %v1064 = vsub.s32 %v1061, %v1063
      %v1065 = vrot.slane %v1051, %v1064
      %v1066 = vcombine.low %v1042, %v1058
      %v1067 = vcombine.high %v1042, %v1058
      %v1068 = vcombine.low %v1049, %v1065
      %v1069 = vcombine.high %v1049, %v1065
      %v1070 = vpack.c.bf16 %v998, %v998
      %v1071 = vpack.c.bf16 %v999, %v999
      %v1072 = vpack.c.bf16 %v1000, %v1000
      %v1073 = vpack.c.bf16 %v1001, %v1001
      %v1074 = vpack.c.bf16 %v1066, %v1066
      %v1075 = vpack.c.bf16 %v1067, %v1067
      %v1076 = vpack.c.bf16 %v1068, %v1068
      %v1077 = vpack.c.bf16 %v1069, %v1069
      %1078 = vrot.lane.b32.xlu0 %v772, 96
      %v1079 = vpop.permute.xlu0 %1078
      %1080 = vrot.lane.b32.xlu0 %v775, 96
      %v1081 = vpop.permute.xlu0 %1080
      %1082 = vrot.lane.b32.xlu0 %v781, 96
      %v1083 = vpop.permute.xlu0 %1082
      %1084 = vrot.lane.b32.xlu0 %v783, 96
      %v1085 = vpop.permute.xlu0 %1084
      %1086 = vrot.lane.b32.xlu0 %v787, 96
      %v1087 = vpop.permute.xlu0 %1086
      %1088 = vrot.lane.b32.xlu0 %v789, 96
      %v1089 = vpop.permute.xlu0 %1088
      %1090 = vrot.lane.b32.xlu0 %v793, 96
      %v1091 = vpop.permute.xlu0 %1090
      %1092 = vrot.lane.b32.xlu0 %v795, 96
      %v1093 = vpop.permute.xlu0 %1092
      %v1102 = vcombine.low %v1079, %v1087
      %v1103 = vcombine.high %v1079, %v1087
      %v1105 = vunpack.c.l.s4 1983009808
      %v1106 = vunpack.c.0.s8 %v1105
      %v1107 = vlaneseq
      %v1108 = vshrl.u32 %v1107, 7
      %v1109 = vsub.s32 %v1106, %v1108
      %v1110 = vrot.slane %v1102, %v1109
      %v1112 = vunpack.c.l.s4 1983009808
      %v1113 = vunpack.c.0.s8 %v1112
      %v1114 = vlaneseq
      %v1115 = vshrl.u32 %v1114, 7
      %v1116 = vsub.s32 %v1113, %v1115
      %v1117 = vrot.slane %v1103, %v1116
      %v1118 = vcombine.low %v1083, %v1091
      %v1119 = vcombine.high %v1083, %v1091
      %v1121 = vunpack.c.l.s4 1983009808
      %v1122 = vunpack.c.0.s8 %v1121
      %v1123 = vlaneseq
      %v1124 = vshrl.u32 %v1123, 7
      %v1125 = vsub.s32 %v1122, %v1124
      %v1126 = vrot.slane %v1118, %v1125
      %v1128 = vunpack.c.l.s4 1983009808
      %v1129 = vunpack.c.0.s8 %v1128
      %v1130 = vlaneseq
      %v1131 = vshrl.u32 %v1130, 7
      %v1132 = vsub.s32 %v1129, %v1131
      %v1133 = vrot.slane %v1119, %v1132
      %v1134 = vcombine.low %v1110, %v1126
      %v1135 = vcombine.high %v1110, %v1126
      %v1137 = vunpack.c.l.s4 1934713408
      %v1138 = vunpack.c.0.s8 %v1137
      %v1139 = vlaneseq
      %v1140 = vshrl.u32 %v1139, 7
      %v1141 = vsub.s32 %v1138, %v1140
      %v1142 = vrot.slane %v1134, %v1141
      %v1144 = vunpack.c.l.s4 1934713408
      %v1145 = vunpack.c.0.s8 %v1144
      %v1146 = vlaneseq
      %v1147 = vshrl.u32 %v1146, 7
      %v1148 = vsub.s32 %v1145, %v1147
      %v1149 = vrot.slane %v1135, %v1148
      %v1150 = vcombine.low %v1117, %v1133
      %v1151 = vcombine.high %v1117, %v1133
      %v1153 = vunpack.c.l.s4 1934713408
      %v1154 = vunpack.c.0.s8 %v1153
      %v1155 = vlaneseq
      %v1156 = vshrl.u32 %v1155, 7
      %v1157 = vsub.s32 %v1154, %v1156
      %v1158 = vrot.slane %v1150, %v1157
      %v1160 = vunpack.c.l.s4 1934713408
      %v1161 = vunpack.c.0.s8 %v1160
      %v1162 = vlaneseq
      %v1163 = vshrl.u32 %v1162, 7
      %v1164 = vsub.s32 %v1161, %v1163
      %v1165 = vrot.slane %v1151, %v1164
      %v1166 = vcombine.high %v1142, 0.0
      %v1167 = vcombine.high %v1149, 0.0
      %v1168 = vcombine.high %v1158, 0.0
      %v1169 = vcombine.high %v1165, 0.0
      %v1170 = vcombine.low %v1081, %v1089
      %v1171 = vcombine.high %v1081, %v1089
      %v1173 = vunpack.c.l.s4 1983009808
      %v1174 = vunpack.c.0.s8 %v1173
      %v1175 = vlaneseq
      %v1176 = vshrl.u32 %v1175, 7
      %v1177 = vsub.s32 %v1174, %v1176
      %v1178 = vrot.slane %v1170, %v1177
      %v1180 = vunpack.c.l.s4 1983009808
      %v1181 = vunpack.c.0.s8 %v1180
      %v1182 = vlaneseq
      %v1183 = vshrl.u32 %v1182, 7
      %v1184 = vsub.s32 %v1181, %v1183
      %v1185 = vrot.slane %v1171, %v1184
      %v1186 = vcombine.low %v1085, %v1093
      %v1187 = vcombine.high %v1085, %v1093
      %v1189 = vunpack.c.l.s4 1983009808
      %v1190 = vunpack.c.0.s8 %v1189
      %v1191 = vlaneseq
      %v1192 = vshrl.u32 %v1191, 7
      %v1193 = vsub.s32 %v1190, %v1192
      %v1194 = vrot.slane %v1186, %v1193
      %v1196 = vunpack.c.l.s4 1983009808
      %v1197 = vunpack.c.0.s8 %v1196
      %v1198 = vlaneseq
      %v1199 = vshrl.u32 %v1198, 7
      %v1200 = vsub.s32 %v1197, %v1199
      %v1201 = vrot.slane %v1187, %v1200
      %v1202 = vcombine.low %v1178, %v1194
      %v1203 = vcombine.high %v1178, %v1194
      %v1205 = vunpack.c.l.s4 1934713408
      %v1206 = vunpack.c.0.s8 %v1205
      %v1207 = vlaneseq
      %v1208 = vshrl.u32 %v1207, 7
      %v1209 = vsub.s32 %v1206, %v1208
      %v1210 = vrot.slane %v1202, %v1209
      %v1212 = vunpack.c.l.s4 1934713408
      %v1213 = vunpack.c.0.s8 %v1212
      %v1214 = vlaneseq
      %v1215 = vshrl.u32 %v1214, 7
      %v1216 = vsub.s32 %v1213, %v1215
      %v1217 = vrot.slane %v1203, %v1216
      %v1218 = vcombine.low %v1185, %v1201
      %v1219 = vcombine.high %v1185, %v1201
      %v1221 = vunpack.c.l.s4 1934713408
      %v1222 = vunpack.c.0.s8 %v1221
      %v1223 = vlaneseq
      %v1224 = vshrl.u32 %v1223, 7
      %v1225 = vsub.s32 %v1222, %v1224
      %v1226 = vrot.slane %v1218, %v1225
      %v1228 = vunpack.c.l.s4 1934713408
      %v1229 = vunpack.c.0.s8 %v1228
      %v1230 = vlaneseq
      %v1231 = vshrl.u32 %v1230, 7
      %v1232 = vsub.s32 %v1229, %v1231
      %v1233 = vrot.slane %v1219, %v1232
      %v1234 = vcombine.high %v1210, 0.0
      %v1235 = vcombine.high %v1217, 0.0
      %v1236 = vcombine.high %v1226, 0.0
      %v1237 = vcombine.high %v1233, 0.0
      %v1238 = vcombine.low %v1142, %v1149
      %v1240 = vunpack.c.l.s4 1983009808
      %v1241 = vunpack.c.0.s8 %v1240
      %v1242 = vlaneseq
      %v1243 = vshrl.u32 %v1242, 7
      %v1244 = vsub.s32 %v1241, %v1243
      %v1245 = vrot.slane %v1238, %v1244
      %v1246 = vcombine.low %v1166, %v1167
      %v1248 = vunpack.c.l.s4 1983009808
      %v1249 = vunpack.c.0.s8 %v1248
      %v1250 = vlaneseq
      %v1251 = vshrl.u32 %v1250, 7
      %v1252 = vsub.s32 %v1249, %v1251
      %v1253 = vrot.slane %v1246, %v1252
      %v1254 = vcombine.low %v1158, %v1165
      %v1256 = vunpack.c.l.s4 1983009808
      %v1257 = vunpack.c.0.s8 %v1256
      %v1258 = vlaneseq
      %v1259 = vshrl.u32 %v1258, 7
      %v1260 = vsub.s32 %v1257, %v1259
      %v1261 = vrot.slane %v1254, %v1260
      %v1262 = vcombine.low %v1168, %v1169
      %v1264 = vunpack.c.l.s4 1983009808
      %v1265 = vunpack.c.0.s8 %v1264
      %v1266 = vlaneseq
      %v1267 = vshrl.u32 %v1266, 7
      %v1268 = vsub.s32 %v1265, %v1267
      %v1269 = vrot.slane %v1262, %v1268
      %v1270 = vcombine.low %v1245, %v1253
      %v1271 = vcombine.high %v1245, %v1253
      %v1273 = vunpack.c.l.s4 1934713408
      %v1274 = vunpack.c.0.s8 %v1273
      %v1275 = vlaneseq
      %v1276 = vshrl.u32 %v1275, 7
      %v1277 = vsub.s32 %v1274, %v1276
      %v1278 = vrot.slane %v1270, %v1277
      %v1280 = vunpack.c.l.s4 1934713408
      %v1281 = vunpack.c.0.s8 %v1280
      %v1282 = vlaneseq
      %v1283 = vshrl.u32 %v1282, 7
      %v1284 = vsub.s32 %v1281, %v1283
      %v1285 = vrot.slane %v1271, %v1284
      %v1286 = vcombine.low %v1261, %v1269
      %v1287 = vcombine.high %v1261, %v1269
      %v1289 = vunpack.c.l.s4 1934713408
      %v1290 = vunpack.c.0.s8 %v1289
      %v1291 = vlaneseq
      %v1292 = vshrl.u32 %v1291, 7
      %v1293 = vsub.s32 %v1290, %v1292
      %v1294 = vrot.slane %v1286, %v1293
      %v1296 = vunpack.c.l.s4 1934713408
      %v1297 = vunpack.c.0.s8 %v1296
      %v1298 = vlaneseq
      %v1299 = vshrl.u32 %v1298, 7
      %v1300 = vsub.s32 %v1297, %v1299
      %v1301 = vrot.slane %v1287, %v1300
      %v1302 = vcombine.low %v1278, %v1294
      %v1303 = vcombine.high %v1278, %v1294
      %v1304 = vcombine.low %v1285, %v1301
      %v1305 = vcombine.high %v1285, %v1301
      %v1306 = vcombine.low %v1210, %v1217
      %v1308 = vunpack.c.l.s4 1983009808
      %v1309 = vunpack.c.0.s8 %v1308
      %v1310 = vlaneseq
      %v1311 = vshrl.u32 %v1310, 7
      %v1312 = vsub.s32 %v1309, %v1311
      %v1313 = vrot.slane %v1306, %v1312
      %v1314 = vcombine.low %v1234, %v1235
      %v1316 = vunpack.c.l.s4 1983009808
      %v1317 = vunpack.c.0.s8 %v1316
      %v1318 = vlaneseq
      %v1319 = vshrl.u32 %v1318, 7
      %v1320 = vsub.s32 %v1317, %v1319
      %v1321 = vrot.slane %v1314, %v1320
      %v1322 = vcombine.low %v1226, %v1233
      %v1324 = vunpack.c.l.s4 1983009808
      %v1325 = vunpack.c.0.s8 %v1324
      %v1326 = vlaneseq
      %v1327 = vshrl.u32 %v1326, 7
      %v1328 = vsub.s32 %v1325, %v1327
      %v1329 = vrot.slane %v1322, %v1328
      %v1330 = vcombine.low %v1236, %v1237
      %v1332 = vunpack.c.l.s4 1983009808
      %v1333 = vunpack.c.0.s8 %v1332
      %v1334 = vlaneseq
      %v1335 = vshrl.u32 %v1334, 7
      %v1336 = vsub.s32 %v1333, %v1335
      %v1337 = vrot.slane %v1330, %v1336
      %v1338 = vcombine.low %v1313, %v1321
      %v1339 = vcombine.high %v1313, %v1321
      %v1341 = vunpack.c.l.s4 1934713408
      %v1342 = vunpack.c.0.s8 %v1341
      %v1343 = vlaneseq
      %v1344 = vshrl.u32 %v1343, 7
      %v1345 = vsub.s32 %v1342, %v1344
      %v1346 = vrot.slane %v1338, %v1345
      %v1348 = vunpack.c.l.s4 1934713408
      %v1349 = vunpack.c.0.s8 %v1348
      %v1350 = vlaneseq
      %v1351 = vshrl.u32 %v1350, 7
      %v1352 = vsub.s32 %v1349, %v1351
      %v1353 = vrot.slane %v1339, %v1352
      %v1354 = vcombine.low %v1329, %v1337
      %v1355 = vcombine.high %v1329, %v1337
      %v1357 = vunpack.c.l.s4 1934713408
      %v1358 = vunpack.c.0.s8 %v1357
      %v1359 = vlaneseq
      %v1360 = vshrl.u32 %v1359, 7
      %v1361 = vsub.s32 %v1358, %v1360
      %v1362 = vrot.slane %v1354, %v1361
      %v1364 = vunpack.c.l.s4 1934713408
      %v1365 = vunpack.c.0.s8 %v1364
      %v1366 = vlaneseq
      %v1367 = vshrl.u32 %v1366, 7
      %v1368 = vsub.s32 %v1365, %v1367
      %v1369 = vrot.slane %v1355, %v1368
      %v1370 = vcombine.low %v1346, %v1362
      %v1371 = vcombine.high %v1346, %v1362
      %v1372 = vcombine.low %v1353, %v1369
      %v1373 = vcombine.high %v1353, %v1369
      %v1374 = vpack.c.bf16 %v1302, %v1302
      %v1375 = vpack.c.bf16 %v1303, %v1303
      %v1376 = vpack.c.bf16 %v1304, %v1304
      %v1377 = vpack.c.bf16 %v1305, %v1305
      %v1378 = vpack.c.bf16 %v1370, %v1370
      %v1379 = vpack.c.bf16 %v1371, %v1371
      %v1380 = vpack.c.bf16 %v1372, %v1372
      %v1381 = vpack.c.bf16 %v1373, %v1373
      %1382 = vrot.lane.b32.xlu0 %v772, 64
      %v1383 = vpop.permute.xlu0 %1382
      %1384 = vrot.lane.b32.xlu0 %v775, 64
      %v1385 = vpop.permute.xlu0 %1384
      %1386 = vrot.lane.b32.xlu0 %v781, 64
      %v1387 = vpop.permute.xlu0 %1386
      %1388 = vrot.lane.b32.xlu0 %v783, 64
      %v1389 = vpop.permute.xlu0 %1388
      %1390 = vrot.lane.b32.xlu0 %v787, 64
      %v1391 = vpop.permute.xlu0 %1390
      %1392 = vrot.lane.b32.xlu0 %v789, 64
      %v1393 = vpop.permute.xlu0 %1392
      %1394 = vrot.lane.b32.xlu0 %v793, 64
      %v1395 = vpop.permute.xlu0 %1394
      %1396 = vrot.lane.b32.xlu0 %v795, 64
      %v1397 = vpop.permute.xlu0 %1396
      %v1406 = vcombine.low %v1383, %v1391
      %v1407 = vcombine.high %v1383, %v1391
      %v1409 = vunpack.c.l.s4 1983009808
      %v1410 = vunpack.c.0.s8 %v1409
      %v1411 = vlaneseq
      %v1412 = vshrl.u32 %v1411, 7
      %v1413 = vsub.s32 %v1410, %v1412
      %v1414 = vrot.slane %v1406, %v1413
      %v1416 = vunpack.c.l.s4 1983009808
      %v1417 = vunpack.c.0.s8 %v1416
      %v1418 = vlaneseq
      %v1419 = vshrl.u32 %v1418, 7
      %v1420 = vsub.s32 %v1417, %v1419
      %v1421 = vrot.slane %v1407, %v1420
      %v1422 = vcombine.low %v1387, %v1395
      %v1423 = vcombine.high %v1387, %v1395
      %v1425 = vunpack.c.l.s4 1983009808
      %v1426 = vunpack.c.0.s8 %v1425
      %v1427 = vlaneseq
      %v1428 = vshrl.u32 %v1427, 7
      %v1429 = vsub.s32 %v1426, %v1428
      %v1430 = vrot.slane %v1422, %v1429
      %v1432 = vunpack.c.l.s4 1983009808
      %v1433 = vunpack.c.0.s8 %v1432
      %v1434 = vlaneseq
      %v1435 = vshrl.u32 %v1434, 7
      %v1436 = vsub.s32 %v1433, %v1435
      %v1437 = vrot.slane %v1423, %v1436
      %v1438 = vcombine.low %v1414, %v1430
      %v1439 = vcombine.high %v1414, %v1430
      %v1441 = vunpack.c.l.s4 1934713408
      %v1442 = vunpack.c.0.s8 %v1441
      %v1443 = vlaneseq
      %v1444 = vshrl.u32 %v1443, 7
      %v1445 = vsub.s32 %v1442, %v1444
      %v1446 = vrot.slane %v1438, %v1445
      %v1448 = vunpack.c.l.s4 1934713408
      %v1449 = vunpack.c.0.s8 %v1448
      %v1450 = vlaneseq
      %v1451 = vshrl.u32 %v1450, 7
      %v1452 = vsub.s32 %v1449, %v1451
      %v1453 = vrot.slane %v1439, %v1452
      %v1454 = vcombine.low %v1421, %v1437
      %v1455 = vcombine.high %v1421, %v1437
      %v1457 = vunpack.c.l.s4 1934713408
      %v1458 = vunpack.c.0.s8 %v1457
      %v1459 = vlaneseq
      %v1460 = vshrl.u32 %v1459, 7
      %v1461 = vsub.s32 %v1458, %v1460
      %v1462 = vrot.slane %v1454, %v1461
      %v1464 = vunpack.c.l.s4 1934713408
      %v1465 = vunpack.c.0.s8 %v1464
      %v1466 = vlaneseq
      %v1467 = vshrl.u32 %v1466, 7
      %v1468 = vsub.s32 %v1465, %v1467
      %v1469 = vrot.slane %v1455, %v1468
      %v1470 = vcombine.high %v1446, 0.0
      %v1471 = vcombine.high %v1453, 0.0
      %v1472 = vcombine.high %v1462, 0.0
      %v1473 = vcombine.high %v1469, 0.0
      %v1474 = vcombine.low %v1385, %v1393
      %v1475 = vcombine.high %v1385, %v1393
      %v1477 = vunpack.c.l.s4 1983009808
      %v1478 = vunpack.c.0.s8 %v1477
      %v1479 = vlaneseq
      %v1480 = vshrl.u32 %v1479, 7
      %v1481 = vsub.s32 %v1478, %v1480
      %v1482 = vrot.slane %v1474, %v1481
      %v1484 = vunpack.c.l.s4 1983009808
      %v1485 = vunpack.c.0.s8 %v1484
      %v1486 = vlaneseq
      %v1487 = vshrl.u32 %v1486, 7
      %v1488 = vsub.s32 %v1485, %v1487
      %v1489 = vrot.slane %v1475, %v1488
      %v1490 = vcombine.low %v1389, %v1397
      %v1491 = vcombine.high %v1389, %v1397
      %v1493 = vunpack.c.l.s4 1983009808
      %v1494 = vunpack.c.0.s8 %v1493
      %v1495 = vlaneseq
      %v1496 = vshrl.u32 %v1495, 7
      %v1497 = vsub.s32 %v1494, %v1496
      %v1498 = vrot.slane %v1490, %v1497
      %v1500 = vunpack.c.l.s4 1983009808
      %v1501 = vunpack.c.0.s8 %v1500
      %v1502 = vlaneseq
      %v1503 = vshrl.u32 %v1502, 7
      %v1504 = vsub.s32 %v1501, %v1503
      %v1505 = vrot.slane %v1491, %v1504
      %v1506 = vcombine.low %v1482, %v1498
      %v1507 = vcombine.high %v1482, %v1498
      %v1509 = vunpack.c.l.s4 1934713408
      %v1510 = vunpack.c.0.s8 %v1509
      %v1511 = vlaneseq
      %v1512 = vshrl.u32 %v1511, 7
      %v1513 = vsub.s32 %v1510, %v1512
      %v1514 = vrot.slane %v1506, %v1513
      %v1516 = vunpack.c.l.s4 1934713408
      %v1517 = vunpack.c.0.s8 %v1516
      %v1518 = vlaneseq
      %v1519 = vshrl.u32 %v1518, 7
      %v1520 = vsub.s32 %v1517, %v1519
      %v1521 = vrot.slane %v1507, %v1520
      %v1522 = vcombine.low %v1489, %v1505
      %v1523 = vcombine.high %v1489, %v1505
      %v1525 = vunpack.c.l.s4 1934713408
      %v1526 = vunpack.c.0.s8 %v1525
      %v1527 = vlaneseq
      %v1528 = vshrl.u32 %v1527, 7
      %v1529 = vsub.s32 %v1526, %v1528
      %v1530 = vrot.slane %v1522, %v1529
      %v1532 = vunpack.c.l.s4 1934713408
      %v1533 = vunpack.c.0.s8 %v1532
      %v1534 = vlaneseq
      %v1535 = vshrl.u32 %v1534, 7
      %v1536 = vsub.s32 %v1533, %v1535
      %v1537 = vrot.slane %v1523, %v1536
      %v1538 = vcombine.high %v1514, 0.0
      %v1539 = vcombine.high %v1521, 0.0
      %v1540 = vcombine.high %v1530, 0.0
      %v1541 = vcombine.high %v1537, 0.0
      %v1542 = vcombine.low %v1446, %v1453
      %v1544 = vunpack.c.l.s4 1983009808
      %v1545 = vunpack.c.0.s8 %v1544
      %v1546 = vlaneseq
      %v1547 = vshrl.u32 %v1546, 7
      %v1548 = vsub.s32 %v1545, %v1547
      %v1549 = vrot.slane %v1542, %v1548
      %v1550 = vcombine.low %v1470, %v1471
      %v1552 = vunpack.c.l.s4 1983009808
      %v1553 = vunpack.c.0.s8 %v1552
      %v1554 = vlaneseq
      %v1555 = vshrl.u32 %v1554, 7
      %v1556 = vsub.s32 %v1553, %v1555
      %v1557 = vrot.slane %v1550, %v1556
      %v1558 = vcombine.low %v1462, %v1469
      %v1560 = vunpack.c.l.s4 1983009808
      %v1561 = vunpack.c.0.s8 %v1560
      %v1562 = vlaneseq
      %v1563 = vshrl.u32 %v1562, 7
      %v1564 = vsub.s32 %v1561, %v1563
      %v1565 = vrot.slane %v1558, %v1564
      %v1566 = vcombine.low %v1472, %v1473
      %v1568 = vunpack.c.l.s4 1983009808
      %v1569 = vunpack.c.0.s8 %v1568
      %v1570 = vlaneseq
      %v1571 = vshrl.u32 %v1570, 7
      %v1572 = vsub.s32 %v1569, %v1571
      %v1573 = vrot.slane %v1566, %v1572
      %v1574 = vcombine.low %v1549, %v1557
      %v1575 = vcombine.high %v1549, %v1557
      %v1577 = vunpack.c.l.s4 1934713408
      %v1578 = vunpack.c.0.s8 %v1577
      %v1579 = vlaneseq
      %v1580 = vshrl.u32 %v1579, 7
      %v1581 = vsub.s32 %v1578, %v1580
      %v1582 = vrot.slane %v1574, %v1581
      %v1584 = vunpack.c.l.s4 1934713408
      %v1585 = vunpack.c.0.s8 %v1584
      %v1586 = vlaneseq
      %v1587 = vshrl.u32 %v1586, 7
      %v1588 = vsub.s32 %v1585, %v1587
      %v1589 = vrot.slane %v1575, %v1588
      %v1590 = vcombine.low %v1565, %v1573
      %v1591 = vcombine.high %v1565, %v1573
      %v1593 = vunpack.c.l.s4 1934713408
      %v1594 = vunpack.c.0.s8 %v1593
      %v1595 = vlaneseq
      %v1596 = vshrl.u32 %v1595, 7
      %v1597 = vsub.s32 %v1594, %v1596
      %v1598 = vrot.slane %v1590, %v1597
      %v1600 = vunpack.c.l.s4 1934713408
      %v1601 = vunpack.c.0.s8 %v1600
      %v1602 = vlaneseq
      %v1603 = vshrl.u32 %v1602, 7
      %v1604 = vsub.s32 %v1601, %v1603
      %v1605 = vrot.slane %v1591, %v1604
      %v1606 = vcombine.low %v1582, %v1598
      %v1607 = vcombine.high %v1582, %v1598
      %v1608 = vcombine.low %v1589, %v1605
      %v1609 = vcombine.high %v1589, %v1605
      %v1610 = vcombine.low %v1514, %v1521
      %v1612 = vunpack.c.l.s4 1983009808
      %v1613 = vunpack.c.0.s8 %v1612
      %v1614 = vlaneseq
      %v1615 = vshrl.u32 %v1614, 7
      %v1616 = vsub.s32 %v1613, %v1615
      %v1617 = vrot.slane %v1610, %v1616
      %v1618 = vcombine.low %v1538, %v1539
      %v1620 = vunpack.c.l.s4 1983009808
      %v1621 = vunpack.c.0.s8 %v1620
      %v1622 = vlaneseq
      %v1623 = vshrl.u32 %v1622, 7
      %v1624 = vsub.s32 %v1621, %v1623
      %v1625 = vrot.slane %v1618, %v1624
      %v1626 = vcombine.low %v1530, %v1537
      %v1628 = vunpack.c.l.s4 1983009808
      %v1629 = vunpack.c.0.s8 %v1628
      %v1630 = vlaneseq
      %v1631 = vshrl.u32 %v1630, 7
      %v1632 = vsub.s32 %v1629, %v1631
      %v1633 = vrot.slane %v1626, %v1632
      %v1634 = vcombine.low %v1540, %v1541
      %v1636 = vunpack.c.l.s4 1983009808
      %v1637 = vunpack.c.0.s8 %v1636
      %v1638 = vlaneseq
      %v1639 = vshrl.u32 %v1638, 7
      %v1640 = vsub.s32 %v1637, %v1639
      %v1641 = vrot.slane %v1634, %v1640
      %v1642 = vcombine.low %v1617, %v1625
      %v1643 = vcombine.high %v1617, %v1625
      %v1645 = vunpack.c.l.s4 1934713408
      %v1646 = vunpack.c.0.s8 %v1645
      %v1647 = vlaneseq
      %v1648 = vshrl.u32 %v1647, 7
      %v1649 = vsub.s32 %v1646, %v1648
      %v1650 = vrot.slane %v1642, %v1649
      %v1652 = vunpack.c.l.s4 1934713408
      %v1653 = vunpack.c.0.s8 %v1652
      %v1654 = vlaneseq
      %v1655 = vshrl.u32 %v1654, 7
      %v1656 = vsub.s32 %v1653, %v1655
      %v1657 = vrot.slane %v1643, %v1656
      %v1658 = vcombine.low %v1633, %v1641
      %v1659 = vcombine.high %v1633, %v1641
      %v1661 = vunpack.c.l.s4 1934713408
      %v1662 = vunpack.c.0.s8 %v1661
      %v1663 = vlaneseq
      %v1664 = vshrl.u32 %v1663, 7
      %v1665 = vsub.s32 %v1662, %v1664
      %v1666 = vrot.slane %v1658, %v1665
      %v1668 = vunpack.c.l.s4 1934713408
      %v1669 = vunpack.c.0.s8 %v1668
      %v1670 = vlaneseq
      %v1671 = vshrl.u32 %v1670, 7
      %v1672 = vsub.s32 %v1669, %v1671
      %v1673 = vrot.slane %v1659, %v1672
      %v1674 = vcombine.low %v1650, %v1666
      %v1675 = vcombine.high %v1650, %v1666
      %v1676 = vcombine.low %v1657, %v1673
      %v1677 = vcombine.high %v1657, %v1673
      %v1678 = vpack.c.bf16 %v1606, %v1606
      %v1679 = vpack.c.bf16 %v1607, %v1607
      %v1680 = vpack.c.bf16 %v1608, %v1608
      %v1681 = vpack.c.bf16 %v1609, %v1609
      %v1682 = vpack.c.bf16 %v1674, %v1674
      %v1683 = vpack.c.bf16 %v1675, %v1675
      %v1684 = vpack.c.bf16 %v1676, %v1676
      %v1685 = vpack.c.bf16 %v1677, %v1677
      %vm1686 = vcmask 64512
      %v1688 = vsel %vm1686, %v1070, 0
      %v1691 = vsel %vm1686, %v1374, 0
      %1693 = vmatprep.subr.bf16.mxu0 0
      %1694 = vmatpush1.bf16.xpose.msra.mxu0 %v1691
      %1695 = vmatprep.subr.bf16.mxu0 0
      %1696 = vmatpush1.bf16.xpose.msra.mxu0 0
      %1697 = vmatprep.subr.bf16.mxu0 0
      %1698 = vmatpush1.bf16.xpose.msra.mxu0 0
      %1699 = vmatprep.subr.bf16.mxu0 0
      %1700 = vmatpush1.bf16.xpose.msra.mxu0 0
      %1701 = vmatprep.subr.bf16.mxu0 0
      %1702 = vmatpush1.bf16.xpose.msra.mxu0 0
      %1703 = vmatprep.subr.bf16.mxu0 0
      %1704 = vmatpush1.bf16.xpose.msra.mxu0 0
      %1705 = vmatprep.subr.bf16.mxu0 0
      %1706 = vmatpush1.bf16.xpose.msra.mxu0 0
      %1707 = vmatprep.subr.bf16.mxu0 0
      %1708 = vmatpush1.bf16.xpose.msra.mxu0 0
      %1709 = vmatprep.subr.bf16.mxu0 0
      %1710 = vmatpush1.bf16.xpose.msra.mxu0 0
      %1711 = vmatprep.subr.bf16.mxu0 0
      %1712 = vmatpush1.bf16.xpose.msra.mxu0 0
      %1713 = vmatprep.subr.bf16.mxu0 0
      %1714 = vmatpush1.bf16.xpose.msra.mxu0 0
      %1715 = vmatprep.subr.bf16.mxu0 0
      %1716 = vmatpush1.bf16.xpose.msra.mxu0 0
      %1717 = vmatprep.subr.bf16.mxu0 0
      %1718 = vmatpush1.bf16.xpose.msra.mxu0 0
      %1719 = vmatprep.subr.bf16.mxu0 0
      %1720 = vmatpush1.bf16.xpose.msra.mxu0 0
      %1721 = vmatprep.subr.bf16.mxu0 0
      %1722 = vmatpush1.bf16.xpose.msra.mxu0 0
      %1723 = vmatprep.subr.bf16.mxu0 0
      %1724 = vmatpush1.bf16.xpose.msra.mxu0 0
      %1725 = vmatprep.mubr.bf16.mxu0 0
      %1726 = vmatmul.mubr.bf16.gmra.mrb[0].mxu0 %v1688
      %v1727 = vpop.f32.mrb[0].mxu0
      %v1728 = vadd.f32 0.0, %v1727
      %v1729 = vpop.f32.mrb[0].mxu0
      %v1730 = vpop.f32.mrb[0].mxu0
      %v1731 = vpop.f32.mrb[0].mxu0
      %1732 = vdwg.mxu0
      %v1734 = vsel %vm1686, %v1071, 0
      %v1737 = vsel %vm1686, %v1375, 0
      %1739 = vmatprep.subr.bf16.mxu0 0
      %1740 = vmatpush1.bf16.xpose.msra.mxu0 %v1737
      %1741 = vmatprep.subr.bf16.mxu0 0
      %1742 = vmatpush1.bf16.xpose.msra.mxu0 0
      %1743 = vmatprep.subr.bf16.mxu0 0
      %1744 = vmatpush1.bf16.xpose.msra.mxu0 0
      %1745 = vmatprep.subr.bf16.mxu0 0
      %1746 = vmatpush1.bf16.xpose.msra.mxu0 0
      %1747 = vmatprep.subr.bf16.mxu0 0
      %1748 = vmatpush1.bf16.xpose.msra.mxu0 0
      %1749 = vmatprep.subr.bf16.mxu0 0
      %1750 = vmatpush1.bf16.xpose.msra.mxu0 0
      %1751 = vmatprep.subr.bf16.mxu0 0
      %1752 = vmatpush1.bf16.xpose.msra.mxu0 0
      %1753 = vmatprep.subr.bf16.mxu0 0
      %1754 = vmatpush1.bf16.xpose.msra.mxu0 0
      %1755 = vmatprep.subr.bf16.mxu0 0
      %1756 = vmatpush1.bf16.xpose.msra.mxu0 0
      %1757 = vmatprep.subr.bf16.mxu0 0
      %1758 = vmatpush1.bf16.xpose.msra.mxu0 0
      %1759 = vmatprep.subr.bf16.mxu0 0
      %1760 = vmatpush1.bf16.xpose.msra.mxu0 0
      %1761 = vmatprep.subr.bf16.mxu0 0
      %1762 = vmatpush1.bf16.xpose.msra.mxu0 0
      %1763 = vmatprep.subr.bf16.mxu0 0
      %1764 = vmatpush1.bf16.xpose.msra.mxu0 0
      %1765 = vmatprep.subr.bf16.mxu0 0
      %1766 = vmatpush1.bf16.xpose.msra.mxu0 0
      %1767 = vmatprep.subr.bf16.mxu0 0
      %1768 = vmatpush1.bf16.xpose.msra.mxu0 0
      %1769 = vmatprep.subr.bf16.mxu0 0
      %1770 = vmatpush1.bf16.xpose.msra.mxu0 0
      %1771 = vmatprep.mubr.bf16.mxu0 0
      %1772 = vmatmul.mubr.bf16.gmra.mrb[0].mxu0 %v1734
      %v1773 = vpop.f32.mrb[0].mxu0
      %v1774 = vadd.f32 0.0, %v1773
      %v1775 = vpop.f32.mrb[0].mxu0
      %v1776 = vpop.f32.mrb[0].mxu0
      %v1777 = vpop.f32.mrb[0].mxu0
      %1778 = vdwg.mxu0
      %v1780 = vsel %vm1686, %v1072, 0
      %v1783 = vsel %vm1686, %v1376, 0
      %1785 = vmatprep.subr.bf16.mxu0 0
      %1786 = vmatpush1.bf16.xpose.msra.mxu0 %v1783
      %1787 = vmatprep.subr.bf16.mxu0 0
      %1788 = vmatpush1.bf16.xpose.msra.mxu0 0
      %1789 = vmatprep.subr.bf16.mxu0 0
      %1790 = vmatpush1.bf16.xpose.msra.mxu0 0
      %1791 = vmatprep.subr.bf16.mxu0 0
      %1792 = vmatpush1.bf16.xpose.msra.mxu0 0
      %1793 = vmatprep.subr.bf16.mxu0 0
      %1794 = vmatpush1.bf16.xpose.msra.mxu0 0
      %1795 = vmatprep.subr.bf16.mxu0 0
      %1796 = vmatpush1.bf16.xpose.msra.mxu0 0
      %1797 = vmatprep.subr.bf16.mxu0 0
      %1798 = vmatpush1.bf16.xpose.msra.mxu0 0
      %1799 = vmatprep.subr.bf16.mxu0 0
      %1800 = vmatpush1.bf16.xpose.msra.mxu0 0
      %1801 = vmatprep.subr.bf16.mxu0 0
      %1802 = vmatpush1.bf16.xpose.msra.mxu0 0
      %1803 = vmatprep.subr.bf16.mxu0 0
      %1804 = vmatpush1.bf16.xpose.msra.mxu0 0
      %1805 = vmatprep.subr.bf16.mxu0 0
      %1806 = vmatpush1.bf16.xpose.msra.mxu0 0
      %1807 = vmatprep.subr.bf16.mxu0 0
      %1808 = vmatpush1.bf16.xpose.msra.mxu0 0
      %1809 = vmatprep.subr.bf16.mxu0 0
      %1810 = vmatpush1.bf16.xpose.msra.mxu0 0
      %1811 = vmatprep.subr.bf16.mxu0 0
      %1812 = vmatpush1.bf16.xpose.msra.mxu0 0
      %1813 = vmatprep.subr.bf16.mxu0 0
      %1814 = vmatpush1.bf16.xpose.msra.mxu0 0
      %1815 = vmatprep.subr.bf16.mxu0 0
      %1816 = vmatpush1.bf16.xpose.msra.mxu0 0
      %1817 = vmatprep.mubr.bf16.mxu0 0
      %1818 = vmatmul.mubr.bf16.gmra.mrb[0].mxu0 %v1780
      %v1819 = vpop.f32.mrb[0].mxu0
      %v1820 = vadd.f32 0.0, %v1819
      %v1821 = vpop.f32.mrb[0].mxu0
      %v1822 = vpop.f32.mrb[0].mxu0
      %v1823 = vpop.f32.mrb[0].mxu0
      %1824 = vdwg.mxu0
      %v1826 = vsel %vm1686, %v1073, 0
      %v1829 = vsel %vm1686, %v1377, 0
      %1831 = vmatprep.subr.bf16.mxu0 0
      %1832 = vmatpush1.bf16.xpose.msra.mxu0 %v1829
      %1833 = vmatprep.subr.bf16.mxu0 0
      %1834 = vmatpush1.bf16.xpose.msra.mxu0 0
      %1835 = vmatprep.subr.bf16.mxu0 0
      %1836 = vmatpush1.bf16.xpose.msra.mxu0 0
      %1837 = vmatprep.subr.bf16.mxu0 0
      %1838 = vmatpush1.bf16.xpose.msra.mxu0 0
      %1839 = vmatprep.subr.bf16.mxu0 0
      %1840 = vmatpush1.bf16.xpose.msra.mxu0 0
      %1841 = vmatprep.subr.bf16.mxu0 0
      %1842 = vmatpush1.bf16.xpose.msra.mxu0 0
      %1843 = vmatprep.subr.bf16.mxu0 0
      %1844 = vmatpush1.bf16.xpose.msra.mxu0 0
      %1845 = vmatprep.subr.bf16.mxu0 0
      %1846 = vmatpush1.bf16.xpose.msra.mxu0 0
      %1847 = vmatprep.subr.bf16.mxu0 0
      %1848 = vmatpush1.bf16.xpose.msra.mxu0 0
      %1849 = vmatprep.subr.bf16.mxu0 0
      %1850 = vmatpush1.bf16.xpose.msra.mxu0 0
      %1851 = vmatprep.subr.bf16.mxu0 0
      %1852 = vmatpush1.bf16.xpose.msra.mxu0 0
      %1853 = vmatprep.subr.bf16.mxu0 0
      %1854 = vmatpush1.bf16.xpose.msra.mxu0 0
      %1855 = vmatprep.subr.bf16.mxu0 0
      %1856 = vmatpush1.bf16.xpose.msra.mxu0 0
      %1857 = vmatprep.subr.bf16.mxu0 0
      %1858 = vmatpush1.bf16.xpose.msra.mxu0 0
      %1859 = vmatprep.subr.bf16.mxu0 0
      %1860 = vmatpush1.bf16.xpose.msra.mxu0 0
      %1861 = vmatprep.subr.bf16.mxu0 0
      %1862 = vmatpush1.bf16.xpose.msra.mxu0 0
      %1863 = vmatprep.mubr.bf16.mxu0 0
      %1864 = vmatmul.mubr.bf16.gmra.mrb[0].mxu0 %v1826
      %v1865 = vpop.f32.mrb[0].mxu0
      %v1866 = vadd.f32 0.0, %v1865
      %v1867 = vpop.f32.mrb[0].mxu0
      %v1868 = vpop.f32.mrb[0].mxu0
      %v1869 = vpop.f32.mrb[0].mxu0
      %1870 = vdwg.mxu0
      %v1872 = vsel %vm1686, %v1074, 0
      %v1875 = vsel %vm1686, %v1378, 0
      %1877 = vmatprep.subr.bf16.mxu0 0
      %1878 = vmatpush1.bf16.xpose.msra.mxu0 %v1875
      %1879 = vmatprep.subr.bf16.mxu0 0
      %1880 = vmatpush1.bf16.xpose.msra.mxu0 0
      %1881 = vmatprep.subr.bf16.mxu0 0
      %1882 = vmatpush1.bf16.xpose.msra.mxu0 0
      %1883 = vmatprep.subr.bf16.mxu0 0
      %1884 = vmatpush1.bf16.xpose.msra.mxu0 0
      %1885 = vmatprep.subr.bf16.mxu0 0
      %1886 = vmatpush1.bf16.xpose.msra.mxu0 0
      %1887 = vmatprep.subr.bf16.mxu0 0
      %1888 = vmatpush1.bf16.xpose.msra.mxu0 0
      %1889 = vmatprep.subr.bf16.mxu0 0
      %1890 = vmatpush1.bf16.xpose.msra.mxu0 0
      %1891 = vmatprep.subr.bf16.mxu0 0
      %1892 = vmatpush1.bf16.xpose.msra.mxu0 0
      %1893 = vmatprep.subr.bf16.mxu0 0
      %1894 = vmatpush1.bf16.xpose.msra.mxu0 0
      %1895 = vmatprep.subr.bf16.mxu0 0
      %1896 = vmatpush1.bf16.xpose.msra.mxu0 0
      %1897 = vmatprep.subr.bf16.mxu0 0
      %1898 = vmatpush1.bf16.xpose.msra.mxu0 0
      %1899 = vmatprep.subr.bf16.mxu0 0
      %1900 = vmatpush1.bf16.xpose.msra.mxu0 0
      %1901 = vmatprep.subr.bf16.mxu0 0
      %1902 = vmatpush1.bf16.xpose.msra.mxu0 0
      %1903 = vmatprep.subr.bf16.mxu0 0
      %1904 = vmatpush1.bf16.xpose.msra.mxu0 0
      %1905 = vmatprep.subr.bf16.mxu0 0
      %1906 = vmatpush1.bf16.xpose.msra.mxu0 0
      %1907 = vmatprep.subr.bf16.mxu0 0
      %1908 = vmatpush1.bf16.xpose.msra.mxu0 0
      %1909 = vmatprep.mubr.bf16.mxu0 0
      %1910 = vmatmul.mubr.bf16.gmra.mrb[0].mxu0 %v1872
      %v1911 = vpop.f32.mrb[0].mxu0
      %v1912 = vadd.f32 0.0, %v1911
      %v1913 = vpop.f32.mrb[0].mxu0
      %v1914 = vpop.f32.mrb[0].mxu0
      %v1915 = vpop.f32.mrb[0].mxu0
      %1916 = vdwg.mxu0
      %v1918 = vsel %vm1686, %v1075, 0
      %v1921 = vsel %vm1686, %v1379, 0
      %1923 = vmatprep.subr.bf16.mxu0 0
      %1924 = vmatpush1.bf16.xpose.msra.mxu0 %v1921
      %1925 = vmatprep.subr.bf16.mxu0 0
      %1926 = vmatpush1.bf16.xpose.msra.mxu0 0
      %1927 = vmatprep.subr.bf16.mxu0 0
      %1928 = vmatpush1.bf16.xpose.msra.mxu0 0
      %1929 = vmatprep.subr.bf16.mxu0 0
      %1930 = vmatpush1.bf16.xpose.msra.mxu0 0
      %1931 = vmatprep.subr.bf16.mxu0 0
      %1932 = vmatpush1.bf16.xpose.msra.mxu0 0
      %1933 = vmatprep.subr.bf16.mxu0 0
      %1934 = vmatpush1.bf16.xpose.msra.mxu0 0
      %1935 = vmatprep.subr.bf16.mxu0 0
      %1936 = vmatpush1.bf16.xpose.msra.mxu0 0
      %1937 = vmatprep.subr.bf16.mxu0 0
      %1938 = vmatpush1.bf16.xpose.msra.mxu0 0
      %1939 = vmatprep.subr.bf16.mxu0 0
      %1940 = vmatpush1.bf16.xpose.msra.mxu0 0
      %1941 = vmatprep.subr.bf16.mxu0 0
      %1942 = vmatpush1.bf16.xpose.msra.mxu0 0
      %1943 = vmatprep.subr.bf16.mxu0 0
      %1944 = vmatpush1.bf16.xpose.msra.mxu0 0
      %1945 = vmatprep.subr.bf16.mxu0 0
      %1946 = vmatpush1.bf16.xpose.msra.mxu0 0
      %1947 = vmatprep.subr.bf16.mxu0 0
      %1948 = vmatpush1.bf16.xpose.msra.mxu0 0
      %1949 = vmatprep.subr.bf16.mxu0 0
      %1950 = vmatpush1.bf16.xpose.msra.mxu0 0
      %1951 = vmatprep.subr.bf16.mxu0 0
      %1952 = vmatpush1.bf16.xpose.msra.mxu0 0
      %1953 = vmatprep.subr.bf16.mxu0 0
      %1954 = vmatpush1.bf16.xpose.msra.mxu0 0
      %1955 = vmatprep.mubr.bf16.mxu0 0
      %1956 = vmatmul.mubr.bf16.gmra.mrb[0].mxu0 %v1918
      %v1957 = vpop.f32.mrb[0].mxu0
      %v1958 = vadd.f32 0.0, %v1957
      %v1959 = vpop.f32.mrb[0].mxu0
      %v1960 = vpop.f32.mrb[0].mxu0
      %v1961 = vpop.f32.mrb[0].mxu0
      %1962 = vdwg.mxu0
      %v1964 = vsel %vm1686, %v1076, 0
      %v1967 = vsel %vm1686, %v1380, 0
      %1969 = vmatprep.subr.bf16.mxu0 0
      %1970 = vmatpush1.bf16.xpose.msra.mxu0 %v1967
      %1971 = vmatprep.subr.bf16.mxu0 0
      %1972 = vmatpush1.bf16.xpose.msra.mxu0 0
      %1973 = vmatprep.subr.bf16.mxu0 0
      %1974 = vmatpush1.bf16.xpose.msra.mxu0 0
      %1975 = vmatprep.subr.bf16.mxu0 0
      %1976 = vmatpush1.bf16.xpose.msra.mxu0 0
      %1977 = vmatprep.subr.bf16.mxu0 0
      %1978 = vmatpush1.bf16.xpose.msra.mxu0 0
      %1979 = vmatprep.subr.bf16.mxu0 0
      %1980 = vmatpush1.bf16.xpose.msra.mxu0 0
      %1981 = vmatprep.subr.bf16.mxu0 0
      %1982 = vmatpush1.bf16.xpose.msra.mxu0 0
      %1983 = vmatprep.subr.bf16.mxu0 0
      %1984 = vmatpush1.bf16.xpose.msra.mxu0 0
      %1985 = vmatprep.subr.bf16.mxu0 0
      %1986 = vmatpush1.bf16.xpose.msra.mxu0 0
      %1987 = vmatprep.subr.bf16.mxu0 0
      %1988 = vmatpush1.bf16.xpose.msra.mxu0 0
      %1989 = vmatprep.subr.bf16.mxu0 0
      %1990 = vmatpush1.bf16.xpose.msra.mxu0 0
      %1991 = vmatprep.subr.bf16.mxu0 0
      %1992 = vmatpush1.bf16.xpose.msra.mxu0 0
      %1993 = vmatprep.subr.bf16.mxu0 0
      %1994 = vmatpush1.bf16.xpose.msra.mxu0 0
      %1995 = vmatprep.subr.bf16.mxu0 0
      %1996 = vmatpush1.bf16.xpose.msra.mxu0 0
      %1997 = vmatprep.subr.bf16.mxu0 0
      %1998 = vmatpush1.bf16.xpose.msra.mxu0 0
      %1999 = vmatprep.subr.bf16.mxu0 0
      %2000 = vmatpush1.bf16.xpose.msra.mxu0 0
      %2001 = vmatprep.mubr.bf16.mxu0 0
      %2002 = vmatmul.mubr.bf16.gmra.mrb[0].mxu0 %v1964
      %v2003 = vpop.f32.mrb[0].mxu0
      %v2004 = vadd.f32 0.0, %v2003
      %v2005 = vpop.f32.mrb[0].mxu0
      %v2006 = vpop.f32.mrb[0].mxu0
      %v2007 = vpop.f32.mrb[0].mxu0
      %2008 = vdwg.mxu0
      %v2010 = vsel %vm1686, %v1077, 0
      %v2013 = vsel %vm1686, %v1381, 0
      %2015 = vmatprep.subr.bf16.mxu0 0
      %2016 = vmatpush1.bf16.xpose.msra.mxu0 %v2013
      %2017 = vmatprep.subr.bf16.mxu0 0
      %2018 = vmatpush1.bf16.xpose.msra.mxu0 0
      %2019 = vmatprep.subr.bf16.mxu0 0
      %2020 = vmatpush1.bf16.xpose.msra.mxu0 0
      %2021 = vmatprep.subr.bf16.mxu0 0
      %2022 = vmatpush1.bf16.xpose.msra.mxu0 0
      %2023 = vmatprep.subr.bf16.mxu0 0
      %2024 = vmatpush1.bf16.xpose.msra.mxu0 0
      %2025 = vmatprep.subr.bf16.mxu0 0
      %2026 = vmatpush1.bf16.xpose.msra.mxu0 0
      %2027 = vmatprep.subr.bf16.mxu0 0
      %2028 = vmatpush1.bf16.xpose.msra.mxu0 0
      %2029 = vmatprep.subr.bf16.mxu0 0
      %2030 = vmatpush1.bf16.xpose.msra.mxu0 0
      %2031 = vmatprep.subr.bf16.mxu0 0
      %2032 = vmatpush1.bf16.xpose.msra.mxu0 0
      %2033 = vmatprep.subr.bf16.mxu0 0
      %2034 = vmatpush1.bf16.xpose.msra.mxu0 0
      %2035 = vmatprep.subr.bf16.mxu0 0
      %2036 = vmatpush1.bf16.xpose.msra.mxu0 0
      %2037 = vmatprep.subr.bf16.mxu0 0
      %2038 = vmatpush1.bf16.xpose.msra.mxu0 0
      %2039 = vmatprep.subr.bf16.mxu0 0
      %2040 = vmatpush1.bf16.xpose.msra.mxu0 0
      %2041 = vmatprep.subr.bf16.mxu0 0
      %2042 = vmatpush1.bf16.xpose.msra.mxu0 0
      %2043 = vmatprep.subr.bf16.mxu0 0
      %2044 = vmatpush1.bf16.xpose.msra.mxu0 0
      %2045 = vmatprep.subr.bf16.mxu0 0
      %2046 = vmatpush1.bf16.xpose.msra.mxu0 0
      %2047 = vmatprep.mubr.bf16.mxu0 0
      %2048 = vmatmul.mubr.bf16.gmra.mrb[0].mxu0 %v2010
      %v2049 = vpop.f32.mrb[0].mxu0
      %v2050 = vadd.f32 0.0, %v2049
      %v2051 = vpop.f32.mrb[0].mxu0
      %v2052 = vpop.f32.mrb[0].mxu0
      %v2053 = vpop.f32.mrb[0].mxu0
      %2054 = vdwg.mxu0
      %v2055 = vld [vmem:[%s645] sm:$0xff]
      %v2056 = vld [vmem:[%s645 + $0x8] sm:$0xff]
      %v2057 = vadd.f32 %v1728, %v2055
      %v2058 = vadd.f32 %v1774, %v2055
      %v2059 = vadd.f32 %v1820, %v2055
      %v2060 = vadd.f32 %v1866, %v2055
      %v2061 = vadd.f32 %v1912, %v2056
      %v2062 = vadd.f32 %v1958, %v2056
      %v2063 = vadd.f32 %v2004, %v2056
      %v2064 = vadd.f32 %v2050, %v2056
      %v2065 = vsel %vm1686, %v2057, -inf
      %2066 = vmax.xlane.f32.xlu0 %v2065
      %v2067 = vpop.xlane.xlu0 %2066
      %v2068 = vsel %vm1686, %v2058, -inf
      %2069 = vmax.xlane.f32.xlu0 %v2068
      %v2070 = vpop.xlane.xlu0 %2069
      %v2071 = vsel %vm1686, %v2059, -inf
      %2072 = vmax.xlane.f32.xlu0 %v2071
      %v2073 = vpop.xlane.xlu0 %2072
      %v2074 = vsel %vm1686, %v2060, -inf
      %2075 = vmax.xlane.f32.xlu0 %v2074
      %v2076 = vpop.xlane.xlu0 %2075
      %v2077 = vsel %vm1686, %v2061, -inf
      %2078 = vmax.xlane.f32.xlu0 %v2077
      %v2079 = vpop.xlane.xlu0 %2078
      %v2080 = vsel %vm1686, %v2062, -inf
      %2081 = vmax.xlane.f32.xlu0 %v2080
      %v2082 = vpop.xlane.xlu0 %2081
      %v2083 = vsel %vm1686, %v2063, -inf
      %2084 = vmax.xlane.f32.xlu0 %v2083
      %v2085 = vpop.xlane.xlu0 %2084
      %v2086 = vsel %vm1686, %v2064, -inf
      %2087 = vmax.xlane.f32.xlu0 %v2086
      %v2088 = vpop.xlane.xlu0 %2087
      %v2089 = vsub.f32 %v2057, %v2067
      %v2090 = vsub.f32 %v2058, %v2070
      %v2091 = vsub.f32 %v2059, %v2073
      %v2092 = vsub.f32 %v2060, %v2076
      %v2093 = vsub.f32 %v2061, %v2079
      %v2094 = vsub.f32 %v2062, %v2082
      %v2095 = vsub.f32 %v2063, %v2085
      %v2096 = vsub.f32 %v2064, %v2088
      %v2097 = vmul.f32 %v2089, 1.442695
      %v2098 = vpow.pop %v2097
      %v2099 = vmul.f32 %v2090, 1.442695
      %v2100 = vpow.pop %v2099
      %v2101 = vmul.f32 %v2091, 1.442695
      %v2102 = vpow.pop %v2101
      %v2103 = vmul.f32 %v2092, 1.442695
      %v2104 = vpow.pop %v2103
      %v2105 = vmul.f32 %v2093, 1.442695
      %v2106 = vpow.pop %v2105
      %v2107 = vmul.f32 %v2094, 1.442695
      %v2108 = vpow.pop %v2107
      %v2109 = vmul.f32 %v2095, 1.442695
      %v2110 = vpow.pop %v2109
      %v2111 = vmul.f32 %v2096, 1.442695
      %v2112 = vpow.pop %v2111
      %v2113 = vsel %vm1686, %v2098, 0.0
      %2114 = vadd.xlane.f32.xlu0 %v2113
      %v2115 = vpop.xlane.xlu0 %2114
      %v2116 = vsel %vm1686, %v2100, 0.0
      %2117 = vadd.xlane.f32.xlu0 %v2116
      %v2118 = vpop.xlane.xlu0 %2117
      %v2119 = vsel %vm1686, %v2102, 0.0
      %2120 = vadd.xlane.f32.xlu0 %v2119
      %v2121 = vpop.xlane.xlu0 %2120
      %v2122 = vsel %vm1686, %v2104, 0.0
      %2123 = vadd.xlane.f32.xlu0 %v2122
      %v2124 = vpop.xlane.xlu0 %2123
      %v2125 = vsel %vm1686, %v2106, 0.0
      %2126 = vadd.xlane.f32.xlu0 %v2125
      %v2127 = vpop.xlane.xlu0 %2126
      %v2128 = vsel %vm1686, %v2108, 0.0
      %2129 = vadd.xlane.f32.xlu0 %v2128
      %v2130 = vpop.xlane.xlu0 %2129
      %v2131 = vsel %vm1686, %v2110, 0.0
      %2132 = vadd.xlane.f32.xlu0 %v2131
      %v2133 = vpop.xlane.xlu0 %2132
      %v2134 = vsel %vm1686, %v2112, 0.0
      %2135 = vadd.xlane.f32.xlu0 %v2134
      %v2136 = vpop.xlane.xlu0 %2135
      %v2137 = vrcp.pop %v2115
      %v2138 = vrcp.pop %v2118
      %v2139 = vrcp.pop %v2121
      %v2140 = vrcp.pop %v2124
      %v2141 = vrcp.pop %v2127
      %v2142 = vrcp.pop %v2130
      %v2143 = vrcp.pop %v2133
      %v2144 = vrcp.pop %v2136
      %v2145 = vmul.f32 %v2098, %v2137
      %v2146 = vmul.f32 %v2100, %v2138
      %v2147 = vmul.f32 %v2102, %v2139
      %v2148 = vmul.f32 %v2104, %v2140
      %v2149 = vmul.f32 %v2106, %v2141
      %v2150 = vmul.f32 %v2108, %v2142
      %v2151 = vmul.f32 %v2110, %v2143
      %v2152 = vmul.f32 %v2112, %v2144
      %v2153 = vpack.c.bf16 %v2145, %v2145
      %v2154 = vpack.c.bf16 %v2146, %v2146
      %v2155 = vpack.c.bf16 %v2147, %v2147
      %v2156 = vpack.c.bf16 %v2148, %v2148
      %v2157 = vpack.c.bf16 %v2149, %v2149
      %v2158 = vpack.c.bf16 %v2150, %v2150
      %v2159 = vpack.c.bf16 %v2151, %v2151
      %v2160 = vpack.c.bf16 %v2152, %v2152
      %v2162 = vsel %vm1686, %v2153, 0
      %vm2164 = vcmask 1043456
      %v2166 = vsel %vm2164, %v1678, 0
      %2168 = vmatprep.subr.bf16.mxu0 0
      %2169 = vmatpush1.bf16.msra.mxu0 %v2166
      %2170 = vmatprep.subr.bf16.mxu0 0
      %2171 = vmatpush1.bf16.msra.mxu0 0
      %2172 = vmatprep.subr.bf16.mxu0 0
      %2173 = vmatpush1.bf16.msra.mxu0 0
      %2174 = vmatprep.subr.bf16.mxu0 0
      %2175 = vmatpush1.bf16.msra.mxu0 0
      %2176 = vmatprep.subr.bf16.mxu0 0
      %2177 = vmatpush1.bf16.msra.mxu0 0
      %2178 = vmatprep.subr.bf16.mxu0 0
      %2179 = vmatpush1.bf16.msra.mxu0 0
      %2180 = vmatprep.subr.bf16.mxu0 0
      %2181 = vmatpush1.bf16.msra.mxu0 0
      %2182 = vmatprep.subr.bf16.mxu0 0
      %2183 = vmatpush1.bf16.msra.mxu0 0
      %2184 = vmatprep.subr.bf16.mxu0 0
      %2185 = vmatpush1.bf16.msra.mxu0 0
      %2186 = vmatprep.subr.bf16.mxu0 0
      %2187 = vmatpush1.bf16.msra.mxu0 0
      %2188 = vmatprep.subr.bf16.mxu0 0
      %2189 = vmatpush1.bf16.msra.mxu0 0
      %2190 = vmatprep.subr.bf16.mxu0 0
      %2191 = vmatpush1.bf16.msra.mxu0 0
      %2192 = vmatprep.subr.bf16.mxu0 0
      %2193 = vmatpush1.bf16.msra.mxu0 0
      %2194 = vmatprep.subr.bf16.mxu0 0
      %2195 = vmatpush1.bf16.msra.mxu0 0
      %2196 = vmatprep.subr.bf16.mxu0 0
      %2197 = vmatpush1.bf16.msra.mxu0 0
      %2198 = vmatprep.subr.bf16.mxu0 0
      %2199 = vmatpush1.bf16.msra.mxu0 0
      %2200 = vmatprep.mubr.bf16.mxu0 0
      %2201 = vmatmul.mubr.bf16.gmra.mrb[0].mxu0 %v2162
      %v2202 = vpop.f32.mrb[0].mxu0
      %v2203 = vadd.f32 0.0, %v2202
      %v2204 = vpop.f32.mrb[0].mxu0
      %v2205 = vpop.f32.mrb[0].mxu0
      %v2206 = vpop.f32.mrb[0].mxu0
      %2207 = vdwg.mxu0
      %v2209 = vsel %vm1686, %v2154, 0
      %v2212 = vsel %vm2164, %v1679, 0
      %2214 = vmatprep.subr.bf16.mxu0 0
      %2215 = vmatpush1.bf16.msra.mxu0 %v2212
      %2216 = vmatprep.subr.bf16.mxu0 0
      %2217 = vmatpush1.bf16.msra.mxu0 0
      %2218 = vmatprep.subr.bf16.mxu0 0
      %2219 = vmatpush1.bf16.msra.mxu0 0
      %2220 = vmatprep.subr.bf16.mxu0 0
      %2221 = vmatpush1.bf16.msra.mxu0 0
      %2222 = vmatprep.subr.bf16.mxu0 0
      %2223 = vmatpush1.bf16.msra.mxu0 0
      %2224 = vmatprep.subr.bf16.mxu0 0
      %2225 = vmatpush1.bf16.msra.mxu0 0
      %2226 = vmatprep.subr.bf16.mxu0 0
      %2227 = vmatpush1.bf16.msra.mxu0 0
      %2228 = vmatprep.subr.bf16.mxu0 0
      %2229 = vmatpush1.bf16.msra.mxu0 0
      %2230 = vmatprep.subr.bf16.mxu0 0
      %2231 = vmatpush1.bf16.msra.mxu0 0
      %2232 = vmatprep.subr.bf16.mxu0 0
      %2233 = vmatpush1.bf16.msra.mxu0 0
      %2234 = vmatprep.subr.bf16.mxu0 0
      %2235 = vmatpush1.bf16.msra.mxu0 0
      %2236 = vmatprep.subr.bf16.mxu0 0
      %2237 = vmatpush1.bf16.msra.mxu0 0
      %2238 = vmatprep.subr.bf16.mxu0 0
      %2239 = vmatpush1.bf16.msra.mxu0 0
      %2240 = vmatprep.subr.bf16.mxu0 0
      %2241 = vmatpush1.bf16.msra.mxu0 0
      %2242 = vmatprep.subr.bf16.mxu0 0
      %2243 = vmatpush1.bf16.msra.mxu0 0
      %2244 = vmatprep.subr.bf16.mxu0 0
      %2245 = vmatpush1.bf16.msra.mxu0 0
      %2246 = vmatprep.mubr.bf16.mxu0 0
      %2247 = vmatmul.mubr.bf16.gmra.mrb[0].mxu0 %v2209
      %v2248 = vpop.f32.mrb[0].mxu0
      %v2249 = vadd.f32 0.0, %v2248
      %v2250 = vpop.f32.mrb[0].mxu0
      %v2251 = vpop.f32.mrb[0].mxu0
      %v2252 = vpop.f32.mrb[0].mxu0
      %2253 = vdwg.mxu0
      %v2255 = vsel %vm1686, %v2155, 0
      %v2258 = vsel %vm2164, %v1680, 0
      %2260 = vmatprep.subr.bf16.mxu0 0
      %2261 = vmatpush1.bf16.msra.mxu0 %v2258
      %2262 = vmatprep.subr.bf16.mxu0 0
      %2263 = vmatpush1.bf16.msra.mxu0 0
      %2264 = vmatprep.subr.bf16.mxu0 0
      %2265 = vmatpush1.bf16.msra.mxu0 0
      %2266 = vmatprep.subr.bf16.mxu0 0
      %2267 = vmatpush1.bf16.msra.mxu0 0
      %2268 = vmatprep.subr.bf16.mxu0 0
      %2269 = vmatpush1.bf16.msra.mxu0 0
      %2270 = vmatprep.subr.bf16.mxu0 0
      %2271 = vmatpush1.bf16.msra.mxu0 0
      %2272 = vmatprep.subr.bf16.mxu0 0
      %2273 = vmatpush1.bf16.msra.mxu0 0
      %2274 = vmatprep.subr.bf16.mxu0 0
      %2275 = vmatpush1.bf16.msra.mxu0 0
      %2276 = vmatprep.subr.bf16.mxu0 0
      %2277 = vmatpush1.bf16.msra.mxu0 0
      %2278 = vmatprep.subr.bf16.mxu0 0
      %2279 = vmatpush1.bf16.msra.mxu0 0
      %2280 = vmatprep.subr.bf16.mxu0 0
      %2281 = vmatpush1.bf16.msra.mxu0 0
      %2282 = vmatprep.subr.bf16.mxu0 0
      %2283 = vmatpush1.bf16.msra.mxu0 0
      %2284 = vmatprep.subr.bf16.mxu0 0
      %2285 = vmatpush1.bf16.msra.mxu0 0
      %2286 = vmatprep.subr.bf16.mxu0 0
      %2287 = vmatpush1.bf16.msra.mxu0 0
      %2288 = vmatprep.subr.bf16.mxu0 0
      %2289 = vmatpush1.bf16.msra.mxu0 0
      %2290 = vmatprep.subr.bf16.mxu0 0
      %2291 = vmatpush1.bf16.msra.mxu0 0
      %2292 = vmatprep.mubr.bf16.mxu0 0
      %2293 = vmatmul.mubr.bf16.gmra.mrb[0].mxu0 %v2255
      %v2294 = vpop.f32.mrb[0].mxu0
      %v2295 = vadd.f32 0.0, %v2294
      %v2296 = vpop.f32.mrb[0].mxu0
      %v2297 = vpop.f32.mrb[0].mxu0
      %v2298 = vpop.f32.mrb[0].mxu0
      %2299 = vdwg.mxu0
      %v2301 = vsel %vm1686, %v2156, 0
      %v2304 = vsel %vm2164, %v1681, 0
      %2306 = vmatprep.subr.bf16.mxu0 0
      %2307 = vmatpush1.bf16.msra.mxu0 %v2304
      %2308 = vmatprep.subr.bf16.mxu0 0
      %2309 = vmatpush1.bf16.msra.mxu0 0
      %2310 = vmatprep.subr.bf16.mxu0 0
      %2311 = vmatpush1.bf16.msra.mxu0 0
      %2312 = vmatprep.subr.bf16.mxu0 0
      %2313 = vmatpush1.bf16.msra.mxu0 0
      %2314 = vmatprep.subr.bf16.mxu0 0
      %2315 = vmatpush1.bf16.msra.mxu0 0
      %2316 = vmatprep.subr.bf16.mxu0 0
      %2317 = vmatpush1.bf16.msra.mxu0 0
      %2318 = vmatprep.subr.bf16.mxu0 0
      %2319 = vmatpush1.bf16.msra.mxu0 0
      %2320 = vmatprep.subr.bf16.mxu0 0
      %2321 = vmatpush1.bf16.msra.mxu0 0
      %2322 = vmatprep.subr.bf16.mxu0 0
      %2323 = vmatpush1.bf16.msra.mxu0 0
      %2324 = vmatprep.subr.bf16.mxu0 0
      %2325 = vmatpush1.bf16.msra.mxu0 0
      %2326 = vmatprep.subr.bf16.mxu0 0
      %2327 = vmatpush1.bf16.msra.mxu0 0
      %2328 = vmatprep.subr.bf16.mxu0 0
      %2329 = vmatpush1.bf16.msra.mxu0 0
      %2330 = vmatprep.subr.bf16.mxu0 0
      %2331 = vmatpush1.bf16.msra.mxu0 0
      %2332 = vmatprep.subr.bf16.mxu0 0
      %2333 = vmatpush1.bf16.msra.mxu0 0
      %2334 = vmatprep.subr.bf16.mxu0 0
      %2335 = vmatpush1.bf16.msra.mxu0 0
      %2336 = vmatprep.subr.bf16.mxu0 0
      %2337 = vmatpush1.bf16.msra.mxu0 0
      %2338 = vmatprep.mubr.bf16.mxu0 0
      %2339 = vmatmul.mubr.bf16.gmra.mrb[0].mxu0 %v2301
      %v2340 = vpop.f32.mrb[0].mxu0
      %v2341 = vadd.f32 0.0, %v2340
      %v2342 = vpop.f32.mrb[0].mxu0
      %v2343 = vpop.f32.mrb[0].mxu0
      %v2344 = vpop.f32.mrb[0].mxu0
      %2345 = vdwg.mxu0
      %v2347 = vsel %vm1686, %v2157, 0
      %v2350 = vsel %vm2164, %v1682, 0
      %2352 = vmatprep.subr.bf16.mxu0 0
      %2353 = vmatpush1.bf16.msra.mxu0 %v2350
      %2354 = vmatprep.subr.bf16.mxu0 0
      %2355 = vmatpush1.bf16.msra.mxu0 0
      %2356 = vmatprep.subr.bf16.mxu0 0
      %2357 = vmatpush1.bf16.msra.mxu0 0
      %2358 = vmatprep.subr.bf16.mxu0 0
      %2359 = vmatpush1.bf16.msra.mxu0 0
      %2360 = vmatprep.subr.bf16.mxu0 0
      %2361 = vmatpush1.bf16.msra.mxu0 0
      %2362 = vmatprep.subr.bf16.mxu0 0
      %2363 = vmatpush1.bf16.msra.mxu0 0
      %2364 = vmatprep.subr.bf16.mxu0 0
      %2365 = vmatpush1.bf16.msra.mxu0 0
      %2366 = vmatprep.subr.bf16.mxu0 0
      %2367 = vmatpush1.bf16.msra.mxu0 0
      %2368 = vmatprep.subr.bf16.mxu0 0
      %2369 = vmatpush1.bf16.msra.mxu0 0
      %2370 = vmatprep.subr.bf16.mxu0 0
      %2371 = vmatpush1.bf16.msra.mxu0 0
      %2372 = vmatprep.subr.bf16.mxu0 0
      %2373 = vmatpush1.bf16.msra.mxu0 0
      %2374 = vmatprep.subr.bf16.mxu0 0
      %2375 = vmatpush1.bf16.msra.mxu0 0
      %2376 = vmatprep.subr.bf16.mxu0 0
      %2377 = vmatpush1.bf16.msra.mxu0 0
      %2378 = vmatprep.subr.bf16.mxu0 0
      %2379 = vmatpush1.bf16.msra.mxu0 0
      %2380 = vmatprep.subr.bf16.mxu0 0
      %2381 = vmatpush1.bf16.msra.mxu0 0
      %2382 = vmatprep.subr.bf16.mxu0 0
      %2383 = vmatpush1.bf16.msra.mxu0 0
      %2384 = vmatprep.mubr.bf16.mxu0 0
      %2385 = vmatmul.mubr.bf16.gmra.mrb[0].mxu0 %v2347
      %v2386 = vpop.f32.mrb[0].mxu0
      %v2387 = vadd.f32 0.0, %v2386
      %v2388 = vpop.f32.mrb[0].mxu0
      %v2389 = vpop.f32.mrb[0].mxu0
      %v2390 = vpop.f32.mrb[0].mxu0
      %2391 = vdwg.mxu0
      %v2393 = vsel %vm1686, %v2158, 0
      %v2396 = vsel %vm2164, %v1683, 0
      %2398 = vmatprep.subr.bf16.mxu0 0
      %2399 = vmatpush1.bf16.msra.mxu0 %v2396
      %2400 = vmatprep.subr.bf16.mxu0 0
      %2401 = vmatpush1.bf16.msra.mxu0 0
      %2402 = vmatprep.subr.bf16.mxu0 0
      %2403 = vmatpush1.bf16.msra.mxu0 0
      %2404 = vmatprep.subr.bf16.mxu0 0
      %2405 = vmatpush1.bf16.msra.mxu0 0
      %2406 = vmatprep.subr.bf16.mxu0 0
      %2407 = vmatpush1.bf16.msra.mxu0 0
      %2408 = vmatprep.subr.bf16.mxu0 0
      %2409 = vmatpush1.bf16.msra.mxu0 0
      %2410 = vmatprep.subr.bf16.mxu0 0
      %2411 = vmatpush1.bf16.msra.mxu0 0
      %2412 = vmatprep.subr.bf16.mxu0 0
      %2413 = vmatpush1.bf16.msra.mxu0 0
      %2414 = vmatprep.subr.bf16.mxu0 0
      %2415 = vmatpush1.bf16.msra.mxu0 0
      %2416 = vmatprep.subr.bf16.mxu0 0
      %2417 = vmatpush1.bf16.msra.mxu0 0
      %2418 = vmatprep.subr.bf16.mxu0 0
      %2419 = vmatpush1.bf16.msra.mxu0 0
      %2420 = vmatprep.subr.bf16.mxu0 0
      %2421 = vmatpush1.bf16.msra.mxu0 0
      %2422 = vmatprep.subr.bf16.mxu0 0
      %2423 = vmatpush1.bf16.msra.mxu0 0
      %2424 = vmatprep.subr.bf16.mxu0 0
      %2425 = vmatpush1.bf16.msra.mxu0 0
      %2426 = vmatprep.subr.bf16.mxu0 0
      %2427 = vmatpush1.bf16.msra.mxu0 0
      %2428 = vmatprep.subr.bf16.mxu0 0
      %2429 = vmatpush1.bf16.msra.mxu0 0
      %2430 = vmatprep.mubr.bf16.mxu0 0
      %2431 = vmatmul.mubr.bf16.gmra.mrb[0].mxu0 %v2393
      %v2432 = vpop.f32.mrb[0].mxu0
      %v2433 = vadd.f32 0.0, %v2432
      %v2434 = vpop.f32.mrb[0].mxu0
      %v2435 = vpop.f32.mrb[0].mxu0
      %v2436 = vpop.f32.mrb[0].mxu0
      %2437 = vdwg.mxu0
      %v2439 = vsel %vm1686, %v2159, 0
      %v2442 = vsel %vm2164, %v1684, 0
      %2444 = vmatprep.subr.bf16.mxu0 0
      %2445 = vmatpush1.bf16.msra.mxu0 %v2442
      %2446 = vmatprep.subr.bf16.mxu0 0
      %2447 = vmatpush1.bf16.msra.mxu0 0
      %2448 = vmatprep.subr.bf16.mxu0 0
      %2449 = vmatpush1.bf16.msra.mxu0 0
      %2450 = vmatprep.subr.bf16.mxu0 0
      %2451 = vmatpush1.bf16.msra.mxu0 0
      %2452 = vmatprep.subr.bf16.mxu0 0
      %2453 = vmatpush1.bf16.msra.mxu0 0
      %2454 = vmatprep.subr.bf16.mxu0 0
      %2455 = vmatpush1.bf16.msra.mxu0 0
      %2456 = vmatprep.subr.bf16.mxu0 0
      %2457 = vmatpush1.bf16.msra.mxu0 0
      %2458 = vmatprep.subr.bf16.mxu0 0
      %2459 = vmatpush1.bf16.msra.mxu0 0
      %2460 = vmatprep.subr.bf16.mxu0 0
      %2461 = vmatpush1.bf16.msra.mxu0 0
      %2462 = vmatprep.subr.bf16.mxu0 0
      %2463 = vmatpush1.bf16.msra.mxu0 0
      %2464 = vmatprep.subr.bf16.mxu0 0
      %2465 = vmatpush1.bf16.msra.mxu0 0
      %2466 = vmatprep.subr.bf16.mxu0 0
      %2467 = vmatpush1.bf16.msra.mxu0 0
      %2468 = vmatprep.subr.bf16.mxu0 0
      %2469 = vmatpush1.bf16.msra.mxu0 0
      %2470 = vmatprep.subr.bf16.mxu0 0
      %2471 = vmatpush1.bf16.msra.mxu0 0
      %2472 = vmatprep.subr.bf16.mxu0 0
      %2473 = vmatpush1.bf16.msra.mxu0 0
      %2474 = vmatprep.subr.bf16.mxu0 0
      %2475 = vmatpush1.bf16.msra.mxu0 0
      %2476 = vmatprep.mubr.bf16.mxu0 0
      %2477 = vmatmul.mubr.bf16.gmra.mrb[0].mxu0 %v2439
      %v2478 = vpop.f32.mrb[0].mxu0
      %v2479 = vadd.f32 0.0, %v2478
      %v2480 = vpop.f32.mrb[0].mxu0
      %v2481 = vpop.f32.mrb[0].mxu0
      %v2482 = vpop.f32.mrb[0].mxu0
      %2483 = vdwg.mxu0
      %v2485 = vsel %vm1686, %v2160, 0
      %v2488 = vsel %vm2164, %v1685, 0
      %2490 = vmatprep.subr.bf16.mxu0 0
      %2491 = vmatpush1.bf16.msra.mxu0 %v2488
      %2492 = vmatprep.subr.bf16.mxu0 0
      %2493 = vmatpush1.bf16.msra.mxu0 0
      %2494 = vmatprep.subr.bf16.mxu0 0
      %2495 = vmatpush1.bf16.msra.mxu0 0
      %2496 = vmatprep.subr.bf16.mxu0 0
      %2497 = vmatpush1.bf16.msra.mxu0 0
      %2498 = vmatprep.subr.bf16.mxu0 0
      %2499 = vmatpush1.bf16.msra.mxu0 0
      %2500 = vmatprep.subr.bf16.mxu0 0
      %2501 = vmatpush1.bf16.msra.mxu0 0
      %2502 = vmatprep.subr.bf16.mxu0 0
      %2503 = vmatpush1.bf16.msra.mxu0 0
      %2504 = vmatprep.subr.bf16.mxu0 0
      %2505 = vmatpush1.bf16.msra.mxu0 0
      %2506 = vmatprep.subr.bf16.mxu0 0
      %2507 = vmatpush1.bf16.msra.mxu0 0
      %2508 = vmatprep.subr.bf16.mxu0 0
      %2509 = vmatpush1.bf16.msra.mxu0 0
      %2510 = vmatprep.subr.bf16.mxu0 0
      %2511 = vmatpush1.bf16.msra.mxu0 0
      %2512 = vmatprep.subr.bf16.mxu0 0
      %2513 = vmatpush1.bf16.msra.mxu0 0
      %2514 = vmatprep.subr.bf16.mxu0 0
      %2515 = vmatpush1.bf16.msra.mxu0 0
      %2516 = vmatprep.subr.bf16.mxu0 0
      %2517 = vmatpush1.bf16.msra.mxu0 0
      %2518 = vmatprep.subr.bf16.mxu0 0
      %2519 = vmatpush1.bf16.msra.mxu0 0
      %2520 = vmatprep.subr.bf16.mxu0 0
      %2521 = vmatpush1.bf16.msra.mxu0 0
      %2522 = vmatprep.mubr.bf16.mxu0 0
      %2523 = vmatmul.mubr.bf16.gmra.mrb[0].mxu0 %v2485
      %v2524 = vpop.f32.mrb[0].mxu0
      %v2525 = vadd.f32 0.0, %v2524
      %v2526 = vpop.f32.mrb[0].mxu0
      %v2527 = vpop.f32.mrb[0].mxu0
      %v2528 = vpop.f32.mrb[0].mxu0
      %2529 = vdwg.mxu0
      %v2530 = vcombine.low %v2203, %v2295
      %v2531 = vcombine.high %v2203, %v2295
      %v2533 = vunpack.c.l.s4 1983009808
      %v2534 = vunpack.c.0.s8 %v2533
      %v2535 = vlaneseq
      %v2536 = vshrl.u32 %v2535, 7
      %v2537 = vsub.s32 %v2534, %v2536
      %v2538 = vrot.slane %v2530, %v2537
      %v2540 = vunpack.c.l.s4 1983009808
      %v2541 = vunpack.c.0.s8 %v2540
      %v2542 = vlaneseq
      %v2543 = vshrl.u32 %v2542, 7
      %v2544 = vsub.s32 %v2541, %v2543
      %v2545 = vrot.slane %v2531, %v2544
      %v2546 = vcombine.low %v2249, %v2341
      %v2547 = vcombine.high %v2249, %v2341
      %v2549 = vunpack.c.l.s4 1983009808
      %v2550 = vunpack.c.0.s8 %v2549
      %v2551 = vlaneseq
      %v2552 = vshrl.u32 %v2551, 7
      %v2553 = vsub.s32 %v2550, %v2552
      %v2554 = vrot.slane %v2546, %v2553
      %v2556 = vunpack.c.l.s4 1983009808
      %v2557 = vunpack.c.0.s8 %v2556
      %v2558 = vlaneseq
      %v2559 = vshrl.u32 %v2558, 7
      %v2560 = vsub.s32 %v2557, %v2559
      %v2561 = vrot.slane %v2547, %v2560
      %v2562 = vcombine.low %v2538, %v2554
      %v2563 = vcombine.high %v2538, %v2554
      %v2565 = vunpack.c.l.s4 1934713408
      %v2566 = vunpack.c.0.s8 %v2565
      %v2567 = vlaneseq
      %v2568 = vshrl.u32 %v2567, 7
      %v2569 = vsub.s32 %v2566, %v2568
      %v2570 = vrot.slane %v2562, %v2569
      %v2572 = vunpack.c.l.s4 1934713408
      %v2573 = vunpack.c.0.s8 %v2572
      %v2574 = vlaneseq
      %v2575 = vshrl.u32 %v2574, 7
      %v2576 = vsub.s32 %v2573, %v2575
      %v2577 = vrot.slane %v2563, %v2576
      %v2578 = vcombine.low %v2545, %v2561
      %v2579 = vcombine.high %v2545, %v2561
      %v2581 = vunpack.c.l.s4 1934713408
      %v2582 = vunpack.c.0.s8 %v2581
      %v2583 = vlaneseq
      %v2584 = vshrl.u32 %v2583, 7
      %v2585 = vsub.s32 %v2582, %v2584
      %v2586 = vrot.slane %v2578, %v2585
      %v2588 = vunpack.c.l.s4 1934713408
      %v2589 = vunpack.c.0.s8 %v2588
      %v2590 = vlaneseq
      %v2591 = vshrl.u32 %v2590, 7
      %v2592 = vsub.s32 %v2589, %v2591
      %v2593 = vrot.slane %v2579, %v2592
      %v2594 = vcombine.high %v2570, 0.0
      %v2595 = vcombine.high %v2577, 0.0
      %v2596 = vcombine.high %v2586, 0.0
      %v2597 = vcombine.high %v2593, 0.0
      %v2598 = vcombine.low %v2387, %v2479
      %v2599 = vcombine.high %v2387, %v2479
      %v2601 = vunpack.c.l.s4 1983009808
      %v2602 = vunpack.c.0.s8 %v2601
      %v2603 = vlaneseq
      %v2604 = vshrl.u32 %v2603, 7
      %v2605 = vsub.s32 %v2602, %v2604
      %v2606 = vrot.slane %v2598, %v2605
      %v2608 = vunpack.c.l.s4 1983009808
      %v2609 = vunpack.c.0.s8 %v2608
      %v2610 = vlaneseq
      %v2611 = vshrl.u32 %v2610, 7
      %v2612 = vsub.s32 %v2609, %v2611
      %v2613 = vrot.slane %v2599, %v2612
      %v2614 = vcombine.low %v2433, %v2525
      %v2615 = vcombine.high %v2433, %v2525
      %v2617 = vunpack.c.l.s4 1983009808
      %v2618 = vunpack.c.0.s8 %v2617
      %v2619 = vlaneseq
      %v2620 = vshrl.u32 %v2619, 7
      %v2621 = vsub.s32 %v2618, %v2620
      %v2622 = vrot.slane %v2614, %v2621
      %v2624 = vunpack.c.l.s4 1983009808
      %v2625 = vunpack.c.0.s8 %v2624
      %v2626 = vlaneseq
      %v2627 = vshrl.u32 %v2626, 7
      %v2628 = vsub.s32 %v2625, %v2627
      %v2629 = vrot.slane %v2615, %v2628
      %v2630 = vcombine.low %v2606, %v2622
      %v2631 = vcombine.high %v2606, %v2622
      %v2633 = vunpack.c.l.s4 1934713408
      %v2634 = vunpack.c.0.s8 %v2633
      %v2635 = vlaneseq
      %v2636 = vshrl.u32 %v2635, 7
      %v2637 = vsub.s32 %v2634, %v2636
      %v2638 = vrot.slane %v2630, %v2637
      %v2640 = vunpack.c.l.s4 1934713408
      %v2641 = vunpack.c.0.s8 %v2640
      %v2642 = vlaneseq
      %v2643 = vshrl.u32 %v2642, 7
      %v2644 = vsub.s32 %v2641, %v2643
      %v2645 = vrot.slane %v2631, %v2644
      %v2646 = vcombine.low %v2613, %v2629
      %v2647 = vcombine.high %v2613, %v2629
      %v2649 = vunpack.c.l.s4 1934713408
      %v2650 = vunpack.c.0.s8 %v2649
      %v2651 = vlaneseq
      %v2652 = vshrl.u32 %v2651, 7
      %v2653 = vsub.s32 %v2650, %v2652
      %v2654 = vrot.slane %v2646, %v2653
      %v2656 = vunpack.c.l.s4 1934713408
      %v2657 = vunpack.c.0.s8 %v2656
      %v2658 = vlaneseq
      %v2659 = vshrl.u32 %v2658, 7
      %v2660 = vsub.s32 %v2657, %v2659
      %v2661 = vrot.slane %v2647, %v2660
      %v2662 = vcombine.high %v2638, 0.0
      %v2663 = vcombine.high %v2645, 0.0
      %v2664 = vcombine.high %v2654, 0.0
      %v2665 = vcombine.high %v2661, 0.0
      %v2666 = vcombine.low %v2570, %v2577
      %v2668 = vunpack.c.l.s4 1983009808
      %v2669 = vunpack.c.0.s8 %v2668
      %v2670 = vlaneseq
      %v2671 = vshrl.u32 %v2670, 7
      %v2672 = vsub.s32 %v2669, %v2671
      %v2673 = vrot.slane %v2666, %v2672
      %v2674 = vcombine.low %v2594, %v2595
      %v2676 = vunpack.c.l.s4 1983009808
      %v2677 = vunpack.c.0.s8 %v2676
      %v2678 = vlaneseq
      %v2679 = vshrl.u32 %v2678, 7
      %v2680 = vsub.s32 %v2677, %v2679
      %v2681 = vrot.slane %v2674, %v2680
      %v2682 = vcombine.low %v2586, %v2593
      %v2684 = vunpack.c.l.s4 1983009808
      %v2685 = vunpack.c.0.s8 %v2684
      %v2686 = vlaneseq
      %v2687 = vshrl.u32 %v2686, 7
      %v2688 = vsub.s32 %v2685, %v2687
      %v2689 = vrot.slane %v2682, %v2688
      %v2690 = vcombine.low %v2596, %v2597
      %v2692 = vunpack.c.l.s4 1983009808
      %v2693 = vunpack.c.0.s8 %v2692
      %v2694 = vlaneseq
      %v2695 = vshrl.u32 %v2694, 7
      %v2696 = vsub.s32 %v2693, %v2695
      %v2697 = vrot.slane %v2690, %v2696
      %v2698 = vcombine.low %v2673, %v2681
      %v2699 = vcombine.high %v2673, %v2681
      %v2701 = vunpack.c.l.s4 1934713408
      %v2702 = vunpack.c.0.s8 %v2701
      %v2703 = vlaneseq
      %v2704 = vshrl.u32 %v2703, 7
      %v2705 = vsub.s32 %v2702, %v2704
      %v2706 = vrot.slane %v2698, %v2705
      %v2708 = vunpack.c.l.s4 1934713408
      %v2709 = vunpack.c.0.s8 %v2708
      %v2710 = vlaneseq
      %v2711 = vshrl.u32 %v2710, 7
      %v2712 = vsub.s32 %v2709, %v2711
      %v2713 = vrot.slane %v2699, %v2712
      %v2714 = vcombine.low %v2689, %v2697
      %v2715 = vcombine.high %v2689, %v2697
      %v2717 = vunpack.c.l.s4 1934713408
      %v2718 = vunpack.c.0.s8 %v2717
      %v2719 = vlaneseq
      %v2720 = vshrl.u32 %v2719, 7
      %v2721 = vsub.s32 %v2718, %v2720
      %v2722 = vrot.slane %v2714, %v2721
      %v2724 = vunpack.c.l.s4 1934713408
      %v2725 = vunpack.c.0.s8 %v2724
      %v2726 = vlaneseq
      %v2727 = vshrl.u32 %v2726, 7
      %v2728 = vsub.s32 %v2725, %v2727
      %v2729 = vrot.slane %v2715, %v2728
      %v2730 = vcombine.low %v2706, %v2722
      %v2731 = vcombine.high %v2706, %v2722
      %v2732 = vcombine.low %v2713, %v2729
      %v2733 = vcombine.high %v2713, %v2729
      %v2734 = vcombine.low %v2638, %v2645
      %v2736 = vunpack.c.l.s4 1983009808
      %v2737 = vunpack.c.0.s8 %v2736
      %v2738 = vlaneseq
      %v2739 = vshrl.u32 %v2738, 7
      %v2740 = vsub.s32 %v2737, %v2739
      %v2741 = vrot.slane %v2734, %v2740
      %v2742 = vcombine.low %v2662, %v2663
      %v2744 = vunpack.c.l.s4 1983009808
      %v2745 = vunpack.c.0.s8 %v2744
      %v2746 = vlaneseq
      %v2747 = vshrl.u32 %v2746, 7
      %v2748 = vsub.s32 %v2745, %v2747
      %v2749 = vrot.slane %v2742, %v2748
      %v2750 = vcombine.low %v2654, %v2661
      %v2752 = vunpack.c.l.s4 1983009808
      %v2753 = vunpack.c.0.s8 %v2752
      %v2754 = vlaneseq
      %v2755 = vshrl.u32 %v2754, 7
      %v2756 = vsub.s32 %v2753, %v2755
      %v2757 = vrot.slane %v2750, %v2756
      %v2758 = vcombine.low %v2664, %v2665
      %v2760 = vunpack.c.l.s4 1983009808
      %v2761 = vunpack.c.0.s8 %v2760
      %v2762 = vlaneseq
      %v2763 = vshrl.u32 %v2762, 7
      %v2764 = vsub.s32 %v2761, %v2763
      %v2765 = vrot.slane %v2758, %v2764
      %v2766 = vcombine.low %v2741, %v2749
      %v2767 = vcombine.high %v2741, %v2749
      %v2769 = vunpack.c.l.s4 1934713408
      %v2770 = vunpack.c.0.s8 %v2769
      %v2771 = vlaneseq
      %v2772 = vshrl.u32 %v2771, 7
      %v2773 = vsub.s32 %v2770, %v2772
      %v2774 = vrot.slane %v2766, %v2773
      %v2776 = vunpack.c.l.s4 1934713408
      %v2777 = vunpack.c.0.s8 %v2776
      %v2778 = vlaneseq
      %v2779 = vshrl.u32 %v2778, 7
      %v2780 = vsub.s32 %v2777, %v2779
      %v2781 = vrot.slane %v2767, %v2780
      %v2782 = vcombine.low %v2757, %v2765
      %v2783 = vcombine.high %v2757, %v2765
      %v2785 = vunpack.c.l.s4 1934713408
      %v2786 = vunpack.c.0.s8 %v2785
      %v2787 = vlaneseq
      %v2788 = vshrl.u32 %v2787, 7
      %v2789 = vsub.s32 %v2786, %v2788
      %v2790 = vrot.slane %v2782, %v2789
      %v2792 = vunpack.c.l.s4 1934713408
      %v2793 = vunpack.c.0.s8 %v2792
      %v2794 = vlaneseq
      %v2795 = vshrl.u32 %v2794, 7
      %v2796 = vsub.s32 %v2793, %v2795
      %v2797 = vrot.slane %v2783, %v2796
      %v2798 = vcombine.low %v2774, %v2790
      %v2799 = vcombine.high %v2774, %v2790
      %v2800 = vcombine.low %v2781, %v2797
      %v2801 = vcombine.high %v2781, %v2797
      %2804 = vrot.lane.b32.xlu0 %v2731, 8
      %v2805 = vpop.permute.xlu0 %2804
      %2806 = vrot.lane.b32.xlu0 %v2799, 8
      %v2807 = vpop.permute.xlu0 %2806
      %2812 = vrot.lane.b32.xlu0 %v2732, 16
      %v2813 = vpop.permute.xlu0 %2812
      %2814 = vrot.lane.b32.xlu0 %v2800, 16
      %v2815 = vpop.permute.xlu0 %2814
      %2820 = vrot.lane.b32.xlu0 %v2733, 24
      %v2821 = vpop.permute.xlu0 %2820
      %2822 = vrot.lane.b32.xlu0 %v2801, 24
      %v2823 = vpop.permute.xlu0 %2822
      %v2826 = vsel %vm1686, %v2730, %v2805
      %v2827 = vsel %vm1686, %v2798, %v2807
      %vm2828 = vcmask 130048
      %v2829 = vsel %vm2828, %v2826, %v2813
      %v2830 = vsel %vm2828, %v2827, %v2815
      %vm2831 = vcmask 195584
      %v2832 = vsel %vm2831, %v2829, %v2821
      %v2833 = vsel %vm2831, %v2830, %v2823
      %v2834 = vpack.c.bf16 %v2833, %v2832
      %v2835 = vld [vmem:[%s659] sm:$0xf]
      %v2836 = vld [vmem:[%s659 + $0x4] sm:$0xf]
      %v2837 = vld [vmem:[%s659 + $0x8] sm:$0xf]
      %v2838 = vld [vmem:[%s659 + $0xc] sm:$0xf]
      %v2839 = vld [vmem:[%s662] sm:$0x1]
      %v2841 = vlaneseq
      %v2842 = vshrl.u32 %v2841, 7
      %v2843 = vsub.s32 0, %v2842
      %v2844 = vrot.slane %v2839, %v2843
      %v2850 = vunpack.c.l.b16 %v2835
      %v2851 = vunpack.c.l.b16 %v2836
      %v2852 = vunpack.c.l.b16 %v2837
      %v2853 = vunpack.c.l.b16 %v2838
      %v2854 = vpack.c.b16 %v2851, %v2850
      %v2855 = vpack.c.b16 %v2853, %v2852
      %v2859 = vsel %vm733, %v2834, 0
      %2861 = vmatprep.subr.bf16.mxu0 0
      %2862 = vmatpush1.bf16.msra.mxu0 %v2854
      %2863 = vmatprep.subr.bf16.mxu0 0
      %2864 = vmatpush1.bf16.msra.mxu0 %v2855
      %2865 = vmatprep.subr.bf16.mxu0 0
      %2866 = vmatpush1.bf16.msra.mxu0 0
      %2867 = vmatprep.subr.bf16.mxu0 0
      %2868 = vmatpush1.bf16.msra.mxu0 0
      %2869 = vmatprep.subr.bf16.mxu0 0
      %2870 = vmatpush1.bf16.msra.mxu0 0
      %2871 = vmatprep.subr.bf16.mxu0 0
      %2872 = vmatpush1.bf16.msra.mxu0 0
      %2873 = vmatprep.subr.bf16.mxu0 0
      %2874 = vmatpush1.bf16.msra.mxu0 0
      %2875 = vmatprep.subr.bf16.mxu0 0
      %2876 = vmatpush1.bf16.msra.mxu0 0
      %2877 = vmatprep.subr.bf16.mxu0 0
      %2878 = vmatpush1.bf16.msra.mxu0 0
      %2879 = vmatprep.subr.bf16.mxu0 0
      %2880 = vmatpush1.bf16.msra.mxu0 0
      %2881 = vmatprep.subr.bf16.mxu0 0
      %2882 = vmatpush1.bf16.msra.mxu0 0
      %2883 = vmatprep.subr.bf16.mxu0 0
      %2884 = vmatpush1.bf16.msra.mxu0 0
      %2885 = vmatprep.subr.bf16.mxu0 0
      %2886 = vmatpush1.bf16.msra.mxu0 0
      %2887 = vmatprep.subr.bf16.mxu0 0
      %2888 = vmatpush1.bf16.msra.mxu0 0
      %2889 = vmatprep.subr.bf16.mxu0 0
      %2890 = vmatpush1.bf16.msra.mxu0 0
      %2891 = vmatprep.subr.bf16.mxu0 0
      %2892 = vmatpush1.bf16.msra.mxu0 0
      %2893 = vmatprep.mubr.bf16.mxu0 0
      %2894 = vmatmul.mubr.bf16.gmra.mrb[0].mxu0 %v2859
      %v2895 = vpop.f32.mrb[0].mxu0
      %v2896 = vadd.f32 %v2844, %v2895
      %v2897 = vpop.f32.mrb[0].mxu0
      %v2898 = vpop.f32.mrb[0].mxu0
      %v2899 = vadd.f32 %v2844, %v2898
      %v2900 = vpop.f32.mrb[0].mxu0
      %2901 = vdwg.mxu0
      %v2902 = vadd.f32 %v707, %v2896
      %v2903 = vadd.f32 %v708, %v2899
      %v2904 = vsel %vm733, %v2902, 0.0
      %2905 = vadd.xlane.f32.xlu0 %v2904
      %v2906 = vpop.xlane.xlu0 %2905
      %v2907 = vsel %vm733, %v2903, 0.0
      %2908 = vadd.xlane.f32.xlu0 %v2907
      %v2909 = vpop.xlane.xlu0 %2908
      %v2910 = vrcp.pop 32.0
      %v2911 = vmul.f32 %v2906, %v2910
      %v2912 = vmul.f32 %v2909, %v2910
      %v2913 = vsub.f32 %v2902, %v2911
      %v2914 = vsub.f32 %v2903, %v2912
      %v2915 = vmul.f32 %v2913, %v2913
      %v2916 = vmul.f32 %v2914, %v2914
      %v2917 = vsel %vm733, %v2915, 0.0
      %2918 = vadd.xlane.f32.xlu0 %v2917
      %v2919 = vpop.xlane.xlu0 %2918
      %v2920 = vsel %vm733, %v2916, 0.0
      %2921 = vadd.xlane.f32.xlu0 %v2920
      %v2922 = vpop.xlane.xlu0 %2921
      %v2923 = vmul.f32 %v2919, %v2910
      %v2924 = vmul.f32 %v2922, %v2910
      %v2925 = vadd.f32 %v2923, 1e-05
      %v2926 = vadd.f32 %v2924, 1e-05
      %v2927 = vrsqrt.pop %v2925
      %v2928 = vrsqrt.pop %v2926
      %v2929 = vmul.f32 %v2913, %v2927
      %v2930 = vmul.f32 %v2914, %v2928
      %v2931 = vld [vmem:[%s665] sm:$0x1]
      %v2933 = vlaneseq
      %v2934 = vshrl.u32 %v2933, 7
      %v2935 = vsub.s32 0, %v2934
      %v2936 = vrot.slane %v2931, %v2935
      %v2938 = vmul.f32 %v2929, %v2936
      %v2939 = vmul.f32 %v2930, %v2936
      %v2940 = vld [vmem:[%s668] sm:$0x1]
      %v2942 = vlaneseq
      %v2943 = vshrl.u32 %v2942, 7
      %v2944 = vsub.s32 0, %v2943
      %v2945 = vrot.slane %v2940, %v2944
      %v2947 = vadd.f32 %v2938, %v2945
      %v2948 = vadd.f32 %v2939, %v2945
      %v2949 = vpack.c.bf16 %v2948, %v2947
      %v2950 = vld [vmem:[%s673] sm:$0xf]
      %v2951 = vld [vmem:[%s673 + $0x4] sm:$0xf]
      %v2952 = vld [vmem:[%s673 + $0x8] sm:$0xf]
      %v2953 = vld [vmem:[%s673 + $0xc] sm:$0xf]
      %v2954 = vld [vmem:[%s676] sm:$0x1]
      %v2956 = vlaneseq
      %v2957 = vshrl.u32 %v2956, 7
      %v2958 = vsub.s32 0, %v2957
      %v2959 = vrot.slane %v2954, %v2958
      %v2965 = vunpack.c.l.b16 %v2950
      %v2966 = vunpack.c.l.b16 %v2951
      %v2967 = vunpack.c.l.b16 %v2952
      %v2968 = vunpack.c.l.b16 %v2953
      %v2969 = vpack.c.b16 %v2966, %v2965
      %v2970 = vpack.c.b16 %v2968, %v2967
      %v2974 = vsel %vm733, %v2949, 0
      %2976 = vmatprep.subr.bf16.mxu0 0
      %2977 = vmatpush1.bf16.msra.mxu0 %v2969
      %2978 = vmatprep.subr.bf16.mxu0 0
      %2979 = vmatpush1.bf16.msra.mxu0 %v2970
      %2980 = vmatprep.subr.bf16.mxu0 0
      %2981 = vmatpush1.bf16.msra.mxu0 0
      %2982 = vmatprep.subr.bf16.mxu0 0
      %2983 = vmatpush1.bf16.msra.mxu0 0
      %2984 = vmatprep.subr.bf16.mxu0 0
      %2985 = vmatpush1.bf16.msra.mxu0 0
      %2986 = vmatprep.subr.bf16.mxu0 0
      %2987 = vmatpush1.bf16.msra.mxu0 0
      %2988 = vmatprep.subr.bf16.mxu0 0
      %2989 = vmatpush1.bf16.msra.mxu0 0
      %2990 = vmatprep.subr.bf16.mxu0 0
      %2991 = vmatpush1.bf16.msra.mxu0 0
      %2992 = vmatprep.subr.bf16.mxu0 0
      %2993 = vmatpush1.bf16.msra.mxu0 0
      %2994 = vmatprep.subr.bf16.mxu0 0
      %2995 = vmatpush1.bf16.msra.mxu0 0
      %2996 = vmatprep.subr.bf16.mxu0 0
      %2997 = vmatpush1.bf16.msra.mxu0 0
      %2998 = vmatprep.subr.bf16.mxu0 0
      %2999 = vmatpush1.bf16.msra.mxu0 0
      %3000 = vmatprep.subr.bf16.mxu0 0
      %3001 = vmatpush1.bf16.msra.mxu0 0
      %3002 = vmatprep.subr.bf16.mxu0 0
      %3003 = vmatpush1.bf16.msra.mxu0 0
      %3004 = vmatprep.subr.bf16.mxu0 0
      %3005 = vmatpush1.bf16.msra.mxu0 0
      %3006 = vmatprep.subr.bf16.mxu0 0
      %3007 = vmatpush1.bf16.msra.mxu0 0
      %3008 = vmatprep.mubr.bf16.mxu0 0
      %3009 = vmatmul.mubr.bf16.gmra.mrb[0].mxu0 %v2974
      %v3010 = vpop.f32.mrb[0].mxu0
      %v3011 = vadd.f32 %v2959, %v3010
      %v3012 = vpop.f32.mrb[0].mxu0
      %v3013 = vpop.f32.mrb[0].mxu0
      %v3014 = vadd.f32 %v2959, %v3013
      %v3015 = vpop.f32.mrb[0].mxu0
      %3016 = vdwg.mxu0
      %v3017 = vmax.f32 %v3011, 0.0
      %v3018 = vmax.f32 %v3014, 0.0
      %v3019 = vpack.c.bf16 %v3018, %v3017
      %v3020 = vld [vmem:[%s681] sm:$0xf]
      %v3021 = vld [vmem:[%s681 + $0x4] sm:$0xf]
      %v3022 = vld [vmem:[%s681 + $0x8] sm:$0xf]
      %v3023 = vld [vmem:[%s681 + $0xc] sm:$0xf]
      %v3024 = vld [vmem:[%s681 + $0x10] sm:$0xf]
      %v3025 = vld [vmem:[%s681 + $0x14] sm:$0xf]
      %v3026 = vld [vmem:[%s681 + $0x18] sm:$0xf]
      %v3027 = vld [vmem:[%s681 + $0x1c] sm:$0xf]
      %v3028 = vld [vmem:[%s684] sm:$0x1]
      %v3030 = vlaneseq
      %v3031 = vshrl.u32 %v3030, 7
      %v3032 = vsub.s32 0, %v3031
      %v3033 = vrot.slane %v3028, %v3032
      %v3043 = vunpack.c.l.b16 %v3020
      %v3044 = vunpack.c.l.b16 %v3021
      %v3045 = vunpack.c.l.b16 %v3022
      %v3046 = vunpack.c.l.b16 %v3023
      %v3047 = vunpack.c.l.b16 %v3024
      %v3048 = vunpack.c.l.b16 %v3025
      %v3049 = vunpack.c.l.b16 %v3026
      %v3050 = vunpack.c.l.b16 %v3027
      %v3051 = vpack.c.b16 %v3044, %v3043
      %v3052 = vpack.c.b16 %v3046, %v3045
      %v3053 = vpack.c.b16 %v3048, %v3047
      %v3054 = vpack.c.b16 %v3050, %v3049
      %vm3059 = vcmask 523264
      %v3061 = vsel %vm3059, %v3019, 0
      %3063 = vmatprep.subr.bf16.mxu0 0
      %3064 = vmatpush1.bf16.msra.mxu0 %v3051
      %3065 = vmatprep.subr.bf16.mxu0 0
      %3066 = vmatpush1.bf16.msra.mxu0 %v3052
      %3067 = vmatprep.subr.bf16.mxu0 0
      %3068 = vmatpush1.bf16.msra.mxu0 %v3053
      %3069 = vmatprep.subr.bf16.mxu0 0
      %3070 = vmatpush1.bf16.msra.mxu0 %v3054
      %3071 = vmatprep.subr.bf16.mxu0 0
      %3072 = vmatpush1.bf16.msra.mxu0 0
      %3073 = vmatprep.subr.bf16.mxu0 0
      %3074 = vmatpush1.bf16.msra.mxu0 0
      %3075 = vmatprep.subr.bf16.mxu0 0
      %3076 = vmatpush1.bf16.msra.mxu0 0
      %3077 = vmatprep.subr.bf16.mxu0 0
      %3078 = vmatpush1.bf16.msra.mxu0 0
      %3079 = vmatprep.subr.bf16.mxu0 0
      %3080 = vmatpush1.bf16.msra.mxu0 0
      %3081 = vmatprep.subr.bf16.mxu0 0
      %3082 = vmatpush1.bf16.msra.mxu0 0
      %3083 = vmatprep.subr.bf16.mxu0 0
      %3084 = vmatpush1.bf16.msra.mxu0 0
      %3085 = vmatprep.subr.bf16.mxu0 0
      %3086 = vmatpush1.bf16.msra.mxu0 0
      %3087 = vmatprep.subr.bf16.mxu0 0
      %3088 = vmatpush1.bf16.msra.mxu0 0
      %3089 = vmatprep.subr.bf16.mxu0 0
      %3090 = vmatpush1.bf16.msra.mxu0 0
      %3091 = vmatprep.subr.bf16.mxu0 0
      %3092 = vmatpush1.bf16.msra.mxu0 0
      %3093 = vmatprep.subr.bf16.mxu0 0
      %3094 = vmatpush1.bf16.msra.mxu0 0
      %3095 = vmatprep.mubr.bf16.mxu0 0
      %3096 = vmatmul.mubr.bf16.gmra.mrb[0].mxu0 %v3061
      %v3097 = vpop.f32.mrb[0].mxu0
      %v3098 = vadd.f32 %v3033, %v3097
      %v3099 = vpop.f32.mrb[0].mxu0
      %v3100 = vpop.f32.mrb[0].mxu0
      %v3101 = vadd.f32 %v3033, %v3100
      %v3102 = vpop.f32.mrb[0].mxu0
      %3103 = vdwg.mxu0
      %v3104 = vadd.f32 %v2947, %v3098
      %v3105 = vadd.f32 %v2948, %v3101
      %v3106 = vsel %vm733, %v3104, 0.0
      %3107 = vadd.xlane.f32.xlu0 %v3106
      %v3108 = vpop.xlane.xlu0 %3107
      %v3109 = vsel %vm733, %v3105, 0.0
      %3110 = vadd.xlane.f32.xlu0 %v3109
      %v3111 = vpop.xlane.xlu0 %3110
      %v3112 = vmul.f32 %v3108, %v2910
      %v3113 = vmul.f32 %v3111, %v2910
      %v3114 = vsub.f32 %v3104, %v3112
      %v3115 = vsub.f32 %v3105, %v3113
      %v3116 = vmul.f32 %v3114, %v3114
      %v3117 = vmul.f32 %v3115, %v3115
      %v3118 = vsel %vm733, %v3116, 0.0
      %3119 = vadd.xlane.f32.xlu0 %v3118
      %v3120 = vpop.xlane.xlu0 %3119
      %v3121 = vsel %vm733, %v3117, 0.0
      %3122 = vadd.xlane.f32.xlu0 %v3121
      %v3123 = vpop.xlane.xlu0 %3122
      %v3124 = vmul.f32 %v3120, %v2910
      %v3125 = vmul.f32 %v3123, %v2910
      %v3126 = vadd.f32 %v3124, 1e-05
      %v3127 = vadd.f32 %v3125, 1e-05
      %v3128 = vrsqrt.pop %v3126
      %v3129 = vrsqrt.pop %v3127
      %v3130 = vmul.f32 %v3114, %v3128
      %v3131 = vmul.f32 %v3115, %v3129
      %v3132 = vld [vmem:[%s687] sm:$0x1]
      %v3134 = vlaneseq
      %v3135 = vshrl.u32 %v3134, 7
      %v3136 = vsub.s32 0, %v3135
      %v3137 = vrot.slane %v3132, %v3136
      %v3139 = vmul.f32 %v3130, %v3137
      %v3140 = vmul.f32 %v3131, %v3137
      %v3141 = vld [vmem:[%s690] sm:$0x1]
      %v3143 = vlaneseq
      %v3144 = vshrl.u32 %v3143, 7
      %v3145 = vsub.s32 0, %v3144
      %v3146 = vrot.slane %v3141, %v3145
      %v3148 = vadd.f32 %v3139, %v3146
      %v3149 = vadd.f32 %v3140, %v3146
      %3150 = vst.msk [vmem:[#allocation2] sm:$0xff] %vm733, %v3148
      %3151 = vst.msk [vmem:[#allocation2 + $0x8] sm:$0xff] %vm733, %v3149
      %p3152 = scmp.eq.s32.totalorder %s30, 1
      // Predicated region
      $region81: #{transformer_enc_forward.1} parent=75 // pred_check
        %p3153 = pneg %p3152
      $region82: #{transformer_enc_forward.1} parent=75 // pred_check_branch
        %3155 = sbr.rel (%p3153) target = $region84
      $region83: #{transformer_enc_forward.1} parent=75 // pred_region
        %3156 = vst.msk [vmem:[%s695] sm:$0xff] %vm733, %v3148
        %3157 = vst.msk [vmem:[%s695 + $0x8] sm:$0xff] %vm733, %v3149
      $region84: #{transformer_enc_forward.1} parent=75 // pred_fallthru
        _
      %s3158 = smul.u32 2, %s29
      %p3159 = scmp.lt.s32.totalorder %s3158, 1
      %s3160 = scalar_select %p3159, %s3158, 1
      %s3161 = smul.addr %s3160, 8
      %s3162 = scalar_lea.vmem %s14, %s3161
      // Predicated region
      $region85: #{transformer_enc_forward.1} parent=75 // pred_check
        %p3163 = pneg %p419
      $region86: #{transformer_enc_forward.1} parent=75 // pred_check_branch
        %3165 = sbr.rel (%p3163) target = $region88
      $region87: #{transformer_enc_forward.1} parent=75 // pred_region
        %s3166 = smul.u32 2, %s29
      $region88: #{transformer_enc_forward.1} parent=75 // pred_fallthru
        _
      // Predicated region
      $region89: #{transformer_enc_forward.1} parent=75 // pred_check
        %p3167 = pneg %p419
      $region90: #{transformer_enc_forward.1} parent=75 // pred_check_branch
        %3169 = sbr.rel (%p3167) target = $region92
      $region91: #{transformer_enc_forward.1} parent=75 // pred_region
        %s3170 = smul.u32 2, %s29
        %p3171 = scmp.lt.s32.totalorder %s3170, 1
        %s3172 = scalar_select %p3171, %s3170, 1
        %s3173 = smul.addr %s3172, 8
        %s3174 = scalar_lea.vmem %s14, %s3173
      $region92: #{transformer_enc_forward.1} parent=75 // pred_fallthru
        _
    $region76: #{transformer_enc_forward.1} parent=5 // pred_fallthru
      _
    %p3175 = scmp.le.s32.totalorder 2, %s20
    // Predicated region
    $region93: #{transformer_enc_forward.1} parent=5 // pred_check
      %p3176 = pneg %p3175
    $region94: #{transformer_enc_forward.1} parent=5 // pred_check_branch
      %3178 = sbr.rel (%p3176) target = $region96
    $region95: #{transformer_enc_forward.1} parent=5 // pred_region
      %s3179 = ssub.s32 %s20, 2
    $region96: #{transformer_enc_forward.1} parent=5 // pred_fallthru
      _
  $region6: #{transformer_enc_forward.1} parent=0 // loop_footer
    %s24 = sadd.s32 1, %s20
  $region7: #{transformer_enc_forward.1} parent=0 // loop_footer_branch
    %19 = sbr.rel target = $region3
  $region8: #{transformer_enc_forward.1} parent=0 // loop_exit
    _

</llo_original>
